<compile_context>
chip_gen: v7x
topology: tpu7x:2x2x1
jax: 0.10.0
libtpu: 0.0.40
codegen_flags: <defaults>
</compile_context>

<pallas_src>
import math
import numpy as np
import jax
import jax.numpy as jnp
from jax.experimental import pallas as pl
from jax.experimental.pallas import tpu as pltpu

LN10 = math.log(10.0)
LANE = 128


def _round_up(x, m):
    return ((x + m - 1) // m) * m


# --------------------------------------------------------------------------
# Fused kernel: DFT -> dB -> liftering -> LayerNorm -> GRU -> heads -> sample
# --------------------------------------------------------------------------
def make_fused_kernel(B, F, KP, HP, Z):
    def kernel(frames_ref, dft_ref, lifter_ref, gamma_ref, beta_ref,
               wih_ref, bih_ref, whh_ref, bhh_ref, whead_ref, bhead_ref,
               eps_ref, out_ref, gi_scr, go_scr):
        # ---- spectral front-end (Hann window folded into dft_ref) ----
        reim = jnp.dot(frames_ref[...], dft_ref[...],
                       preferred_element_type=jnp.float32)          # (M, 2*KP)
        re = reim[:, :KP]                                            # lane-tile aligned
        im = reim[:, KP:]
        mag = jnp.sqrt(re * re + im * im)
        db = (20.0 / LN10) * jnp.log(mag + 1e-7)                     # 20*safe_log10
        # cepstral liftering: db @ ((dct*mask)@idct), pad rows of lifter are zero
        inv = jnp.dot(db, lifter_ref[...], preferred_element_type=jnp.float32)
        feats = jnp.exp(inv * (LN10 / 20.0))                         # 10 ** (./20)

        # ---- LayerNorm over the frequency axis (flatten_size) ----
        mean = jnp.mean(feats, axis=-1, keepdims=True)
        var = jnp.mean((feats - mean) ** 2, axis=-1, keepdims=True)
        xn = (feats - mean) * jax.lax.rsqrt(var + 1e-5)
        xn = xn * gamma_ref[...] + beta_ref[...]

        # ---- GRU input projections for all timesteps at once ----
        gi_scr[...] = jnp.dot(xn, wih_ref[...],
                              preferred_element_type=jnp.float32) + bih_ref[...]

        # ---- recurrence: whole batch per step, hidden state carried in vregs ----
        def step(t, h):                                              # h: (B, HP)
            row = t * B
            gi = gi_scr[pl.ds(row, B), :]                            # (B, 3*HP)
            gh = jnp.dot(h, whh_ref[...],
                         preferred_element_type=jnp.float32) + bhh_ref[...]
            r = jax.nn.sigmoid(gi[:, 0:HP] + gh[:, 0:HP])            # 128-lane tiles
            zg = jax.nn.sigmoid(gi[:, HP:2 * HP] + gh[:, HP:2 * HP])
            n = jnp.tanh(gi[:, 2 * HP:3 * HP] + r * gh[:, 2 * HP:3 * HP])
            h_new = (1.0 - zg) * n + zg * h
            go_scr[pl.ds(row, B), :] = h_new
            return h_new

        h0 = jnp.zeros((B, HP), jnp.float32)
        jax.lax.fori_loop(0, F, step, h0, unroll=True)

        # ---- fused mu/logvar heads + reparameterization, packed output slab ----
        heads = jnp.dot(go_scr[...], whead_ref[...],
                        preferred_element_type=jnp.float32) + bhead_ref[...]  # (M, 2Z)
        mu = heads[:, 0:Z]
        lv = heads[:, Z:2 * Z]
        zz = mu + eps_ref[...] * jnp.exp(0.5 * lv)
        out_ref[:, 0:Z] = zz                                         # [ z | mu | lv ]
        out_ref[:, Z:3 * Z] = heads

    return kernel


# --------------------------------------------------------------------------
# Host-side constant construction (window/DFT folding, lifter precompute)
# --------------------------------------------------------------------------
def build_spectral_constants(L, K, n_cc):
    KP = _round_up(K, LANE)
    n = np.arange(L)
    window = 0.5 - 0.5 * np.cos(2.0 * np.pi * n / L)                 # hann, sym=False
    kk = np.arange(K)
    ang = 2.0 * np.pi * n[:, None] * kk[None, :] / L
    cos_m = np.cos(ang)
    sin_m = -np.sin(ang)

    # window folded into the DFT; cos and sin packed on 128-lane boundaries
    dft = np.zeros((L, 2 * KP), np.float32)
    dft[:, :K] = (window[:, None] * cos_m).astype(np.float32)
    dft[:, KP:KP + K] = (window[:, None] * sin_m).astype(np.float32)

    # DCT-II / exact inverse (torch_dct norm=None convention), fused with the
    # cepstral mask into a single (K, K) lifter, zero-padded to KP rows.
    j = np.arange(K)
    dct_t = 2.0 * np.cos(np.pi * (2 * j[:, None] + 1) * kk[None, :] / (2 * K))
    s = np.where(kk == 0, 0.5, 1.0)
    idct_t = (s[:, None] / K) * np.cos(np.pi * (2 * j[None, :] + 1) * kk[:, None] / (2 * K))
    mask = (np.arange(K) < n_cc).astype(np.float64)
    lifter = (dct_t * mask[None, :]) @ idct_t                        # (K, K) in f64
    lifter_pad = np.zeros((KP, K), np.float32)
    lifter_pad[:K, :] = lifter.astype(np.float32)

    return dict(window=window.astype(np.float32),
                cos_m=cos_m.astype(np.float32),
                sin_m=sin_m.astype(np.float32),
                dct_t=dct_t.astype(np.float32),
                idct_t=idct_t.astype(np.float32),
                mask=mask.astype(np.float32),
                dft=dft, lifter_pad=lifter_pad)


def frame_audio(audio, L, hop, n_frames):
    # torch.stft framing: center=True, constant (zero) pad
    pad = L // 2
    padded = jnp.pad(audio, ((0, 0), (pad, pad)))
    idx = jnp.arange(n_frames)[:, None] * hop + jnp.arange(L)[None, :]
    return padded[:, idx]                                            # (B, F, L)


def pack_recurrent_params(p, K, H, HP, Z):
    """PyTorch GRU / Linear weights -> 128-lane-aligned, gate-padded layouts."""
    wih = jnp.zeros((K, 3 * HP), jnp.float32)
    bih = jnp.zeros((1, 3 * HP), jnp.float32)
    whh = jnp.zeros((HP, 3 * HP), jnp.float32)
    bhh = jnp.zeros((1, 3 * HP), jnp.float32)
    for g in range(3):                                               # r, z, n
        off = g * HP
        wih = wih.at[:, off:off + H].set(p['w_ih'][g * H:(g + 1) * H, :].T)
        bih = bih.at[0, off:off + H].set(p['b_ih'][g * H:(g + 1) * H])
        whh = whh.at[:H, off:off + H].set(p['w_hh'][g * H:(g + 1) * H, :].T)
        bhh = bhh.at[0, off:off + H].set(p['b_hh'][g * H:(g + 1) * H])
    whead = jnp.zeros((HP, 2 * Z), jnp.float32)
    whead = whead.at[:H, :Z].set(p['w_mu'].T)
    whead = whead.at[:H, Z:].set(p['w_lv'].T)
    bhead = jnp.concatenate([p['b_mu'], p['b_lv']]).reshape(1, 2 * Z)
    return wih, bih, whh, bhh, whead, bhead


# --------------------------------------------------------------------------
# Wrapper: one pallas_call for the whole encoder
# --------------------------------------------------------------------------
def spectral_encoder_forward(frames, eps, params, consts, *, h_dim, z_dim):
    B, F, L = frames.shape
    KP, K = consts['lifter_pad'].shape
    H, Z = h_dim, z_dim
    HP = _round_up(H, LANE)
    M = B * F

    # time-major flattening: row t*B + b  <->  (batch b, frame t)
    frames_flat = jnp.transpose(frames, (1, 0, 2)).reshape(M, L)
    eps_flat = jnp.transpose(eps, (1, 0, 2)).reshape(M, Z)

    wih, bih, whh, bhh, whead, bhead = pack_recurrent_params(params, K, H, HP, Z)
    dft = jnp.asarray(consts['dft'])
    lifter = jnp.asarray(consts['lifter_pad'])
    gamma, beta = params['ln_gamma'], params['ln_beta']

    def full2(r, c):                                                 # full-array block
        return pl.BlockSpec((r, c), lambda i: (0, 0))

    kernel = make_fused_kernel(B, F, KP, HP, Z)
    packed = pl.pallas_call(
        kernel,
        out_shape=jax.ShapeDtypeStruct((M, 3 * Z), jnp.float32),
        grid_spec=pltpu.PrefetchScalarGridSpec(
            num_scalar_prefetch=0,
            grid=(1,),
            in_specs=[
                full2(M, L),                 # frames (time-major)
                full2(L, 2 * KP),            # windowed DFT [cos | sin]
                full2(KP, K),                # fused cepstral lifter
                full2(1, K), full2(1, K),    # LayerNorm gamma / beta
                full2(K, 3 * HP), full2(1, 3 * HP),    # GRU W_ih / b_ih (gate-padded)
                full2(HP, 3 * HP), full2(1, 3 * HP),   # GRU W_hh / b_hh (gate-padded)
                full2(HP, 2 * Z), full2(1, 2 * Z),     # fused [mu|logvar] head
                full2(M, Z),                 # eps (time-major)
            ],
            out_specs=full2(M, 3 * Z),
            scratch_shapes=[
                pltpu.VMEM((M, 3 * HP), jnp.float32),  # gi for all timesteps
                pltpu.VMEM((M, HP), jnp.float32),      # GRU outputs
            ],
        ),
        compiler_params=pltpu.CompilerParams(
            dimension_semantics=("arbitrary",),
        ),
    )(frames_flat, dft, lifter, gamma, beta,
      wih, bih, whh, bhh, whead, bhead, eps_flat)

    packed = packed.reshape(F, B, 3 * Z).transpose(1, 0, 2)          # back to (B, F, 3Z)
    return packed[..., :Z], packed[..., Z:2 * Z], packed[..., 2 * Z:]


# --------------------------------------------------------------------------
# Pure-JAX reference (unfused constants, validates the algebraic folding)
# --------------------------------------------------------------------------
def reference_forward(frames, consts, p, eps):
    prec = jax.lax.Precision.HIGHEST
    window = jnp.asarray(consts['window'])
    cos_m = jnp.asarray(consts['cos_m'])
    sin_m = jnp.asarray(consts['sin_m'])
    dct_t = jnp.asarray(consts['dct_t'])
    idct_t = jnp.asarray(consts['idct_t'])
    mask = jnp.asarray(consts['mask'])

    wf = frames * window[None, None, :]
    re = jnp.einsum('bfl,lk->bfk', wf, cos_m, precision=prec)
    im = jnp.einsum('bfl,lk->bfk', wf, sin_m, precision=prec)
    db = 20.0 * jnp.log10(jnp.sqrt(re * re + im * im) + 1e-7)
    cep = jnp.einsum('bfk,kj->bfj', db, dct_t, precision=prec) * mask[None, None, :]
    inv = jnp.einsum('bfk,kj->bfj', cep, idct_t, precision=prec)
    feats = 10.0 ** (inv / 20.0)

    mean = feats.mean(-1, keepdims=True)
    var = ((feats - mean) ** 2).mean(-1, keepdims=True)
    xn = (feats - mean) * jax.lax.rsqrt(var + 1e-5) * p['ln_gamma'] + p['ln_beta']

    H = p['w_hh'].shape[1]
    gi = jnp.einsum('bfk,gk->bfg', xn, p['w_ih'], precision=prec) + p['b_ih']

    def step(h, gi_t):
        gh = jnp.einsum('bh,gh->bg', h, p['w_hh'], precision=prec) + p['b_hh']
        r = jax.nn.sigmoid(gi_t[:, :H] + gh[:, :H])
        z = jax.nn.sigmoid(gi_t[:, H:2 * H] + gh[:, H:2 * H])
        n = jnp.tanh(gi_t[:, 2 * H:] + r * gh[:, 2 * H:])
        hn = (1.0 - z) * n + z * h
        return hn, hn

    B = frames.shape[0]
    h0 = jnp.zeros((B, H), jnp.float32)
    _, outs = jax.lax.scan(step, h0, jnp.swapaxes(gi, 0, 1))
    go = jnp.swapaxes(outs, 0, 1)
    mu = jnp.einsum('bfh,zh->bfz', go, p['w_mu'], precision=prec) + p['b_mu']
    lv = jnp.einsum('bfh,zh->bfz', go, p['w_lv'], precision=prec) + p['b_lv']
    z = mu + eps * jnp.exp(0.5 * lv)
    return z, mu, lv


# --------------------------------------------------------------------------
if __name__ == "__main__":
    # Small, forward-consistent hyper-parameters
    B = 2                 # batch
    T = 64                # audio samples
    cc_frame_size = 32    # n_fft
    cc_hop_size = 8
    synth_window = 8
    n_cc = 6
    h_dim = 32
    z_dim = 16
    L = cc_frame_size
    K = L // 2 + 1                     # flatten_size = 17
    F = T // synth_window              # n_frames used by the encoder = 8

    key = jax.random.PRNGKey(0)
    k_audio, k_eps, k_p = jax.random.split(key, 3)
    audio = jax.random.normal(k_audio, (B, T), jnp.float32)
    eps = jax.random.normal(k_eps, (B, F, z_dim), jnp.float32)

    # deterministic parameter init (shapes from the module __init__)
    ks = jax.random.split(k_p, 10)

    def u(k, shape, scale):
        return scale * jax.random.uniform(k, shape, jnp.float32, -1.0, 1.0)

    s_gru = 1.0 / math.sqrt(h_dim)
    params = dict(
        ln_gamma=1.0 + 0.1 * jax.random.normal(ks[0], (1, K), jnp.float32),
        ln_beta=0.1 * jax.random.normal(ks[1], (1, K), jnp.float32),
        w_ih=u(ks[2], (3 * h_dim, K), s_gru),
        w_hh=u(ks[3], (3 * h_dim, h_dim), s_gru),
        b_ih=u(ks[4], (3 * h_dim,), s_gru),
        b_hh=u(ks[5], (3 * h_dim,), s_gru),
        w_mu=u(ks[6], (z_dim, h_dim), s_gru),
        b_mu=u(ks[7], (z_dim,), s_gru),
        w_lv=u(ks[8], (z_dim, h_dim), s_gru),
        b_lv=u(ks[9], (z_dim,), s_gru),
    )

    consts = build_spectral_constants(L, K, n_cc)
    frames = frame_audio(audio, L, cc_hop_size, F)

    # ---- fused Pallas kernel ----
    z, mu, logvar = spectral_encoder_forward(frames, eps, params, consts,
                                             h_dim=h_dim, z_dim=z_dim)
    jax.block_until_ready((z, mu, logvar))

    # ---- numerical sanity check against the unfused pure-JAX reference ----
    z_r, mu_r, lv_r = reference_forward(frames, consts, params, eps)
    np.testing.assert_allclose(np.asarray(mu), np.asarray(mu_r), rtol=2e-2, atol=2e-3)
    np.testing.assert_allclose(np.asarray(logvar), np.asarray(lv_r), rtol=2e-2, atol=2e-3)
    np.testing.assert_allclose(np.asarray(z), np.asarray(z_r), rtol=2e-2, atol=2e-3)

    assert z.shape == (B, F, z_dim) and mu.shape == (B, F, z_dim) and logvar.shape == (B, F, z_dim)
    print("KERNEL_OK")
</pallas_src>

<mosaic_0001>
module attributes {stable_mosaic.version = 11 : i64} {
  func.func @kernel(%arg0: i32, %arg1: memref<16x32xf32, #tpu.memory_space<vmem>>, %arg2: memref<32x256xf32, #tpu.memory_space<vmem>>, %arg3: memref<128x17xf32, #tpu.memory_space<vmem>>, %arg4: memref<1x17xf32, #tpu.memory_space<vmem>>, %arg5: memref<1x17xf32, #tpu.memory_space<vmem>>, %arg6: memref<17x384xf32, #tpu.memory_space<vmem>>, %arg7: memref<1x384xf32, #tpu.memory_space<vmem>>, %arg8: memref<128x384xf32, #tpu.memory_space<vmem>>, %arg9: memref<1x384xf32, #tpu.memory_space<vmem>>, %arg10: memref<128x32xf32, #tpu.memory_space<vmem>>, %arg11: memref<1x32xf32, #tpu.memory_space<vmem>>, %arg12: memref<16x16xf32, #tpu.memory_space<vmem>>, %arg13: memref<16x48xf32, #tpu.memory_space<vmem>>, %arg14: memref<16x384xf32, #tpu.memory_space<vmem>>, %arg15: memref<16x128xf32, #tpu.memory_space<vmem>>) attributes {dimension_semantics = [#tpu.dimension_semantics<arbitrary>], iteration_bounds = array<i64: 1>, scalar_prefetch = 0 : i64, scratch_operands = 2 : i64, tpu.core_type = #tpu.core_type<tc>, window_params = [{pipeline_mode = #tpu.pipeline_mode<synchronous>, transform_indices = @transform_0, window_bounds = array<i64: 16, 32>}, {pipeline_mode = #tpu.pipeline_mode<synchronous>, transform_indices = @transform_1, window_bounds = array<i64: 32, 256>}, {pipeline_mode = #tpu.pipeline_mode<synchronous>, transform_indices = @transform_2, window_bounds = array<i64: 128, 17>}, {pipeline_mode = #tpu.pipeline_mode<synchronous>, transform_indices = @transform_3, window_bounds = array<i64: 1, 17>}, {pipeline_mode = #tpu.pipeline_mode<synchronous>, transform_indices = @transform_4, window_bounds = array<i64: 1, 17>}, {pipeline_mode = #tpu.pipeline_mode<synchronous>, transform_indices = @transform_5, window_bounds = array<i64: 17, 384>}, {pipeline_mode = #tpu.pipeline_mode<synchronous>, transform_indices = @transform_6, window_bounds = array<i64: 1, 384>}, {pipeline_mode = #tpu.pipeline_mode<synchronous>, transform_indices = @transform_7, window_bounds = array<i64: 128, 384>}, {pipeline_mode = #tpu.pipeline_mode<synchronous>, transform_indices = @transform_8, window_bounds = array<i64: 1, 384>}, {pipeline_mode = #tpu.pipeline_mode<synchronous>, transform_indices = @transform_9, window_bounds = array<i64: 128, 32>}, {pipeline_mode = #tpu.pipeline_mode<synchronous>, transform_indices = @transform_10, window_bounds = array<i64: 1, 32>}, {pipeline_mode = #tpu.pipeline_mode<synchronous>, transform_indices = @transform_11, window_bounds = array<i64: 16, 16>}, {pipeline_mode = #tpu.pipeline_mode<synchronous>, transform_indices = @transform_12, window_bounds = array<i64: 16, 48>}]} {
    %c0 = arith.constant 0 : index
    %c0_0 = arith.constant 0 : index
    %0 = vector.load %arg1[%c0, %c0_0] : memref<16x32xf32, #tpu.memory_space<vmem>>, vector<16x32xf32>
    %c0_1 = arith.constant 0 : index
    %c0_2 = arith.constant 0 : index
    %1 = vector.load %arg2[%c0_1, %c0_2] : memref<32x256xf32, #tpu.memory_space<vmem>>, vector<32x256xf32>
    %cst = arith.constant dense<0.000000e+00> : vector<16x256xf32>
    %2 = tpu.matmul %0, %1, %cst {dimension_numbers = #tpu.dot_dimension_numbers<[1], [0], [0], [1], [0, 0, 1, 1], [], []>} : vector<16x32xf32>, vector<32x256xf32>, vector<16x256xf32> -> vector<16x256xf32>
    %3 = vector.extract_strided_slice %2 {offsets = [0, 0], sizes = [16, 128], strides = [1, 1]} : vector<16x256xf32> to vector<16x128xf32>
    %4 = vector.extract_strided_slice %2 {offsets = [0, 128], sizes = [16, 128], strides = [1, 1]} : vector<16x256xf32> to vector<16x128xf32>
    %5 = arith.mulf %3, %3 : vector<16x128xf32>
    %6 = arith.mulf %4, %4 : vector<16x128xf32>
    %7 = arith.addf %5, %6 : vector<16x128xf32>
    %8 = math.sqrt %7 : vector<16x128xf32>
    %cst_3 = arith.constant 1.000000e-07 : f32
    %9 = vector.broadcast %cst_3 : f32 to vector<16x128xf32>
    %10 = arith.addf %8, %9 : vector<16x128xf32>
    %11 = math.log %10 : vector<16x128xf32>
    %cst_4 = arith.constant 8.68588924 : f32
    %12 = vector.broadcast %cst_4 : f32 to vector<16x128xf32>
    %13 = arith.mulf %12, %11 : vector<16x128xf32>
    %c0_5 = arith.constant 0 : index
    %c0_6 = arith.constant 0 : index
    %14 = vector.load %arg3[%c0_5, %c0_6] : memref<128x17xf32, #tpu.memory_space<vmem>>, vector<128x17xf32>
    %cst_7 = arith.constant dense<0.000000e+00> : vector<16x17xf32>
    %15 = tpu.matmul %13, %14, %cst_7 {dimension_numbers = #tpu.dot_dimension_numbers<[1], [0], [0], [1], [0, 0, 1, 1], [], []>} : vector<16x128xf32>, vector<128x17xf32>, vector<16x17xf32> -> vector<16x17xf32>
    %cst_8 = arith.constant 0.115129255 : f32
    %16 = vector.broadcast %cst_8 : f32 to vector<16x17xf32>
    %17 = arith.mulf %15, %16 : vector<16x17xf32>
    %18 = math.exp %17 : vector<16x17xf32>
    %cst_9 = arith.constant dense<0.000000e+00> : vector<16xf32>
    %19 = vector.multi_reduction <add>, %18, %cst_9 [1] : vector<16x17xf32> to vector<16xf32>
    %20 = vector.shape_cast %19 : vector<16xf32> to vector<16x1xf32>
    %cst_10 = arith.constant 1.700000e+01 : f32
    %21 = vector.broadcast %cst_10 : f32 to vector<16x1xf32>
    %22 = arith.divf %20, %21 : vector<16x1xf32>
    %23 = vector.broadcast %22 : vector<16x1xf32> to vector<16x17xf32>
    %24 = arith.subf %18, %23 : vector<16x17xf32>
    %25 = arith.mulf %24, %24 : vector<16x17xf32>
    %cst_11 = arith.constant dense<0.000000e+00> : vector<16xf32>
    %26 = vector.multi_reduction <add>, %25, %cst_11 [1] : vector<16x17xf32> to vector<16xf32>
    %27 = vector.shape_cast %26 : vector<16xf32> to vector<16x1xf32>
    %cst_12 = arith.constant 1.700000e+01 : f32
    %28 = vector.broadcast %cst_12 : f32 to vector<16x1xf32>
    %29 = arith.divf %27, %28 : vector<16x1xf32>
    %30 = vector.broadcast %22 : vector<16x1xf32> to vector<16x17xf32>
    %31 = arith.subf %18, %30 : vector<16x17xf32>
    %cst_13 = arith.constant 9.99999974E-6 : f32
    %32 = vector.broadcast %cst_13 : f32 to vector<16x1xf32>
    %33 = arith.addf %29, %32 : vector<16x1xf32>
    %34 = math.rsqrt %33 : vector<16x1xf32>
    %35 = vector.broadcast %34 : vector<16x1xf32> to vector<16x17xf32>
    %36 = arith.mulf %31, %35 : vector<16x17xf32>
    %c0_14 = arith.constant 0 : index
    %c0_15 = arith.constant 0 : index
    %37 = vector.load %arg4[%c0_14, %c0_15] : memref<1x17xf32, #tpu.memory_space<vmem>>, vector<1x17xf32>
    %38 = vector.broadcast %37 : vector<1x17xf32> to vector<16x17xf32>
    %39 = arith.mulf %36, %38 : vector<16x17xf32>
    %c0_16 = arith.constant 0 : index
    %c0_17 = arith.constant 0 : index
    %40 = vector.load %arg5[%c0_16, %c0_17] : memref<1x17xf32, #tpu.memory_space<vmem>>, vector<1x17xf32>
    %41 = vector.broadcast %40 : vector<1x17xf32> to vector<16x17xf32>
    %42 = arith.addf %39, %41 : vector<16x17xf32>
    %c0_18 = arith.constant 0 : index
    %c0_19 = arith.constant 0 : index
    %43 = vector.load %arg6[%c0_18, %c0_19] : memref<17x384xf32, #tpu.memory_space<vmem>>, vector<17x384xf32>
    %cst_20 = arith.constant dense<0.000000e+00> : vector<16x384xf32>
    %44 = tpu.matmul %42, %43, %cst_20 {dimension_numbers = #tpu.dot_dimension_numbers<[1], [0], [0], [1], [0, 0, 1, 1], [], []>} : vector<16x17xf32>, vector<17x384xf32>, vector<16x384xf32> -> vector<16x384xf32>
    %c0_21 = arith.constant 0 : index
    %c0_22 = arith.constant 0 : index
    %45 = vector.load %arg7[%c0_21, %c0_22] : memref<1x384xf32, #tpu.memory_space<vmem>>, vector<1x384xf32>
    %46 = vector.broadcast %45 : vector<1x384xf32> to vector<16x384xf32>
    %47 = arith.addf %44, %46 : vector<16x384xf32>
    %c0_23 = arith.constant 0 : index
    %c0_24 = arith.constant 0 : index
    %48 = vector.load %arg14[%c0_23, %c0_24] : memref<16x384xf32, #tpu.memory_space<vmem>>, vector<16x384xf32>
    tpu.vector_store %arg14[%c0_23, %c0_24], %47 {strides = array<i32>} : memref<16x384xf32, #tpu.memory_space<vmem>>, vector<16x384xf32>,
    %cst_25 = arith.constant 0.000000e+00 : f32
    %49 = vector.broadcast %cst_25 : f32 to vector<2x128xf32>
    %c0_i32 = arith.constant 0 : i32
    %c2_i32 = arith.constant 2 : i32
    %50 = arith.muli %c0_i32, %c2_i32 : i32
    %51 = arith.index_cast %50 : i32 to index
    %c0_26 = arith.constant 0 : index
    %52 = vector.load %arg14[%51, %c0_26] : memref<16x384xf32, #tpu.memory_space<vmem>>, vector<2x384xf32>
    %c0_27 = arith.constant 0 : index
    %c0_28 = arith.constant 0 : index
    %53 = vector.load %arg8[%c0_27, %c0_28] : memref<128x384xf32, #tpu.memory_space<vmem>>, vector<128x384xf32>
    %cst_29 = arith.constant dense<0.000000e+00> : vector<2x384xf32>
    %54 = tpu.matmul %49, %53, %cst_29 {dimension_numbers = #tpu.dot_dimension_numbers<[1], [0], [0], [1], [0, 0, 1, 1], [], []>} : vector<2x128xf32>, vector<128x384xf32>, vector<2x384xf32> -> vector<2x384xf32>
    %c0_30 = arith.constant 0 : index
    %c0_31 = arith.constant 0 : index
    %55 = vector.load %arg9[%c0_30, %c0_31] : memref<1x384xf32, #tpu.memory_space<vmem>>, vector<1x384xf32>
    %56 = vector.broadcast %55 : vector<1x384xf32> to vector<2x384xf32>
    %57 = arith.addf %54, %56 : vector<2x384xf32>
    %58 = vector.extract_strided_slice %52 {offsets = [0, 0], sizes = [2, 128], strides = [1, 1]} : vector<2x384xf32> to vector<2x128xf32>
    %59 = vector.extract_strided_slice %57 {offsets = [0, 0], sizes = [2, 128], strides = [1, 1]} : vector<2x384xf32> to vector<2x128xf32>
    %60 = arith.addf %58, %59 : vector<2x128xf32>
    %61 = arith.negf %60 : vector<2x128xf32>
    %62 = math.exp %61 : vector<2x128xf32>
    %cst_32 = arith.constant 1.000000e+00 : f32
    %63 = vector.broadcast %cst_32 : f32 to vector<2x128xf32>
    %64 = arith.addf %63, %62 : vector<2x128xf32>
    %65 = arith.divf %63, %64 : vector<2x128xf32>
    %66 = vector.extract_strided_slice %52 {offsets = [0, 128], sizes = [2, 128], strides = [1, 1]} : vector<2x384xf32> to vector<2x128xf32>
    %67 = vector.extract_strided_slice %57 {offsets = [0, 128], sizes = [2, 128], strides = [1, 1]} : vector<2x384xf32> to vector<2x128xf32>
    %68 = arith.addf %66, %67 : vector<2x128xf32>
    %69 = arith.negf %68 : vector<2x128xf32>
    %70 = math.exp %69 : vector<2x128xf32>
    %cst_33 = arith.constant 1.000000e+00 : f32
    %71 = vector.broadcast %cst_33 : f32 to vector<2x128xf32>
    %72 = arith.addf %71, %70 : vector<2x128xf32>
    %73 = arith.divf %71, %72 : vector<2x128xf32>
    %74 = vector.extract_strided_slice %52 {offsets = [0, 256], sizes = [2, 128], strides = [1, 1]} : vector<2x384xf32> to vector<2x128xf32>
    %75 = vector.extract_strided_slice %57 {offsets = [0, 256], sizes = [2, 128], strides = [1, 1]} : vector<2x384xf32> to vector<2x128xf32>
    %76 = arith.mulf %65, %75 : vector<2x128xf32>
    %77 = arith.addf %74, %76 : vector<2x128xf32>
    %78 = math.tanh %77 : vector<2x128xf32>
    %cst_34 = arith.constant 1.000000e+00 : f32
    %79 = vector.broadcast %cst_34 : f32 to vector<2x128xf32>
    %80 = arith.subf %79, %73 : vector<2x128xf32>
    %81 = arith.mulf %80, %78 : vector<2x128xf32>
    %82 = arith.mulf %73, %49 : vector<2x128xf32>
    %83 = arith.addf %81, %82 : vector<2x128xf32>
    %84 = arith.index_cast %50 : i32 to index
    %c0_35 = arith.constant 0 : index
    %85 = vector.load %arg15[%84, %c0_35] : memref<16x128xf32, #tpu.memory_space<vmem>>, vector<2x128xf32>
    tpu.vector_store %arg15[%84, %c0_35], %83 {strides = array<i32>} : memref<16x128xf32, #tpu.memory_space<vmem>>, vector<2x128xf32>,
    %c1_i32 = arith.constant 1 : i32
    %c2_i32_36 = arith.constant 2 : i32
    %86 = arith.muli %c1_i32, %c2_i32_36 : i32
    %87 = arith.index_cast %86 : i32 to index
    %c0_37 = arith.constant 0 : index
    %88 = vector.load %arg14[%87, %c0_37] : memref<16x384xf32, #tpu.memory_space<vmem>>, vector<2x384xf32>
    %c0_38 = arith.constant 0 : index
    %c0_39 = arith.constant 0 : index
    %89 = vector.load %arg8[%c0_38, %c0_39] : memref<128x384xf32, #tpu.memory_space<vmem>>, vector<128x384xf32>
    %cst_40 = arith.constant dense<0.000000e+00> : vector<2x384xf32>
    %90 = tpu.matmul %83, %89, %cst_40 {dimension_numbers = #tpu.dot_dimension_numbers<[1], [0], [0], [1], [0, 0, 1, 1], [], []>} : vector<2x128xf32>, vector<128x384xf32>, vector<2x384xf32> -> vector<2x384xf32>
    %c0_41 = arith.constant 0 : index
    %c0_42 = arith.constant 0 : index
    %91 = vector.load %arg9[%c0_41, %c0_42] : memref<1x384xf32, #tpu.memory_space<vmem>>, vector<1x384xf32>
    %92 = vector.broadcast %91 : vector<1x384xf32> to vector<2x384xf32>
    %93 = arith.addf %90, %92 : vector<2x384xf32>
    %94 = vector.extract_strided_slice %88 {offsets = [0, 0], sizes = [2, 128], strides = [1, 1]} : vector<2x384xf32> to vector<2x128xf32>
    %95 = vector.extract_strided_slice %93 {offsets = [0, 0], sizes = [2, 128], strides = [1, 1]} : vector<2x384xf32> to vector<2x128xf32>
    %96 = arith.addf %94, %95 : vector<2x128xf32>
    %97 = arith.negf %96 : vector<2x128xf32>
    %98 = math.exp %97 : vector<2x128xf32>
    %cst_43 = arith.constant 1.000000e+00 : f32
    %99 = vector.broadcast %cst_43 : f32 to vector<2x128xf32>
    %100 = arith.addf %99, %98 : vector<2x128xf32>
    %101 = arith.divf %99, %100 : vector<2x128xf32>
    %102 = vector.extract_strided_slice %88 {offsets = [0, 128], sizes = [2, 128], strides = [1, 1]} : vector<2x384xf32> to vector<2x128xf32>
    %103 = vector.extract_strided_slice %93 {offsets = [0, 128], sizes = [2, 128], strides = [1, 1]} : vector<2x384xf32> to vector<2x128xf32>
    %104 = arith.addf %102, %103 : vector<2x128xf32>
    %105 = arith.negf %104 : vector<2x128xf32>
    %106 = math.exp %105 : vector<2x128xf32>
    %cst_44 = arith.constant 1.000000e+00 : f32
    %107 = vector.broadcast %cst_44 : f32 to vector<2x128xf32>
    %108 = arith.addf %107, %106 : vector<2x128xf32>
    %109 = arith.divf %107, %108 : vector<2x128xf32>
    %110 = vector.extract_strided_slice %88 {offsets = [0, 256], sizes = [2, 128], strides = [1, 1]} : vector<2x384xf32> to vector<2x128xf32>
    %111 = vector.extract_strided_slice %93 {offsets = [0, 256], sizes = [2, 128], strides = [1, 1]} : vector<2x384xf32> to vector<2x128xf32>
    %112 = arith.mulf %101, %111 : vector<2x128xf32>
    %113 = arith.addf %110, %112 : vector<2x128xf32>
    %114 = math.tanh %113 : vector<2x128xf32>
    %cst_45 = arith.constant 1.000000e+00 : f32
    %115 = vector.broadcast %cst_45 : f32 to vector<2x128xf32>
    %116 = arith.subf %115, %109 : vector<2x128xf32>
    %117 = arith.mulf %116, %114 : vector<2x128xf32>
    %118 = arith.mulf %109, %83 : vector<2x128xf32>
    %119 = arith.addf %117, %118 : vector<2x128xf32>
    %120 = arith.index_cast %86 : i32 to index
    %c0_46 = arith.constant 0 : index
    %121 = vector.load %arg15[%120, %c0_46] : memref<16x128xf32, #tpu.memory_space<vmem>>, vector<2x128xf32>
    tpu.vector_store %arg15[%120, %c0_46], %119 {strides = array<i32>} : memref<16x128xf32, #tpu.memory_space<vmem>>, vector<2x128xf32>,
    %c2_i32_47 = arith.constant 2 : i32
    %c2_i32_48 = arith.constant 2 : i32
    %122 = arith.muli %c2_i32_47, %c2_i32_48 : i32
    %123 = arith.index_cast %122 : i32 to index
    %c0_49 = arith.constant 0 : index
    %124 = vector.load %arg14[%123, %c0_49] : memref<16x384xf32, #tpu.memory_space<vmem>>, vector<2x384xf32>
    %c0_50 = arith.constant 0 : index
    %c0_51 = arith.constant 0 : index
    %125 = vector.load %arg8[%c0_50, %c0_51] : memref<128x384xf32, #tpu.memory_space<vmem>>, vector<128x384xf32>
    %cst_52 = arith.constant dense<0.000000e+00> : vector<2x384xf32>
    %126 = tpu.matmul %119, %125, %cst_52 {dimension_numbers = #tpu.dot_dimension_numbers<[1], [0], [0], [1], [0, 0, 1, 1], [], []>} : vector<2x128xf32>, vector<128x384xf32>, vector<2x384xf32> -> vector<2x384xf32>
    %c0_53 = arith.constant 0 : index
    %c0_54 = arith.constant 0 : index
    %127 = vector.load %arg9[%c0_53, %c0_54] : memref<1x384xf32, #tpu.memory_space<vmem>>, vector<1x384xf32>
    %128 = vector.broadcast %127 : vector<1x384xf32> to vector<2x384xf32>
    %129 = arith.addf %126, %128 : vector<2x384xf32>
    %130 = vector.extract_strided_slice %124 {offsets = [0, 0], sizes = [2, 128], strides = [1, 1]} : vector<2x384xf32> to vector<2x128xf32>
    %131 = vector.extract_strided_slice %129 {offsets = [0, 0], sizes = [2, 128], strides = [1, 1]} : vector<2x384xf32> to vector<2x128xf32>
    %132 = arith.addf %130, %131 : vector<2x128xf32>
    %133 = arith.negf %132 : vector<2x128xf32>
    %134 = math.exp %133 : vector<2x128xf32>
    %cst_55 = arith.constant 1.000000e+00 : f32
    %135 = vector.broadcast %cst_55 : f32 to vector<2x128xf32>
    %136 = arith.addf %135, %134 : vector<2x128xf32>
    %137 = arith.divf %135, %136 : vector<2x128xf32>
    %138 = vector.extract_strided_slice %124 {offsets = [0, 128], sizes = [2, 128], strides = [1, 1]} : vector<2x384xf32> to vector<2x128xf32>
    %139 = vector.extract_strided_slice %129 {offsets = [0, 128], sizes = [2, 128], strides = [1, 1]} : vector<2x384xf32> to vector<2x128xf32>
    %140 = arith.addf %138, %139 : vector<2x128xf32>
    %141 = arith.negf %140 : vector<2x128xf32>
    %142 = math.exp %141 : vector<2x128xf32>
    %cst_56 = arith.constant 1.000000e+00 : f32
    %143 = vector.broadcast %cst_56 : f32 to vector<2x128xf32>
    %144 = arith.addf %143, %142 : vector<2x128xf32>
    %145 = arith.divf %143, %144 : vector<2x128xf32>
    %146 = vector.extract_strided_slice %124 {offsets = [0, 256], sizes = [2, 128], strides = [1, 1]} : vector<2x384xf32> to vector<2x128xf32>
    %147 = vector.extract_strided_slice %129 {offsets = [0, 256], sizes = [2, 128], strides = [1, 1]} : vector<2x384xf32> to vector<2x128xf32>
    %148 = arith.mulf %137, %147 : vector<2x128xf32>
    %149 = arith.addf %146, %148 : vector<2x128xf32>
    %150 = math.tanh %149 : vector<2x128xf32>
    %cst_57 = arith.constant 1.000000e+00 : f32
    %151 = vector.broadcast %cst_57 : f32 to vector<2x128xf32>
    %152 = arith.subf %151, %145 : vector<2x128xf32>
    %153 = arith.mulf %152, %150 : vector<2x128xf32>
    %154 = arith.mulf %145, %119 : vector<2x128xf32>
    %155 = arith.addf %153, %154 : vector<2x128xf32>
    %156 = arith.index_cast %122 : i32 to index
    %c0_58 = arith.constant 0 : index
    %157 = vector.load %arg15[%156, %c0_58] : memref<16x128xf32, #tpu.memory_space<vmem>>, vector<2x128xf32>
    tpu.vector_store %arg15[%156, %c0_58], %155 {strides = array<i32>} : memref<16x128xf32, #tpu.memory_space<vmem>>, vector<2x128xf32>,
    %c3_i32 = arith.constant 3 : i32
    %c2_i32_59 = arith.constant 2 : i32
    %158 = arith.muli %c3_i32, %c2_i32_59 : i32
    %159 = arith.index_cast %158 : i32 to index
    %c0_60 = arith.constant 0 : index
    %160 = vector.load %arg14[%159, %c0_60] : memref<16x384xf32, #tpu.memory_space<vmem>>, vector<2x384xf32>
    %c0_61 = arith.constant 0 : index
    %c0_62 = arith.constant 0 : index
    %161 = vector.load %arg8[%c0_61, %c0_62] : memref<128x384xf32, #tpu.memory_space<vmem>>, vector<128x384xf32>
    %cst_63 = arith.constant dense<0.000000e+00> : vector<2x384xf32>
    %162 = tpu.matmul %155, %161, %cst_63 {dimension_numbers = #tpu.dot_dimension_numbers<[1], [0], [0], [1], [0, 0, 1, 1], [], []>} : vector<2x128xf32>, vector<128x384xf32>, vector<2x384xf32> -> vector<2x384xf32>
    %c0_64 = arith.constant 0 : index
    %c0_65 = arith.constant 0 : index
    %163 = vector.load %arg9[%c0_64, %c0_65] : memref<1x384xf32, #tpu.memory_space<vmem>>, vector<1x384xf32>
    %164 = vector.broadcast %163 : vector<1x384xf32> to vector<2x384xf32>
    %165 = arith.addf %162, %164 : vector<2x384xf32>
    %166 = vector.extract_strided_slice %160 {offsets = [0, 0], sizes = [2, 128], strides = [1, 1]} : vector<2x384xf32> to vector<2x128xf32>
    %167 = vector.extract_strided_slice %165 {offsets = [0, 0], sizes = [2, 128], strides = [1, 1]} : vector<2x384xf32> to vector<2x128xf32>
    %168 = arith.addf %166, %167 : vector<2x128xf32>
    %169 = arith.negf %168 : vector<2x128xf32>
    %170 = math.exp %169 : vector<2x128xf32>
    %cst_66 = arith.constant 1.000000e+00 : f32
    %171 = vector.broadcast %cst_66 : f32 to vector<2x128xf32>
    %172 = arith.addf %171, %170 : vector<2x128xf32>
    %173 = arith.divf %171, %172 : vector<2x128xf32>
    %174 = vector.extract_strided_slice %160 {offsets = [0, 128], sizes = [2, 128], strides = [1, 1]} : vector<2x384xf32> to vector<2x128xf32>
    %175 = vector.extract_strided_slice %165 {offsets = [0, 128], sizes = [2, 128], strides = [1, 1]} : vector<2x384xf32> to vector<2x128xf32>
    %176 = arith.addf %174, %175 : vector<2x128xf32>
    %177 = arith.negf %176 : vector<2x128xf32>
    %178 = math.exp %177 : vector<2x128xf32>
    %cst_67 = arith.constant 1.000000e+00 : f32
    %179 = vector.broadcast %cst_67 : f32 to vector<2x128xf32>
    %180 = arith.addf %179, %178 : vector<2x128xf32>
    %181 = arith.divf %179, %180 : vector<2x128xf32>
    %182 = vector.extract_strided_slice %160 {offsets = [0, 256], sizes = [2, 128], strides = [1, 1]} : vector<2x384xf32> to vector<2x128xf32>
    %183 = vector.extract_strided_slice %165 {offsets = [0, 256], sizes = [2, 128], strides = [1, 1]} : vector<2x384xf32> to vector<2x128xf32>
    %184 = arith.mulf %173, %183 : vector<2x128xf32>
    %185 = arith.addf %182, %184 : vector<2x128xf32>
    %186 = math.tanh %185 : vector<2x128xf32>
    %cst_68 = arith.constant 1.000000e+00 : f32
    %187 = vector.broadcast %cst_68 : f32 to vector<2x128xf32>
    %188 = arith.subf %187, %181 : vector<2x128xf32>
    %189 = arith.mulf %188, %186 : vector<2x128xf32>
    %190 = arith.mulf %181, %155 : vector<2x128xf32>
    %191 = arith.addf %189, %190 : vector<2x128xf32>
    %192 = arith.index_cast %158 : i32 to index
    %c0_69 = arith.constant 0 : index
    %193 = vector.load %arg15[%192, %c0_69] : memref<16x128xf32, #tpu.memory_space<vmem>>, vector<2x128xf32>
    tpu.vector_store %arg15[%192, %c0_69], %191 {strides = array<i32>} : memref<16x128xf32, #tpu.memory_space<vmem>>, vector<2x128xf32>,
    %c4_i32 = arith.constant 4 : i32
    %c2_i32_70 = arith.constant 2 : i32
    %194 = arith.muli %c4_i32, %c2_i32_70 : i32
    %195 = arith.index_cast %194 : i32 to index
    %c0_71 = arith.constant 0 : index
    %196 = vector.load %arg14[%195, %c0_71] : memref<16x384xf32, #tpu.memory_space<vmem>>, vector<2x384xf32>
    %c0_72 = arith.constant 0 : index
    %c0_73 = arith.constant 0 : index
    %197 = vector.load %arg8[%c0_72, %c0_73] : memref<128x384xf32, #tpu.memory_space<vmem>>, vector<128x384xf32>
    %cst_74 = arith.constant dense<0.000000e+00> : vector<2x384xf32>
    %198 = tpu.matmul %191, %197, %cst_74 {dimension_numbers = #tpu.dot_dimension_numbers<[1], [0], [0], [1], [0, 0, 1, 1], [], []>} : vector<2x128xf32>, vector<128x384xf32>, vector<2x384xf32> -> vector<2x384xf32>
    %c0_75 = arith.constant 0 : index
    %c0_76 = arith.constant 0 : index
    %199 = vector.load %arg9[%c0_75, %c0_76] : memref<1x384xf32, #tpu.memory_space<vmem>>, vector<1x384xf32>
    %200 = vector.broadcast %199 : vector<1x384xf32> to vector<2x384xf32>
    %201 = arith.addf %198, %200 : vector<2x384xf32>
    %202 = vector.extract_strided_slice %196 {offsets = [0, 0], sizes = [2, 128], strides = [1, 1]} : vector<2x384xf32> to vector<2x128xf32>
    %203 = vector.extract_strided_slice %201 {offsets = [0, 0], sizes = [2, 128], strides = [1, 1]} : vector<2x384xf32> to vector<2x128xf32>
    %204 = arith.addf %202, %203 : vector<2x128xf32>
    %205 = arith.negf %204 : vector<2x128xf32>
    %206 = math.exp %205 : vector<2x128xf32>
    %cst_77 = arith.constant 1.000000e+00 : f32
    %207 = vector.broadcast %cst_77 : f32 to vector<2x128xf32>
    %208 = arith.addf %207, %206 : vector<2x128xf32>
    %209 = arith.divf %207, %208 : vector<2x128xf32>
    %210 = vector.extract_strided_slice %196 {offsets = [0, 128], sizes = [2, 128], strides = [1, 1]} : vector<2x384xf32> to vector<2x128xf32>
    %211 = vector.extract_strided_slice %201 {offsets = [0, 128], sizes = [2, 128], strides = [1, 1]} : vector<2x384xf32> to vector<2x128xf32>
    %212 = arith.addf %210, %211 : vector<2x128xf32>
    %213 = arith.negf %212 : vector<2x128xf32>
    %214 = math.exp %213 : vector<2x128xf32>
    %cst_78 = arith.constant 1.000000e+00 : f32
    %215 = vector.broadcast %cst_78 : f32 to vector<2x128xf32>
    %216 = arith.addf %215, %214 : vector<2x128xf32>
    %217 = arith.divf %215, %216 : vector<2x128xf32>
    %218 = vector.extract_strided_slice %196 {offsets = [0, 256], sizes = [2, 128], strides = [1, 1]} : vector<2x384xf32> to vector<2x128xf32>
    %219 = vector.extract_strided_slice %201 {offsets = [0, 256], sizes = [2, 128], strides = [1, 1]} : vector<2x384xf32> to vector<2x128xf32>
    %220 = arith.mulf %209, %219 : vector<2x128xf32>
    %221 = arith.addf %218, %220 : vector<2x128xf32>
    %222 = math.tanh %221 : vector<2x128xf32>
    %cst_79 = arith.constant 1.000000e+00 : f32
    %223 = vector.broadcast %cst_79 : f32 to vector<2x128xf32>
    %224 = arith.subf %223, %217 : vector<2x128xf32>
    %225 = arith.mulf %224, %222 : vector<2x128xf32>
    %226 = arith.mulf %217, %191 : vector<2x128xf32>
    %227 = arith.addf %225, %226 : vector<2x128xf32>
    %228 = arith.index_cast %194 : i32 to index
    %c0_80 = arith.constant 0 : index
    %229 = vector.load %arg15[%228, %c0_80] : memref<16x128xf32, #tpu.memory_space<vmem>>, vector<2x128xf32>
    tpu.vector_store %arg15[%228, %c0_80], %227 {strides = array<i32>} : memref<16x128xf32, #tpu.memory_space<vmem>>, vector<2x128xf32>,
    %c5_i32 = arith.constant 5 : i32
    %c2_i32_81 = arith.constant 2 : i32
    %230 = arith.muli %c5_i32, %c2_i32_81 : i32
    %231 = arith.index_cast %230 : i32 to index
    %c0_82 = arith.constant 0 : index
    %232 = vector.load %arg14[%231, %c0_82] : memref<16x384xf32, #tpu.memory_space<vmem>>, vector<2x384xf32>
    %c0_83 = arith.constant 0 : index
    %c0_84 = arith.constant 0 : index
    %233 = vector.load %arg8[%c0_83, %c0_84] : memref<128x384xf32, #tpu.memory_space<vmem>>, vector<128x384xf32>
    %cst_85 = arith.constant dense<0.000000e+00> : vector<2x384xf32>
    %234 = tpu.matmul %227, %233, %cst_85 {dimension_numbers = #tpu.dot_dimension_numbers<[1], [0], [0], [1], [0, 0, 1, 1], [], []>} : vector<2x128xf32>, vector<128x384xf32>, vector<2x384xf32> -> vector<2x384xf32>
    %c0_86 = arith.constant 0 : index
    %c0_87 = arith.constant 0 : index
    %235 = vector.load %arg9[%c0_86, %c0_87] : memref<1x384xf32, #tpu.memory_space<vmem>>, vector<1x384xf32>
    %236 = vector.broadcast %235 : vector<1x384xf32> to vector<2x384xf32>
    %237 = arith.addf %234, %236 : vector<2x384xf32>
    %238 = vector.extract_strided_slice %232 {offsets = [0, 0], sizes = [2, 128], strides = [1, 1]} : vector<2x384xf32> to vector<2x128xf32>
    %239 = vector.extract_strided_slice %237 {offsets = [0, 0], sizes = [2, 128], strides = [1, 1]} : vector<2x384xf32> to vector<2x128xf32>
    %240 = arith.addf %238, %239 : vector<2x128xf32>
    %241 = arith.negf %240 : vector<2x128xf32>
    %242 = math.exp %241 : vector<2x128xf32>
    %cst_88 = arith.constant 1.000000e+00 : f32
    %243 = vector.broadcast %cst_88 : f32 to vector<2x128xf32>
    %244 = arith.addf %243, %242 : vector<2x128xf32>
    %245 = arith.divf %243, %244 : vector<2x128xf32>
    %246 = vector.extract_strided_slice %232 {offsets = [0, 128], sizes = [2, 128], strides = [1, 1]} : vector<2x384xf32> to vector<2x128xf32>
    %247 = vector.extract_strided_slice %237 {offsets = [0, 128], sizes = [2, 128], strides = [1, 1]} : vector<2x384xf32> to vector<2x128xf32>
    %248 = arith.addf %246, %247 : vector<2x128xf32>
    %249 = arith.negf %248 : vector<2x128xf32>
    %250 = math.exp %249 : vector<2x128xf32>
    %cst_89 = arith.constant 1.000000e+00 : f32
    %251 = vector.broadcast %cst_89 : f32 to vector<2x128xf32>
    %252 = arith.addf %251, %250 : vector<2x128xf32>
    %253 = arith.divf %251, %252 : vector<2x128xf32>
    %254 = vector.extract_strided_slice %232 {offsets = [0, 256], sizes = [2, 128], strides = [1, 1]} : vector<2x384xf32> to vector<2x128xf32>
    %255 = vector.extract_strided_slice %237 {offsets = [0, 256], sizes = [2, 128], strides = [1, 1]} : vector<2x384xf32> to vector<2x128xf32>
    %256 = arith.mulf %245, %255 : vector<2x128xf32>
    %257 = arith.addf %254, %256 : vector<2x128xf32>
    %258 = math.tanh %257 : vector<2x128xf32>
    %cst_90 = arith.constant 1.000000e+00 : f32
    %259 = vector.broadcast %cst_90 : f32 to vector<2x128xf32>
    %260 = arith.subf %259, %253 : vector<2x128xf32>
    %261 = arith.mulf %260, %258 : vector<2x128xf32>
    %262 = arith.mulf %253, %227 : vector<2x128xf32>
    %263 = arith.addf %261, %262 : vector<2x128xf32>
    %264 = arith.index_cast %230 : i32 to index
    %c0_91 = arith.constant 0 : index
    %265 = vector.load %arg15[%264, %c0_91] : memref<16x128xf32, #tpu.memory_space<vmem>>, vector<2x128xf32>
    tpu.vector_store %arg15[%264, %c0_91], %263 {strides = array<i32>} : memref<16x128xf32, #tpu.memory_space<vmem>>, vector<2x128xf32>,
    %c6_i32 = arith.constant 6 : i32
    %c2_i32_92 = arith.constant 2 : i32
    %266 = arith.muli %c6_i32, %c2_i32_92 : i32
    %267 = arith.index_cast %266 : i32 to index
    %c0_93 = arith.constant 0 : index
    %268 = vector.load %arg14[%267, %c0_93] : memref<16x384xf32, #tpu.memory_space<vmem>>, vector<2x384xf32>
    %c0_94 = arith.constant 0 : index
    %c0_95 = arith.constant 0 : index
    %269 = vector.load %arg8[%c0_94, %c0_95] : memref<128x384xf32, #tpu.memory_space<vmem>>, vector<128x384xf32>
    %cst_96 = arith.constant dense<0.000000e+00> : vector<2x384xf32>
    %270 = tpu.matmul %263, %269, %cst_96 {dimension_numbers = #tpu.dot_dimension_numbers<[1], [0], [0], [1], [0, 0, 1, 1], [], []>} : vector<2x128xf32>, vector<128x384xf32>, vector<2x384xf32> -> vector<2x384xf32>
    %c0_97 = arith.constant 0 : index
    %c0_98 = arith.constant 0 : index
    %271 = vector.load %arg9[%c0_97, %c0_98] : memref<1x384xf32, #tpu.memory_space<vmem>>, vector<1x384xf32>
    %272 = vector.broadcast %271 : vector<1x384xf32> to vector<2x384xf32>
    %273 = arith.addf %270, %272 : vector<2x384xf32>
    %274 = vector.extract_strided_slice %268 {offsets = [0, 0], sizes = [2, 128], strides = [1, 1]} : vector<2x384xf32> to vector<2x128xf32>
    %275 = vector.extract_strided_slice %273 {offsets = [0, 0], sizes = [2, 128], strides = [1, 1]} : vector<2x384xf32> to vector<2x128xf32>
    %276 = arith.addf %274, %275 : vector<2x128xf32>
    %277 = arith.negf %276 : vector<2x128xf32>
    %278 = math.exp %277 : vector<2x128xf32>
    %cst_99 = arith.constant 1.000000e+00 : f32
    %279 = vector.broadcast %cst_99 : f32 to vector<2x128xf32>
    %280 = arith.addf %279, %278 : vector<2x128xf32>
    %281 = arith.divf %279, %280 : vector<2x128xf32>
    %282 = vector.extract_strided_slice %268 {offsets = [0, 128], sizes = [2, 128], strides = [1, 1]} : vector<2x384xf32> to vector<2x128xf32>
    %283 = vector.extract_strided_slice %273 {offsets = [0, 128], sizes = [2, 128], strides = [1, 1]} : vector<2x384xf32> to vector<2x128xf32>
    %284 = arith.addf %282, %283 : vector<2x128xf32>
    %285 = arith.negf %284 : vector<2x128xf32>
    %286 = math.exp %285 : vector<2x128xf32>
    %cst_100 = arith.constant 1.000000e+00 : f32
    %287 = vector.broadcast %cst_100 : f32 to vector<2x128xf32>
    %288 = arith.addf %287, %286 : vector<2x128xf32>
    %289 = arith.divf %287, %288 : vector<2x128xf32>
    %290 = vector.extract_strided_slice %268 {offsets = [0, 256], sizes = [2, 128], strides = [1, 1]} : vector<2x384xf32> to vector<2x128xf32>
    %291 = vector.extract_strided_slice %273 {offsets = [0, 256], sizes = [2, 128], strides = [1, 1]} : vector<2x384xf32> to vector<2x128xf32>
    %292 = arith.mulf %281, %291 : vector<2x128xf32>
    %293 = arith.addf %290, %292 : vector<2x128xf32>
    %294 = math.tanh %293 : vector<2x128xf32>
    %cst_101 = arith.constant 1.000000e+00 : f32
    %295 = vector.broadcast %cst_101 : f32 to vector<2x128xf32>
    %296 = arith.subf %295, %289 : vector<2x128xf32>
    %297 = arith.mulf %296, %294 : vector<2x128xf32>
    %298 = arith.mulf %289, %263 : vector<2x128xf32>
    %299 = arith.addf %297, %298 : vector<2x128xf32>
    %300 = arith.index_cast %266 : i32 to index
    %c0_102 = arith.constant 0 : index
    %301 = vector.load %arg15[%300, %c0_102] : memref<16x128xf32, #tpu.memory_space<vmem>>, vector<2x128xf32>
    tpu.vector_store %arg15[%300, %c0_102], %299 {strides = array<i32>} : memref<16x128xf32, #tpu.memory_space<vmem>>, vector<2x128xf32>,
    %c7_i32 = arith.constant 7 : i32
    %c2_i32_103 = arith.constant 2 : i32
    %302 = arith.muli %c7_i32, %c2_i32_103 : i32
    %303 = arith.index_cast %302 : i32 to index
    %c0_104 = arith.constant 0 : index
    %304 = vector.load %arg14[%303, %c0_104] : memref<16x384xf32, #tpu.memory_space<vmem>>, vector<2x384xf32>
    %c0_105 = arith.constant 0 : index
    %c0_106 = arith.constant 0 : index
    %305 = vector.load %arg8[%c0_105, %c0_106] : memref<128x384xf32, #tpu.memory_space<vmem>>, vector<128x384xf32>
    %cst_107 = arith.constant dense<0.000000e+00> : vector<2x384xf32>
    %306 = tpu.matmul %299, %305, %cst_107 {dimension_numbers = #tpu.dot_dimension_numbers<[1], [0], [0], [1], [0, 0, 1, 1], [], []>} : vector<2x128xf32>, vector<128x384xf32>, vector<2x384xf32> -> vector<2x384xf32>
    %c0_108 = arith.constant 0 : index
    %c0_109 = arith.constant 0 : index
    %307 = vector.load %arg9[%c0_108, %c0_109] : memref<1x384xf32, #tpu.memory_space<vmem>>, vector<1x384xf32>
    %308 = vector.broadcast %307 : vector<1x384xf32> to vector<2x384xf32>
    %309 = arith.addf %306, %308 : vector<2x384xf32>
    %310 = vector.extract_strided_slice %304 {offsets = [0, 0], sizes = [2, 128], strides = [1, 1]} : vector<2x384xf32> to vector<2x128xf32>
    %311 = vector.extract_strided_slice %309 {offsets = [0, 0], sizes = [2, 128], strides = [1, 1]} : vector<2x384xf32> to vector<2x128xf32>
    %312 = arith.addf %310, %311 : vector<2x128xf32>
    %313 = arith.negf %312 : vector<2x128xf32>
    %314 = math.exp %313 : vector<2x128xf32>
    %cst_110 = arith.constant 1.000000e+00 : f32
    %315 = vector.broadcast %cst_110 : f32 to vector<2x128xf32>
    %316 = arith.addf %315, %314 : vector<2x128xf32>
    %317 = arith.divf %315, %316 : vector<2x128xf32>
    %318 = vector.extract_strided_slice %304 {offsets = [0, 128], sizes = [2, 128], strides = [1, 1]} : vector<2x384xf32> to vector<2x128xf32>
    %319 = vector.extract_strided_slice %309 {offsets = [0, 128], sizes = [2, 128], strides = [1, 1]} : vector<2x384xf32> to vector<2x128xf32>
    %320 = arith.addf %318, %319 : vector<2x128xf32>
    %321 = arith.negf %320 : vector<2x128xf32>
    %322 = math.exp %321 : vector<2x128xf32>
    %cst_111 = arith.constant 1.000000e+00 : f32
    %323 = vector.broadcast %cst_111 : f32 to vector<2x128xf32>
    %324 = arith.addf %323, %322 : vector<2x128xf32>
    %325 = arith.divf %323, %324 : vector<2x128xf32>
    %326 = vector.extract_strided_slice %304 {offsets = [0, 256], sizes = [2, 128], strides = [1, 1]} : vector<2x384xf32> to vector<2x128xf32>
    %327 = vector.extract_strided_slice %309 {offsets = [0, 256], sizes = [2, 128], strides = [1, 1]} : vector<2x384xf32> to vector<2x128xf32>
    %328 = arith.mulf %317, %327 : vector<2x128xf32>
    %329 = arith.addf %326, %328 : vector<2x128xf32>
    %330 = math.tanh %329 : vector<2x128xf32>
    %cst_112 = arith.constant 1.000000e+00 : f32
    %331 = vector.broadcast %cst_112 : f32 to vector<2x128xf32>
    %332 = arith.subf %331, %325 : vector<2x128xf32>
    %333 = arith.mulf %332, %330 : vector<2x128xf32>
    %334 = arith.mulf %325, %299 : vector<2x128xf32>
    %335 = arith.addf %333, %334 : vector<2x128xf32>
    %336 = arith.index_cast %302 : i32 to index
    %c0_113 = arith.constant 0 : index
    %337 = vector.load %arg15[%336, %c0_113] : memref<16x128xf32, #tpu.memory_space<vmem>>, vector<2x128xf32>
    tpu.vector_store %arg15[%336, %c0_113], %335 {strides = array<i32>} : memref<16x128xf32, #tpu.memory_space<vmem>>, vector<2x128xf32>,
    %c8_i32 = arith.constant 8 : i32
    %c0_114 = arith.constant 0 : index
    %c0_115 = arith.constant 0 : index
    %338 = vector.load %arg15[%c0_114, %c0_115] : memref<16x128xf32, #tpu.memory_space<vmem>>, vector<16x128xf32>
    %c0_116 = arith.constant 0 : index
    %c0_117 = arith.constant 0 : index
    %339 = vector.load %arg10[%c0_116, %c0_117] : memref<128x32xf32, #tpu.memory_space<vmem>>, vector<128x32xf32>
    %cst_118 = arith.constant dense<0.000000e+00> : vector<16x32xf32>
    %340 = tpu.matmul %338, %339, %cst_118 {dimension_numbers = #tpu.dot_dimension_numbers<[1], [0], [0], [1], [0, 0, 1, 1], [], []>} : vector<16x128xf32>, vector<128x32xf32>, vector<16x32xf32> -> vector<16x32xf32>
    %c0_119 = arith.constant 0 : index
    %c0_120 = arith.constant 0 : index
    %341 = vector.load %arg11[%c0_119, %c0_120] : memref<1x32xf32, #tpu.memory_space<vmem>>, vector<1x32xf32>
    %342 = vector.broadcast %341 : vector<1x32xf32> to vector<16x32xf32>
    %343 = arith.addf %340, %342 : vector<16x32xf32>
    %344 = vector.extract_strided_slice %343 {offsets = [0, 0], sizes = [16, 16], strides = [1, 1]} : vector<16x32xf32> to vector<16x16xf32>
    %345 = vector.extract_strided_slice %343 {offsets = [0, 16], sizes = [16, 16], strides = [1, 1]} : vector<16x32xf32> to vector<16x16xf32>
    %c0_121 = arith.constant 0 : index
    %c0_122 = arith.constant 0 : index
    %346 = vector.load %arg12[%c0_121, %c0_122] : memref<16x16xf32, #tpu.memory_space<vmem>>, vector<16x16xf32>
    %cst_123 = arith.constant 5.000000e-01 : f32
    %347 = vector.broadcast %cst_123 : f32 to vector<16x16xf32>
    %348 = arith.mulf %347, %345 : vector<16x16xf32>
    %349 = math.exp %348 : vector<16x16xf32>
    %350 = arith.mulf %346, %349 : vector<16x16xf32>
    %351 = arith.addf %344, %350 : vector<16x16xf32>
    %c0_124 = arith.constant 0 : index
    %c0_125 = arith.constant 0 : index
    %352 = vector.load %arg13[%c0_124, %c0_125] : memref<16x48xf32, #tpu.memory_space<vmem>>, vector<16x16xf32>
    tpu.vector_store %arg13[%c0_124, %c0_125], %351 {strides = array<i32>} : memref<16x48xf32, #tpu.memory_space<vmem>>, vector<16x16xf32>,
    %c0_126 = arith.constant 0 : index
    %c16 = arith.constant 16 : index
    %353 = vector.load %arg13[%c0_126, %c16] : memref<16x48xf32, #tpu.memory_space<vmem>>, vector<16x32xf32>
    tpu.vector_store %arg13[%c0_126, %c16], %343 {strides = array<i32>} : memref<16x48xf32, #tpu.memory_space<vmem>>, vector<16x32xf32>,
    return
  }
  func.func @transform_0(%arg0: i32) -> (i32, i32) {
    %c0_i32 = arith.constant 0 : i32
    %c0_i32_0 = arith.constant 0 : i32
    %c0_i32_1 = arith.constant 0 : i32
    return %c0_i32, %c0_i32_0 : i32, i32
  }
  func.func @transform_1(%arg0: i32) -> (i32, i32) {
    %c0_i32 = arith.constant 0 : i32
    %c0_i32_0 = arith.constant 0 : i32
    %c0_i32_1 = arith.constant 0 : i32
    return %c0_i32, %c0_i32_0 : i32, i32
  }
  func.func @transform_2(%arg0: i32) -> (i32, i32) {
    %c0_i32 = arith.constant 0 : i32
    %c0_i32_0 = arith.constant 0 : i32
    %c0_i32_1 = arith.constant 0 : i32
    return %c0_i32, %c0_i32_0 : i32, i32
  }
  func.func @transform_3(%arg0: i32) -> (i32, i32) {
    %c0_i32 = arith.constant 0 : i32
    %c0_i32_0 = arith.constant 0 : i32
    %c0_i32_1 = arith.constant 0 : i32
    return %c0_i32, %c0_i32_0 : i32, i32
  }
  func.func @transform_4(%arg0: i32) -> (i32, i32) {
    %c0_i32 = arith.constant 0 : i32
    %c0_i32_0 = arith.constant 0 : i32
    %c0_i32_1 = arith.constant 0 : i32
    return %c0_i32, %c0_i32_0 : i32, i32
  }
  func.func @transform_5(%arg0: i32) -> (i32, i32) {
    %c0_i32 = arith.constant 0 : i32
    %c0_i32_0 = arith.constant 0 : i32
    %c0_i32_1 = arith.constant 0 : i32
    return %c0_i32, %c0_i32_0 : i32, i32
  }
  func.func @transform_6(%arg0: i32) -> (i32, i32) {
    %c0_i32 = arith.constant 0 : i32
    %c0_i32_0 = arith.constant 0 : i32
    %c0_i32_1 = arith.constant 0 : i32
    return %c0_i32, %c0_i32_0 : i32, i32
  }
  func.func @transform_7(%arg0: i32) -> (i32, i32) {
    %c0_i32 = arith.constant 0 : i32
    %c0_i32_0 = arith.constant 0 : i32
    %c0_i32_1 = arith.constant 0 : i32
    return %c0_i32, %c0_i32_0 : i32, i32
  }
  func.func @transform_8(%arg0: i32) -> (i32, i32) {
    %c0_i32 = arith.constant 0 : i32
    %c0_i32_0 = arith.constant 0 : i32
    %c0_i32_1 = arith.constant 0 : i32
    return %c0_i32, %c0_i32_0 : i32, i32
  }
  func.func @transform_9(%arg0: i32) -> (i32, i32) {
    %c0_i32 = arith.constant 0 : i32
    %c0_i32_0 = arith.constant 0 : i32
    %c0_i32_1 = arith.constant 0 : i32
    return %c0_i32, %c0_i32_0 : i32, i32
  }
  func.func @transform_10(%arg0: i32) -> (i32, i32) {
    %c0_i32 = arith.constant 0 : i32
    %c0_i32_0 = arith.constant 0 : i32
    %c0_i32_1 = arith.constant 0 : i32
    return %c0_i32, %c0_i32_0 : i32, i32
  }
  func.func @transform_11(%arg0: i32) -> (i32, i32) {
    %c0_i32 = arith.constant 0 : i32
    %c0_i32_0 = arith.constant 0 : i32
    %c0_i32_1 = arith.constant 0 : i32
    return %c0_i32, %c0_i32_0 : i32, i32
  }
  func.func @transform_12(%arg0: i32) -> (i32, i32) {
    %c0_i32 = arith.constant 0 : i32
    %c0_i32_0 = arith.constant 0 : i32
    %c0_i32_1 = arith.constant 0 : i32
    return %c0_i32, %c0_i32_0 : i32, i32
  }
}

</mosaic_0001>

<llo_original>
// kernel: tpu_custom_call.1
$region0: #{tpu_custom_call.1}
  #allocation0 [shape = 'u32[]', space=smem, size = 0x4, offset = 0x4, fixed_abs, tag = 'smem constant byte address 0x4 - core index']
  #allocation1 [shape = 'u32[144,128]{1,0:T(1,128)}', space=vmem, size = 0x12000, scoped, tag = 'internal scratch']
  #allocation2 [shape = 'f32[16,384]{1,0:T(8,128)}', space=vmem, size = 0x6000, scoped, tag = 'scratch operand']
  #allocation3 [shape = 'f32[16,128]{1,0:T(8,128)}', space=vmem, size = 0x2000, scoped, tag = 'scratch operand']
  %s0 = inlined_call_operand.vmem [shape: f32[16,32], index: 0, kind: input, shape index: {}]
  %s1 = inlined_call_operand.vmem [shape: f32[32,256], index: 1, kind: input, shape index: {}]
  %s2 = inlined_call_operand.vmem [shape: f32[128,17], index: 2, kind: input, shape index: {}]
  %s3 = inlined_call_operand.vmem [shape: f32[1,17], index: 3, kind: input, shape index: {}]
  %s4 = inlined_call_operand.vmem [shape: f32[1,17], index: 4, kind: input, shape index: {}]
  %s5 = inlined_call_operand.vmem [shape: f32[17,384], index: 5, kind: input, shape index: {}]
  %s6 = inlined_call_operand.vmem [shape: f32[1,384], index: 6, kind: input, shape index: {}]
  %s7 = inlined_call_operand.hbm [shape: f32[128,384], index: 7, kind: input, shape index: {}]
  %s8 = inlined_call_operand.vmem [shape: f32[1,384], index: 8, kind: input, shape index: {}]
  %s9 = inlined_call_operand.vmem [shape: f32[128,32], index: 9, kind: input, shape index: {}]
  %s10 = inlined_call_operand.vmem [shape: f32[1,32], index: 10, kind: input, shape index: {}]
  %s11 = inlined_call_operand.vmem [shape: f32[16,16], index: 11, kind: input, shape index: {}]
  %s12 = inlined_call_operand.hbm [shape: f32[16,48], index: 12, kind: output, shape index: {}]
  %s13 = sld [smem:[#allocation0]]
  $region62: #{tpu_custom_call.1} parent=0
    _
  %s15 = ssub.s32 1, %s13
  %s16 = scalar_select 0, %s15, %s13
  $region1: #{tpu_custom_call.1} parent=0
    #allocation4 [shape = 'u8[196608]{0}', space=vmem, size = 0x30000, scoped, tag = 'input window, operand 7, single buffered']
    #allocation5 [shape = 's32[1]{0}', space=sflag, size = 0x4, scoped, tag = 'scoped memory for tpu_custom_call.1']
    #allocation6 [shape = 's32[1]{0}', space=sflag, size = 0x4, scoped, tag = 'scoped memory for tpu_custom_call.1']
    #allocation7 [shape = 'u8[8192]{0}', space=vmem, size = 0x2000, scoped, tag = 'output window, operand 0, single buffered']
    %17 = vsyncpa [#allocation5], 0
    %18 = vsyncpa [#allocation6], 0
    // Predicated region
    $region2: #{tpu_custom_call.1} parent=1 // pred_check
      _
    $region3: #{tpu_custom_call.1} parent=1 // pred_check_branch
      %20 = sbr.rel (0) target = $region5
    $region4: #{tpu_custom_call.1} parent=1 // pred_region
      _
    $region5: #{tpu_custom_call.1} parent=1 // pred_fallthru
      _
    // Predicated region
    $region6: #{tpu_custom_call.1} parent=1 // pred_check
      _
    $region7: #{tpu_custom_call.1} parent=1 // pred_check_branch
      %22 = sbr.rel (0) target = $region9
    $region8: #{tpu_custom_call.1} parent=1 // pred_region
      _
    $region9: #{tpu_custom_call.1} parent=1 // pred_fallthru
      _
    // Predicated region
    $region10: #{tpu_custom_call.1} parent=1 // pred_check
      _
    $region11: #{tpu_custom_call.1} parent=1 // pred_check_branch
      %24 = sbr.rel (0) target = $region13
    $region12: #{tpu_custom_call.1} parent=1 // pred_region
      _
    $region13: #{tpu_custom_call.1} parent=1 // pred_fallthru
      _
    // Predicated region
    $region14: #{tpu_custom_call.1} parent=1 // pred_check
      _
    $region15: #{tpu_custom_call.1} parent=1 // pred_check_branch
      %26 = sbr.rel (0) target = $region17
    $region16: #{tpu_custom_call.1} parent=1 // pred_region
      _
    $region17: #{tpu_custom_call.1} parent=1 // pred_fallthru
      _
    // Predicated region
    $region18: #{tpu_custom_call.1} parent=1 // pred_check
      _
    $region19: #{tpu_custom_call.1} parent=1 // pred_check_branch
      %28 = sbr.rel (0) target = $region21
    $region20: #{tpu_custom_call.1} parent=1 // pred_region
      _
    $region21: #{tpu_custom_call.1} parent=1 // pred_fallthru
      _
    // Predicated region
    $region22: #{tpu_custom_call.1} parent=1 // pred_check
      _
    $region23: #{tpu_custom_call.1} parent=1 // pred_check_branch
      %30 = sbr.rel (0) target = $region25
    $region24: #{tpu_custom_call.1} parent=1 // pred_region
      _
    $region25: #{tpu_custom_call.1} parent=1 // pred_fallthru
      _
    // Predicated region
    $region26: #{tpu_custom_call.1} parent=1 // pred_check
      _
    $region27: #{tpu_custom_call.1} parent=1 // pred_check_branch
      %32 = sbr.rel (0) target = $region29
    $region28: #{tpu_custom_call.1} parent=1 // pred_region
      _
    $region29: #{tpu_custom_call.1} parent=1 // pred_fallthru
      _
    // Predicated region
    $region30: #{tpu_custom_call.1} parent=1 // pred_check
      _
    $region31: #{tpu_custom_call.1} parent=1 // pred_check_branch
      %34 = sbr.rel (0) target = $region33
    $region32: #{tpu_custom_call.1} parent=1 // pred_region
      %s36 = ssub.s32 6144, 6144
      %37 = vsyncadd [#allocation5], %s36
      %s38 = sshll.u32 [#allocation4], 4
      %s39 = int_to_ptr.vmem [resolvable:$true] %s38
      %44 = dma.hbm_to_vmem [thread:$0]  %s7, 6144, %s39, [#allocation5], 384, 384, 24
    $region33: #{tpu_custom_call.1} parent=1 // pred_fallthru
      _
    // Predicated region
    $region34: #{tpu_custom_call.1} parent=1 // pred_check
      _
    $region35: #{tpu_custom_call.1} parent=1 // pred_check_branch
      %46 = sbr.rel (0) target = $region37
    $region36: #{tpu_custom_call.1} parent=1 // pred_region
      _
    $region37: #{tpu_custom_call.1} parent=1 // pred_fallthru
      _
    // Predicated region
    $region38: #{tpu_custom_call.1} parent=1 // pred_check
      _
    $region39: #{tpu_custom_call.1} parent=1 // pred_check_branch
      %48 = sbr.rel (0) target = $region41
    $region40: #{tpu_custom_call.1} parent=1 // pred_region
      _
    $region41: #{tpu_custom_call.1} parent=1 // pred_fallthru
      _
    // Predicated region
    $region42: #{tpu_custom_call.1} parent=1 // pred_check
      _
    $region43: #{tpu_custom_call.1} parent=1 // pred_check_branch
      %50 = sbr.rel (0) target = $region45
    $region44: #{tpu_custom_call.1} parent=1 // pred_region
      _
    $region45: #{tpu_custom_call.1} parent=1 // pred_fallthru
      _
    // Predicated region
    $region46: #{tpu_custom_call.1} parent=1 // pred_check
      _
    $region47: #{tpu_custom_call.1} parent=1 // pred_check_branch
      %52 = sbr.rel (0) target = $region49
    $region48: #{tpu_custom_call.1} parent=1 // pred_region
      _
    $region49: #{tpu_custom_call.1} parent=1 // pred_fallthru
      _
    // Predicated region
    $region50: #{tpu_custom_call.1} parent=1 // pred_check
      _
    $region51: #{tpu_custom_call.1} parent=1 // pred_check_branch
      %54 = sbr.rel (0) target = $region53
    $region52: #{tpu_custom_call.1} parent=1 // pred_region
      %55 = dma.done [#allocation5], 6144
    $region53: #{tpu_custom_call.1} parent=1 // pred_fallthru
      _
    %v56 = vld [vmem:[%s0] sm:$0xff]
    %v57 = vld [vmem:[%s0 + $0x8] sm:$0xff]
    %v58 = vld [vmem:[%s1] sm:$0xff]
    %v59 = vld [vmem:[%s1 + $0x8] sm:$0xff]
    %v60 = vld [vmem:[%s1 + $0x10] sm:$0xff]
    %v61 = vld [vmem:[%s1 + $0x18] sm:$0xff]
    %v62 = vld [vmem:[%s1 + $0x20] sm:$0xff]
    %v63 = vld [vmem:[%s1 + $0x28] sm:$0xff]
    %v64 = vld [vmem:[%s1 + $0x30] sm:$0xff]
    %v65 = vld [vmem:[%s1 + $0x38] sm:$0xff]
    %vm66 = vcmask 261120
    %v68 = vsel %vm66, %v56, 0
    %v71 = vsel %vm66, %v57, 0
    %73 = vmatprep.subr.mxu0 %v59
    %74 = vmatpush1.msra.mxu0 %v58
    %75 = vmatprep.subr.mxu0 %v61
    %76 = vmatpush1.msra.mxu0 %v60
    %77 = vmatprep.subr.mxu0 %v63
    %78 = vmatpush1.msra.mxu0 %v62
    %79 = vmatprep.subr.mxu0 %v65
    %80 = vmatpush1.msra.mxu0 %v64
    %81 = vmatprep.subr.mxu0 0.0
    %82 = vmatpush1.msra.mxu0 0.0
    %83 = vmatprep.subr.mxu0 0.0
    %84 = vmatpush1.msra.mxu0 0.0
    %85 = vmatprep.subr.mxu0 0.0
    %86 = vmatpush1.msra.mxu0 0.0
    %87 = vmatprep.subr.mxu0 0.0
    %88 = vmatpush1.msra.mxu0 0.0
    %89 = vmatprep.subr.mxu0 0.0
    %90 = vmatpush1.msra.mxu0 0.0
    %91 = vmatprep.subr.mxu0 0.0
    %92 = vmatpush1.msra.mxu0 0.0
    %93 = vmatprep.subr.mxu0 0.0
    %94 = vmatpush1.msra.mxu0 0.0
    %95 = vmatprep.subr.mxu0 0.0
    %96 = vmatpush1.msra.mxu0 0.0
    %97 = vmatprep.subr.mxu0 0.0
    %98 = vmatpush1.msra.mxu0 0.0
    %99 = vmatprep.subr.mxu0 0.0
    %100 = vmatpush1.msra.mxu0 0.0
    %101 = vmatprep.subr.mxu0 0.0
    %102 = vmatpush1.msra.mxu0 0.0
    %103 = vmatprep.subr.mxu0 0.0
    %104 = vmatpush1.msra.mxu0 0.0
    %105 = vmatprep.subr.mxu0 0.0
    %106 = vmatpush1.msra.mxu0 0.0
    %107 = vmatprep.subr.mxu0 0.0
    %108 = vmatpush1.msra.mxu0 0.0
    %109 = vmatprep.subr.mxu0 0.0
    %110 = vmatpush1.msra.mxu0 0.0
    %111 = vmatprep.subr.mxu0 0.0
    %112 = vmatpush1.msra.mxu0 0.0
    %113 = vmatprep.subr.mxu0 0.0
    %114 = vmatpush1.msra.mxu0 0.0
    %115 = vmatprep.subr.mxu0 0.0
    %116 = vmatpush1.msra.mxu0 0.0
    %117 = vmatprep.subr.mxu0 0.0
    %118 = vmatpush1.msra.mxu0 0.0
    %119 = vmatprep.subr.mxu0 0.0
    %120 = vmatpush1.msra.mxu0 0.0
    %121 = vmatprep.subr.mxu0 0.0
    %122 = vmatpush1.msra.mxu0 0.0
    %123 = vmatprep.subr.mxu0 0.0
    %124 = vmatpush1.msra.mxu0 0.0
    %125 = vmatprep.subr.mxu0 0.0
    %126 = vmatpush1.msra.mxu0 0.0
    %127 = vmatprep.subr.mxu0 0.0
    %128 = vmatpush1.msra.mxu0 0.0
    %129 = vmatprep.subr.mxu0 0.0
    %130 = vmatpush1.msra.mxu0 0.0
    %131 = vmatprep.subr.mxu0 0.0
    %132 = vmatpush1.msra.mxu0 0.0
    %133 = vmatprep.subr.mxu0 0.0
    %134 = vmatpush1.msra.mxu0 0.0
    %135 = vmatprep.subr.mxu0 0.0
    %136 = vmatpush1.msra.mxu0 0.0
    %137 = vmatprep.mubr.f32.mxu0 0.0
    %138 = vmatmul.mubr.f32.gmra.mrb[0].mxu0 %v68
    %v139 = vpop.f32.mrb[0].mxu0
    %v140 = vadd.f32 0.0, %v139
    %v141 = vpop.f32.mrb[0].mxu0
    %v142 = vadd.f32 0.0, %v141
    %143 = vmatprep.mubr.f32.mxu0 0.0
    %144 = vmatmul.mubr.f32.gmra.mrb[0].mxu0 %v71
    %v145 = vpop.f32.mrb[0].mxu0
    %v146 = vadd.f32 0.0, %v145
    %v147 = vpop.f32.mrb[0].mxu0
    %v148 = vadd.f32 0.0, %v147
    %149 = vdwg.mxu0
    %v150 = vmul.f32 %v140, %v140
    %v151 = vmul.f32 %v146, %v146
    %v152 = vmul.f32 %v142, %v142
    %v153 = vmul.f32 %v148, %v148
    %v154 = vadd.f32 %v150, %v152
    %v155 = vadd.f32 %v151, %v153
    %v156 = vrsqrt.pop %v154
    %v157 = vmul.f32 %v154, %v156
    %vm158 = vcmp.eq.f32.partialorder %v154, inf
    %v159 = vsel %vm158, %v154, %v157
    %vm160 = vcmp.eq.f32.partialorder %v154, 0.0
    %v161 = vand.u32 %v154, 2147483648
    %v162 = vsel %vm160, %v161, %v159
    %v163 = vrsqrt.pop %v155
    %v164 = vmul.f32 %v155, %v163
    %vm165 = vcmp.eq.f32.partialorder %v155, inf
    %v166 = vsel %vm165, %v155, %v164
    %vm167 = vcmp.eq.f32.partialorder %v155, 0.0
    %v168 = vand.u32 %v155, 2147483648
    %v169 = vsel %vm167, %v168, %v166
    %v170 = vadd.f32 %v162, 1e-07
    %v171 = vadd.f32 %v169, 1e-07
    %v172 = vlog2.pop %v170
    %v173 = vmul.f32 %v172, 0.6931472
    %v174 = vlog2.pop %v171
    %v175 = vmul.f32 %v174, 0.6931472
    %v176 = vmul.f32 %v173, 8.685889
    %v177 = vmul.f32 %v175, 8.685889
    %v178 = vld [vmem:[%s2] sm:$0xff]
    %v179 = vld [vmem:[%s2 + $0x8] sm:$0xff]
    %v180 = vld [vmem:[%s2 + $0x10] sm:$0xff]
    %v181 = vld [vmem:[%s2 + $0x18] sm:$0xff]
    %v182 = vld [vmem:[%s2 + $0x20] sm:$0xff]
    %v183 = vld [vmem:[%s2 + $0x28] sm:$0xff]
    %v184 = vld [vmem:[%s2 + $0x30] sm:$0xff]
    %v185 = vld [vmem:[%s2 + $0x38] sm:$0xff]
    %v186 = vld [vmem:[%s2 + $0x40] sm:$0xff]
    %v187 = vld [vmem:[%s2 + $0x48] sm:$0xff]
    %v188 = vld [vmem:[%s2 + $0x50] sm:$0xff]
    %v189 = vld [vmem:[%s2 + $0x58] sm:$0xff]
    %v190 = vld [vmem:[%s2 + $0x60] sm:$0xff]
    %v191 = vld [vmem:[%s2 + $0x68] sm:$0xff]
    %v192 = vld [vmem:[%s2 + $0x70] sm:$0xff]
    %v193 = vld [vmem:[%s2 + $0x78] sm:$0xff]
    %194 = vmatprep.subr.mxu0 0.0
    %195 = vmatpush1.msra.mxu0 %v178
    %196 = vmatprep.subr.mxu0 0.0
    %197 = vmatpush1.msra.mxu0 %v179
    %198 = vmatprep.subr.mxu0 0.0
    %199 = vmatpush1.msra.mxu0 %v180
    %200 = vmatprep.subr.mxu0 0.0
    %201 = vmatpush1.msra.mxu0 %v181
    %202 = vmatprep.subr.mxu0 0.0
    %203 = vmatpush1.msra.mxu0 %v182
    %204 = vmatprep.subr.mxu0 0.0
    %205 = vmatpush1.msra.mxu0 %v183
    %206 = vmatprep.subr.mxu0 0.0
    %207 = vmatpush1.msra.mxu0 %v184
    %208 = vmatprep.subr.mxu0 0.0
    %209 = vmatpush1.msra.mxu0 %v185
    %210 = vmatprep.subr.mxu0 0.0
    %211 = vmatpush1.msra.mxu0 %v186
    %212 = vmatprep.subr.mxu0 0.0
    %213 = vmatpush1.msra.mxu0 %v187
    %214 = vmatprep.subr.mxu0 0.0
    %215 = vmatpush1.msra.mxu0 %v188
    %216 = vmatprep.subr.mxu0 0.0
    %217 = vmatpush1.msra.mxu0 %v189
    %218 = vmatprep.subr.mxu0 0.0
    %219 = vmatpush1.msra.mxu0 %v190
    %220 = vmatprep.subr.mxu0 0.0
    %221 = vmatpush1.msra.mxu0 %v191
    %222 = vmatprep.subr.mxu0 0.0
    %223 = vmatpush1.msra.mxu0 %v192
    %224 = vmatprep.subr.mxu0 0.0
    %225 = vmatpush1.msra.mxu0 %v193
    %226 = vmatprep.subr.mxu0 0.0
    %227 = vmatpush1.msra.mxu0 0.0
    %228 = vmatprep.subr.mxu0 0.0
    %229 = vmatpush1.msra.mxu0 0.0
    %230 = vmatprep.subr.mxu0 0.0
    %231 = vmatpush1.msra.mxu0 0.0
    %232 = vmatprep.subr.mxu0 0.0
    %233 = vmatpush1.msra.mxu0 0.0
    %234 = vmatprep.subr.mxu0 0.0
    %235 = vmatpush1.msra.mxu0 0.0
    %236 = vmatprep.subr.mxu0 0.0
    %237 = vmatpush1.msra.mxu0 0.0
    %238 = vmatprep.subr.mxu0 0.0
    %239 = vmatpush1.msra.mxu0 0.0
    %240 = vmatprep.subr.mxu0 0.0
    %241 = vmatpush1.msra.mxu0 0.0
    %242 = vmatprep.subr.mxu0 0.0
    %243 = vmatpush1.msra.mxu0 0.0
    %244 = vmatprep.subr.mxu0 0.0
    %245 = vmatpush1.msra.mxu0 0.0
    %246 = vmatprep.subr.mxu0 0.0
    %247 = vmatpush1.msra.mxu0 0.0
    %248 = vmatprep.subr.mxu0 0.0
    %249 = vmatpush1.msra.mxu0 0.0
    %250 = vmatprep.subr.mxu0 0.0
    %251 = vmatpush1.msra.mxu0 0.0
    %252 = vmatprep.subr.mxu0 0.0
    %253 = vmatpush1.msra.mxu0 0.0
    %254 = vmatprep.subr.mxu0 0.0
    %255 = vmatpush1.msra.mxu0 0.0
    %256 = vmatprep.subr.mxu0 0.0
    %257 = vmatpush1.msra.mxu0 0.0
    %258 = vmatprep.mubr.f32.mxu0 0.0
    %259 = vmatmul.mubr.f32.gmra.mrb[0].mxu0 %v176
    %v260 = vpop.f32.mrb[0].mxu0
    %v261 = vadd.f32 0.0, %v260
    %v262 = vpop.f32.mrb[0].mxu0
    %263 = vmatprep.mubr.f32.mxu0 0.0
    %264 = vmatmul.mubr.f32.gmra.mrb[0].mxu0 %v177
    %v265 = vpop.f32.mrb[0].mxu0
    %v266 = vadd.f32 0.0, %v265
    %v267 = vpop.f32.mrb[0].mxu0
    %268 = vdwg.mxu0
    %v269 = vmul.f32 %v261, 0.115129255
    %v270 = vmul.f32 %v266, 0.115129255
    %v271 = vmul.f32 %v269, 1.442695
    %v272 = vpow.pop %v271
    %v273 = vmul.f32 %v270, 1.442695
    %v274 = vpow.pop %v273
    %vm275 = vcmask 138240
    %v276 = vsel %vm275, %v272, 0.0
    %277 = vadd.xlane.f32.xlu0 %v276
    %v278 = vpop.xlane.xlu0 %277
    %v279 = vsel %vm275, %v274, 0.0
    %280 = vadd.xlane.f32.xlu0 %v279
    %v281 = vpop.xlane.xlu0 %280
    %v282 = vrcp.pop 17.0
    %v283 = vmul.f32 %v278, %v282
    %v284 = vmul.f32 %v281, %v282
    %v285 = vsub.f32 %v272, %v283
    %v286 = vsub.f32 %v274, %v284
    %v287 = vmul.f32 %v285, %v285
    %v288 = vmul.f32 %v286, %v286
    %v289 = vsel %vm275, %v287, 0.0
    %290 = vadd.xlane.f32.xlu0 %v289
    %v291 = vpop.xlane.xlu0 %290
    %v292 = vsel %vm275, %v288, 0.0
    %293 = vadd.xlane.f32.xlu0 %v292
    %v294 = vpop.xlane.xlu0 %293
    %v295 = vmul.f32 %v291, %v282
    %v296 = vmul.f32 %v294, %v282
    %v297 = vadd.f32 %v295, 1e-05
    %v298 = vadd.f32 %v296, 1e-05
    %v299 = vrsqrt.pop %v297
    %v300 = vrsqrt.pop %v298
    %v301 = vmul.f32 %v285, %v299
    %v302 = vmul.f32 %v286, %v300
    %v303 = vld [vmem:[%s3] sm:$0x1]
    %v305 = vlaneseq
    %v306 = vshrl.u32 %v305, 7
    %v307 = vsub.s32 0, %v306
    %v308 = vrot.slane %v303, %v307
    %v310 = vmul.f32 %v301, %v308
    %v311 = vmul.f32 %v302, %v308
    %v312 = vld [vmem:[%s4] sm:$0x1]
    %v314 = vlaneseq
    %v315 = vshrl.u32 %v314, 7
    %v316 = vsub.s32 0, %v315
    %v317 = vrot.slane %v312, %v316
    %v319 = vadd.f32 %v310, %v317
    %v320 = vadd.f32 %v311, %v317
    %v321 = vld [vmem:[%s5] sm:$0xff]
    %v322 = vld [vmem:[%s5 + $0x8] sm:$0xff]
    %v323 = vld [vmem:[%s5 + $0x10] sm:$0xff]
    %v324 = vld [vmem:[%s5 + $0x18] sm:$0xff]
    %v325 = vld [vmem:[%s5 + $0x20] sm:$0xff]
    %v326 = vld [vmem:[%s5 + $0x28] sm:$0xff]
    %v327 = vld [vmem:[%s5 + $0x30] sm:$0x1]
    %v328 = vld [vmem:[%s5 + $0x38] sm:$0x1]
    %v329 = vld [vmem:[%s5 + $0x40] sm:$0x1]
    %v330 = vld [vmem:[%s6] sm:$0x7]
    %v332 = vlaneseq
    %v333 = vshrl.u32 %v332, 7
    %v334 = vsub.s32 0, %v333
    %v335 = vrot.slane %v330, %v334
    %v336 = vlaneseq
    %v337 = vshrl.u32 %v336, 7
    %v338 = vsub.s32 1, %v337
    %v339 = vrot.slane %v330, %v338
    %v340 = vlaneseq
    %v341 = vshrl.u32 %v340, 7
    %v342 = vsub.s32 2, %v341
    %v343 = vrot.slane %v330, %v342
    %v348 = vsel %vm275, %v319, 0
    %v351 = vsel %vm275, %v320, 0
    %vm353 = vcmask 1040384
    %v355 = vsel %vm353, %v327, 0
    %v358 = vsel %vm353, %v328, 0
    %v361 = vsel %vm353, %v329, 0
    %363 = vmatprep.subr.mxu0 %v322
    %364 = vmatpush1.msra.mxu0 %v321
    %365 = vmatprep.subr.mxu0 %v325
    %366 = vmatpush1.msra.mxu0 %v324
    %367 = vmatprep.subr.mxu0 %v358
    %368 = vmatpush1.msra.mxu0 %v355
    %369 = vmatprep.subr.mxu0 0.0
    %370 = vmatpush1.msra.mxu0 0.0
    %371 = vmatprep.subr.mxu0 0.0
    %372 = vmatpush1.msra.mxu0 0.0
    %373 = vmatprep.subr.mxu0 0.0
    %374 = vmatpush1.msra.mxu0 0.0
    %375 = vmatprep.subr.mxu0 0.0
    %376 = vmatpush1.msra.mxu0 0.0
    %377 = vmatprep.subr.mxu0 0.0
    %378 = vmatpush1.msra.mxu0 0.0
    %379 = vmatprep.subr.mxu0 0.0
    %380 = vmatpush1.msra.mxu0 0.0
    %381 = vmatprep.subr.mxu0 0.0
    %382 = vmatpush1.msra.mxu0 0.0
    %383 = vmatprep.subr.mxu0 0.0
    %384 = vmatpush1.msra.mxu0 0.0
    %385 = vmatprep.subr.mxu0 0.0
    %386 = vmatpush1.msra.mxu0 0.0
    %387 = vmatprep.subr.mxu0 0.0
    %388 = vmatpush1.msra.mxu0 0.0
    %389 = vmatprep.subr.mxu0 0.0
    %390 = vmatpush1.msra.mxu0 0.0
    %391 = vmatprep.subr.mxu0 0.0
    %392 = vmatpush1.msra.mxu0 0.0
    %393 = vmatprep.subr.mxu0 0.0
    %394 = vmatpush1.msra.mxu0 0.0
    %395 = vmatprep.subr.mxu0 0.0
    %396 = vmatpush1.msra.mxu0 0.0
    %397 = vmatprep.subr.mxu0 0.0
    %398 = vmatpush1.msra.mxu0 0.0
    %399 = vmatprep.subr.mxu0 0.0
    %400 = vmatpush1.msra.mxu0 0.0
    %401 = vmatprep.subr.mxu0 0.0
    %402 = vmatpush1.msra.mxu0 0.0
    %403 = vmatprep.subr.mxu0 0.0
    %404 = vmatpush1.msra.mxu0 0.0
    %405 = vmatprep.subr.mxu0 0.0
    %406 = vmatpush1.msra.mxu0 0.0
    %407 = vmatprep.subr.mxu0 0.0
    %408 = vmatpush1.msra.mxu0 0.0
    %409 = vmatprep.subr.mxu0 0.0
    %410 = vmatpush1.msra.mxu0 0.0
    %411 = vmatprep.subr.mxu0 0.0
    %412 = vmatpush1.msra.mxu0 0.0
    %413 = vmatprep.subr.mxu0 0.0
    %414 = vmatpush1.msra.mxu0 0.0
    %415 = vmatprep.subr.mxu0 0.0
    %416 = vmatpush1.msra.mxu0 0.0
    %417 = vmatprep.subr.mxu0 0.0
    %418 = vmatpush1.msra.mxu0 0.0
    %419 = vmatprep.subr.mxu0 0.0
    %420 = vmatpush1.msra.mxu0 0.0
    %421 = vmatprep.subr.mxu0 0.0
    %422 = vmatpush1.msra.mxu0 0.0
    %423 = vmatprep.subr.mxu0 0.0
    %424 = vmatpush1.msra.mxu0 0.0
    %425 = vmatprep.subr.mxu0 0.0
    %426 = vmatpush1.msra.mxu0 0.0
    %427 = vmatprep.mubr.f32.mxu0 0.0
    %428 = vmatmul.mubr.f32.gmra.mrb[0].mxu0 %v348
    %v429 = vpop.f32.mrb[0].mxu0
    %v430 = vadd.f32 %v335, %v429
    %v431 = vpop.f32.mrb[0].mxu0
    %v432 = vadd.f32 %v339, %v431
    %433 = vmatprep.mubr.f32.mxu0 0.0
    %434 = vmatmul.mubr.f32.gmra.mrb[0].mxu0 %v351
    %v435 = vpop.f32.mrb[0].mxu0
    %v436 = vadd.f32 %v335, %v435
    %v437 = vpop.f32.mrb[0].mxu0
    %v438 = vadd.f32 %v339, %v437
    %439 = vdwg.mxu0
    %440 = vmatprep.subr.mxu0 0.0
    %441 = vmatpush1.msra.mxu0 %v323
    %442 = vmatprep.subr.mxu0 0.0
    %443 = vmatpush1.msra.mxu0 %v326
    %444 = vmatprep.subr.mxu0 0.0
    %445 = vmatpush1.msra.mxu0 %v361
    %446 = vmatprep.subr.mxu0 0.0
    %447 = vmatpush1.msra.mxu0 0.0
    %448 = vmatprep.subr.mxu0 0.0
    %449 = vmatpush1.msra.mxu0 0.0
    %450 = vmatprep.subr.mxu0 0.0
    %451 = vmatpush1.msra.mxu0 0.0
    %452 = vmatprep.subr.mxu0 0.0
    %453 = vmatpush1.msra.mxu0 0.0
    %454 = vmatprep.subr.mxu0 0.0
    %455 = vmatpush1.msra.mxu0 0.0
    %456 = vmatprep.subr.mxu0 0.0
    %457 = vmatpush1.msra.mxu0 0.0
    %458 = vmatprep.subr.mxu0 0.0
    %459 = vmatpush1.msra.mxu0 0.0
    %460 = vmatprep.subr.mxu0 0.0
    %461 = vmatpush1.msra.mxu0 0.0
    %462 = vmatprep.subr.mxu0 0.0
    %463 = vmatpush1.msra.mxu0 0.0
    %464 = vmatprep.subr.mxu0 0.0
    %465 = vmatpush1.msra.mxu0 0.0
    %466 = vmatprep.subr.mxu0 0.0
    %467 = vmatpush1.msra.mxu0 0.0
    %468 = vmatprep.subr.mxu0 0.0
    %469 = vmatpush1.msra.mxu0 0.0
    %470 = vmatprep.subr.mxu0 0.0
    %471 = vmatpush1.msra.mxu0 0.0
    %472 = vmatprep.subr.mxu0 0.0
    %473 = vmatpush1.msra.mxu0 0.0
    %474 = vmatprep.subr.mxu0 0.0
    %475 = vmatpush1.msra.mxu0 0.0
    %476 = vmatprep.subr.mxu0 0.0
    %477 = vmatpush1.msra.mxu0 0.0
    %478 = vmatprep.subr.mxu0 0.0
    %479 = vmatpush1.msra.mxu0 0.0
    %480 = vmatprep.subr.mxu0 0.0
    %481 = vmatpush1.msra.mxu0 0.0
    %482 = vmatprep.subr.mxu0 0.0
    %483 = vmatpush1.msra.mxu0 0.0
    %484 = vmatprep.subr.mxu0 0.0
    %485 = vmatpush1.msra.mxu0 0.0
    %486 = vmatprep.subr.mxu0 0.0
    %487 = vmatpush1.msra.mxu0 0.0
    %488 = vmatprep.subr.mxu0 0.0
    %489 = vmatpush1.msra.mxu0 0.0
    %490 = vmatprep.subr.mxu0 0.0
    %491 = vmatpush1.msra.mxu0 0.0
    %492 = vmatprep.subr.mxu0 0.0
    %493 = vmatpush1.msra.mxu0 0.0
    %494 = vmatprep.subr.mxu0 0.0
    %495 = vmatpush1.msra.mxu0 0.0
    %496 = vmatprep.subr.mxu0 0.0
    %497 = vmatpush1.msra.mxu0 0.0
    %498 = vmatprep.subr.mxu0 0.0
    %499 = vmatpush1.msra.mxu0 0.0
    %500 = vmatprep.subr.mxu0 0.0
    %501 = vmatpush1.msra.mxu0 0.0
    %502 = vmatprep.subr.mxu0 0.0
    %503 = vmatpush1.msra.mxu0 0.0
    %504 = vmatprep.mubr.f32.mxu0 0.0
    %505 = vmatmul.mubr.f32.gmra.mrb[0].mxu0 %v348
    %v506 = vpop.f32.mrb[0].mxu0
    %v507 = vadd.f32 %v343, %v506
    %v508 = vpop.f32.mrb[0].mxu0
    %509 = vmatprep.mubr.f32.mxu0 0.0
    %510 = vmatmul.mubr.f32.gmra.mrb[0].mxu0 %v351
    %v511 = vpop.f32.mrb[0].mxu0
    %v512 = vadd.f32 %v343, %v511
    %v513 = vpop.f32.mrb[0].mxu0
    %514 = vdwg.mxu0
    %515 = vst [vmem:[#allocation2] sm:$0xff] %v430
    %516 = vst [vmem:[#allocation2 + $0x8] sm:$0xff] %v432
    %517 = vst [vmem:[#allocation2 + $0x10] sm:$0xff] %v507
    %518 = vst [vmem:[#allocation2 + $0x18] sm:$0xff] %v436
    %519 = vst [vmem:[#allocation2 + $0x20] sm:$0xff] %v438
    %520 = vst [vmem:[#allocation2 + $0x28] sm:$0xff] %v512
    %v521 = vld [vmem:[#allocation2] sm:$0x3]
    %v522 = vld [vmem:[#allocation2 + $0x8] sm:$0x3]
    %v523 = vld [vmem:[#allocation2 + $0x10] sm:$0x3]
    %v524 = vld [vmem:[#allocation4] sm:$0xff]
    %v525 = vld [vmem:[#allocation4 + $0x8] sm:$0xff]
    %v526 = vld [vmem:[#allocation4 + $0x10] sm:$0xff]
    %v527 = vld [vmem:[#allocation4 + $0x18] sm:$0xff]
    %v528 = vld [vmem:[#allocation4 + $0x20] sm:$0xff]
    %v529 = vld [vmem:[#allocation4 + $0x28] sm:$0xff]
    %v530 = vld [vmem:[#allocation4 + $0x30] sm:$0xff]
    %v531 = vld [vmem:[#allocation4 + $0x38] sm:$0xff]
    %v532 = vld [vmem:[#allocation4 + $0x40] sm:$0xff]
    %v533 = vld [vmem:[#allocation4 + $0x48] sm:$0xff]
    %v534 = vld [vmem:[#allocation4 + $0x50] sm:$0xff]
    %v535 = vld [vmem:[#allocation4 + $0x58] sm:$0xff]
    %v536 = vld [vmem:[#allocation4 + $0x60] sm:$0xff]
    %v537 = vld [vmem:[#allocation4 + $0x68] sm:$0xff]
    %v538 = vld [vmem:[#allocation4 + $0x70] sm:$0xff]
    %v539 = vld [vmem:[#allocation4 + $0x78] sm:$0xff]
    %v540 = vld [vmem:[#allocation4 + $0x80] sm:$0xff]
    %v541 = vld [vmem:[#allocation4 + $0x88] sm:$0xff]
    %v542 = vld [vmem:[#allocation4 + $0x90] sm:$0xff]
    %v543 = vld [vmem:[#allocation4 + $0x98] sm:$0xff]
    %v544 = vld [vmem:[#allocation4 + $0xa0] sm:$0xff]
    %v545 = vld [vmem:[#allocation4 + $0xa8] sm:$0xff]
    %v546 = vld [vmem:[#allocation4 + $0xb0] sm:$0xff]
    %v547 = vld [vmem:[#allocation4 + $0xb8] sm:$0xff]
    %v548 = vld [vmem:[#allocation4 + $0xc0] sm:$0xff]
    %v549 = vld [vmem:[#allocation4 + $0xc8] sm:$0xff]
    %v550 = vld [vmem:[#allocation4 + $0xd0] sm:$0xff]
    %v551 = vld [vmem:[#allocation4 + $0xd8] sm:$0xff]
    %v552 = vld [vmem:[#allocation4 + $0xe0] sm:$0xff]
    %v553 = vld [vmem:[#allocation4 + $0xe8] sm:$0xff]
    %v554 = vld [vmem:[#allocation4 + $0xf0] sm:$0xff]
    %v555 = vld [vmem:[#allocation4 + $0xf8] sm:$0xff]
    %v556 = vld [vmem:[#allocation4 + $0x100] sm:$0xff]
    %v557 = vld [vmem:[#allocation4 + $0x108] sm:$0xff]
    %v558 = vld [vmem:[#allocation4 + $0x110] sm:$0xff]
    %v559 = vld [vmem:[#allocation4 + $0x118] sm:$0xff]
    %v560 = vld [vmem:[#allocation4 + $0x120] sm:$0xff]
    %v561 = vld [vmem:[#allocation4 + $0x128] sm:$0xff]
    %v562 = vld [vmem:[#allocation4 + $0x130] sm:$0xff]
    %v563 = vld [vmem:[#allocation4 + $0x138] sm:$0xff]
    %v564 = vld [vmem:[#allocation4 + $0x140] sm:$0xff]
    %v565 = vld [vmem:[#allocation4 + $0x148] sm:$0xff]
    %v566 = vld [vmem:[#allocation4 + $0x150] sm:$0xff]
    %v567 = vld [vmem:[#allocation4 + $0x158] sm:$0xff]
    %v568 = vld [vmem:[#allocation4 + $0x160] sm:$0xff]
    %v569 = vld [vmem:[#allocation4 + $0x168] sm:$0xff]
    %v570 = vld [vmem:[#allocation4 + $0x170] sm:$0xff]
    %v571 = vld [vmem:[#allocation4 + $0x178] sm:$0xff]
    %v572 = vld [vmem:[%s8] sm:$0x7]
    %v574 = vlaneseq
    %v575 = vshrl.u32 %v574, 7
    %v576 = vsub.s32 0, %v575
    %v577 = vrot.slane %v572, %v576
    %v578 = vlaneseq
    %v579 = vshrl.u32 %v578, 7
    %v580 = vsub.s32 1, %v579
    %v581 = vrot.slane %v572, %v580
    %v582 = vlaneseq
    %v583 = vshrl.u32 %v582, 7
    %v584 = vsub.s32 2, %v583
    %v585 = vrot.slane %v572, %v584
    %589 = vmatprep.subr.mxu0 %v525
    %590 = vmatpush1.msra.mxu0 %v524
    %591 = vmatprep.subr.mxu0 %v528
    %592 = vmatpush1.msra.mxu0 %v527
    %593 = vmatprep.subr.mxu0 %v531
    %594 = vmatpush1.msra.mxu0 %v530
    %595 = vmatprep.subr.mxu0 %v534
    %596 = vmatpush1.msra.mxu0 %v533
    %597 = vmatprep.subr.mxu0 %v537
    %598 = vmatpush1.msra.mxu0 %v536
    %599 = vmatprep.subr.mxu0 %v540
    %600 = vmatpush1.msra.mxu0 %v539
    %601 = vmatprep.subr.mxu0 %v543
    %602 = vmatpush1.msra.mxu0 %v542
    %603 = vmatprep.subr.mxu0 %v546
    %604 = vmatpush1.msra.mxu0 %v545
    %605 = vmatprep.subr.mxu0 %v549
    %606 = vmatpush1.msra.mxu0 %v548
    %607 = vmatprep.subr.mxu0 %v552
    %608 = vmatpush1.msra.mxu0 %v551
    %609 = vmatprep.subr.mxu0 %v555
    %610 = vmatpush1.msra.mxu0 %v554
    %611 = vmatprep.subr.mxu0 %v558
    %612 = vmatpush1.msra.mxu0 %v557
    %613 = vmatprep.subr.mxu0 %v561
    %614 = vmatpush1.msra.mxu0 %v560
    %615 = vmatprep.subr.mxu0 %v564
    %616 = vmatpush1.msra.mxu0 %v563
    %617 = vmatprep.subr.mxu0 %v567
    %618 = vmatpush1.msra.mxu0 %v566
    %619 = vmatprep.subr.mxu0 %v570
    %620 = vmatpush1.msra.mxu0 %v569
    %621 = vmatprep.subr.mxu0 0.0
    %622 = vmatpush1.msra.mxu0 0.0
    %623 = vmatprep.subr.mxu0 0.0
    %624 = vmatpush1.msra.mxu0 0.0
    %625 = vmatprep.subr.mxu0 0.0
    %626 = vmatpush1.msra.mxu0 0.0
    %627 = vmatprep.subr.mxu0 0.0
    %628 = vmatpush1.msra.mxu0 0.0
    %629 = vmatprep.subr.mxu0 0.0
    %630 = vmatpush1.msra.mxu0 0.0
    %631 = vmatprep.subr.mxu0 0.0
    %632 = vmatpush1.msra.mxu0 0.0
    %633 = vmatprep.subr.mxu0 0.0
    %634 = vmatpush1.msra.mxu0 0.0
    %635 = vmatprep.subr.mxu0 0.0
    %636 = vmatpush1.msra.mxu0 0.0
    %637 = vmatprep.subr.mxu0 0.0
    %638 = vmatpush1.msra.mxu0 0.0
    %639 = vmatprep.subr.mxu0 0.0
    %640 = vmatpush1.msra.mxu0 0.0
    %641 = vmatprep.subr.mxu0 0.0
    %642 = vmatpush1.msra.mxu0 0.0
    %643 = vmatprep.subr.mxu0 0.0
    %644 = vmatpush1.msra.mxu0 0.0
    %645 = vmatprep.subr.mxu0 0.0
    %646 = vmatpush1.msra.mxu0 0.0
    %647 = vmatprep.subr.mxu0 0.0
    %648 = vmatpush1.msra.mxu0 0.0
    %649 = vmatprep.subr.mxu0 0.0
    %650 = vmatpush1.msra.mxu0 0.0
    %651 = vmatprep.subr.mxu0 0.0
    %652 = vmatpush1.msra.mxu0 0.0
    %653 = vmatprep.mubr.f32.mxu0 0.0
    %654 = vmatmul.mubr.f32.gmra.mrb[0].mxu0 0.0
    %v655 = vpop.f32.mrb[0].mxu0
    %v656 = vadd.f32 %v577, %v655
    %v657 = vpop.f32.mrb[0].mxu0
    %v658 = vadd.f32 %v581, %v657
    %659 = vdwg.mxu0
    %660 = vmatprep.subr.mxu0 0.0
    %661 = vmatpush1.msra.mxu0 %v526
    %662 = vmatprep.subr.mxu0 0.0
    %663 = vmatpush1.msra.mxu0 %v529
    %664 = vmatprep.subr.mxu0 0.0
    %665 = vmatpush1.msra.mxu0 %v532
    %666 = vmatprep.subr.mxu0 0.0
    %667 = vmatpush1.msra.mxu0 %v535
    %668 = vmatprep.subr.mxu0 0.0
    %669 = vmatpush1.msra.mxu0 %v538
    %670 = vmatprep.subr.mxu0 0.0
    %671 = vmatpush1.msra.mxu0 %v541
    %672 = vmatprep.subr.mxu0 0.0
    %673 = vmatpush1.msra.mxu0 %v544
    %674 = vmatprep.subr.mxu0 0.0
    %675 = vmatpush1.msra.mxu0 %v547
    %676 = vmatprep.subr.mxu0 0.0
    %677 = vmatpush1.msra.mxu0 %v550
    %678 = vmatprep.subr.mxu0 0.0
    %679 = vmatpush1.msra.mxu0 %v553
    %680 = vmatprep.subr.mxu0 0.0
    %681 = vmatpush1.msra.mxu0 %v556
    %682 = vmatprep.subr.mxu0 0.0
    %683 = vmatpush1.msra.mxu0 %v559
    %684 = vmatprep.subr.mxu0 0.0
    %685 = vmatpush1.msra.mxu0 %v562
    %686 = vmatprep.subr.mxu0 0.0
    %687 = vmatpush1.msra.mxu0 %v565
    %688 = vmatprep.subr.mxu0 0.0
    %689 = vmatpush1.msra.mxu0 %v568
    %690 = vmatprep.subr.mxu0 0.0
    %691 = vmatpush1.msra.mxu0 %v571
    %692 = vmatprep.subr.mxu0 0.0
    %693 = vmatpush1.msra.mxu0 0.0
    %694 = vmatprep.subr.mxu0 0.0
    %695 = vmatpush1.msra.mxu0 0.0
    %696 = vmatprep.subr.mxu0 0.0
    %697 = vmatpush1.msra.mxu0 0.0
    %698 = vmatprep.subr.mxu0 0.0
    %699 = vmatpush1.msra.mxu0 0.0
    %700 = vmatprep.subr.mxu0 0.0
    %701 = vmatpush1.msra.mxu0 0.0
    %702 = vmatprep.subr.mxu0 0.0
    %703 = vmatpush1.msra.mxu0 0.0
    %704 = vmatprep.subr.mxu0 0.0
    %705 = vmatpush1.msra.mxu0 0.0
    %706 = vmatprep.subr.mxu0 0.0
    %707 = vmatpush1.msra.mxu0 0.0
    %708 = vmatprep.subr.mxu0 0.0
    %709 = vmatpush1.msra.mxu0 0.0
    %710 = vmatprep.subr.mxu0 0.0
    %711 = vmatpush1.msra.mxu0 0.0
    %712 = vmatprep.subr.mxu0 0.0
    %713 = vmatpush1.msra.mxu0 0.0
    %714 = vmatprep.subr.mxu0 0.0
    %715 = vmatpush1.msra.mxu0 0.0
    %716 = vmatprep.subr.mxu0 0.0
    %717 = vmatpush1.msra.mxu0 0.0
    %718 = vmatprep.subr.mxu0 0.0
    %719 = vmatpush1.msra.mxu0 0.0
    %720 = vmatprep.subr.mxu0 0.0
    %721 = vmatpush1.msra.mxu0 0.0
    %722 = vmatprep.subr.mxu0 0.0
    %723 = vmatpush1.msra.mxu0 0.0
    %724 = vmatprep.mubr.f32.mxu0 0.0
    %725 = vmatmul.mubr.f32.gmra.mrb[0].mxu0 0.0
    %v726 = vpop.f32.mrb[0].mxu0
    %v727 = vadd.f32 %v585, %v726
    %v728 = vpop.f32.mrb[0].mxu0
    %729 = vdwg.mxu0
    %v730 = vadd.f32 %v521, %v656
    %v731 = vxor.u32 %v730, 2147483648
    %v732 = vmul.f32 %v731, 1.442695
    %v733 = vpow.pop %v732
    %v734 = vadd.f32 %v733, 1.0
    %v735 = vrcp.pop %v734
    %v736 = vmul.f32 1.0, %v735
    %v737 = vadd.f32 %v522, %v658
    %v738 = vxor.u32 %v737, 2147483648
    %v739 = vmul.f32 %v738, 1.442695
    %v740 = vpow.pop %v739
    %v741 = vadd.f32 %v740, 1.0
    %v742 = vrcp.pop %v741
    %v743 = vmul.f32 1.0, %v742
    %v744 = vmul.f32 %v736, %v727
    %v745 = vadd.f32 %v523, %v744
    %v746 = vtanh.pop %v745
    %v747 = vsub.f32 1.0, %v743
    %v748 = vmul.f32 %v747, %v746
    %v749 = vmul.f32 %v743, 0.0
    %v750 = vadd.f32 %v748, %v749
    %751 = vst [vmem:[#allocation3] sm:$0x3] %v750
    %v752 = vld [vmem:[#allocation2] sm:$0xc]
    %v753 = vld [vmem:[#allocation2 + $0x8] sm:$0xc]
    %v754 = vld [vmem:[#allocation2 + $0x10] sm:$0xc]
    %v755 = vld [vmem:[#allocation4] sm:$0xff]
    %v756 = vld [vmem:[#allocation4 + $0x8] sm:$0xff]
    %v757 = vld [vmem:[#allocation4 + $0x10] sm:$0xff]
    %v758 = vld [vmem:[#allocation4 + $0x18] sm:$0xff]
    %v759 = vld [vmem:[#allocation4 + $0x20] sm:$0xff]
    %v760 = vld [vmem:[#allocation4 + $0x28] sm:$0xff]
    %v761 = vld [vmem:[#allocation4 + $0x30] sm:$0xff]
    %v762 = vld [vmem:[#allocation4 + $0x38] sm:$0xff]
    %v763 = vld [vmem:[#allocation4 + $0x40] sm:$0xff]
    %v764 = vld [vmem:[#allocation4 + $0x48] sm:$0xff]
    %v765 = vld [vmem:[#allocation4 + $0x50] sm:$0xff]
    %v766 = vld [vmem:[#allocation4 + $0x58] sm:$0xff]
    %v767 = vld [vmem:[#allocation4 + $0x60] sm:$0xff]
    %v768 = vld [vmem:[#allocation4 + $0x68] sm:$0xff]
    %v769 = vld [vmem:[#allocation4 + $0x70] sm:$0xff]
    %v770 = vld [vmem:[#allocation4 + $0x78] sm:$0xff]
    %v771 = vld [vmem:[#allocation4 + $0x80] sm:$0xff]
    %v772 = vld [vmem:[#allocation4 + $0x88] sm:$0xff]
    %v773 = vld [vmem:[#allocation4 + $0x90] sm:$0xff]
    %v774 = vld [vmem:[#allocation4 + $0x98] sm:$0xff]
    %v775 = vld [vmem:[#allocation4 + $0xa0] sm:$0xff]
    %v776 = vld [vmem:[#allocation4 + $0xa8] sm:$0xff]
    %v777 = vld [vmem:[#allocation4 + $0xb0] sm:$0xff]
    %v778 = vld [vmem:[#allocation4 + $0xb8] sm:$0xff]
    %v779 = vld [vmem:[#allocation4 + $0xc0] sm:$0xff]
    %v780 = vld [vmem:[#allocation4 + $0xc8] sm:$0xff]
    %v781 = vld [vmem:[#allocation4 + $0xd0] sm:$0xff]
    %v782 = vld [vmem:[#allocation4 + $0xd8] sm:$0xff]
    %v783 = vld [vmem:[#allocation4 + $0xe0] sm:$0xff]
    %v784 = vld [vmem:[#allocation4 + $0xe8] sm:$0xff]
    %v785 = vld [vmem:[#allocation4 + $0xf0] sm:$0xff]
    %v786 = vld [vmem:[#allocation4 + $0xf8] sm:$0xff]
    %v787 = vld [vmem:[#allocation4 + $0x100] sm:$0xff]
    %v788 = vld [vmem:[#allocation4 + $0x108] sm:$0xff]
    %v789 = vld [vmem:[#allocation4 + $0x110] sm:$0xff]
    %v790 = vld [vmem:[#allocation4 + $0x118] sm:$0xff]
    %v791 = vld [vmem:[#allocation4 + $0x120] sm:$0xff]
    %v792 = vld [vmem:[#allocation4 + $0x128] sm:$0xff]
    %v793 = vld [vmem:[#allocation4 + $0x130] sm:$0xff]
    %v794 = vld [vmem:[#allocation4 + $0x138] sm:$0xff]
    %v795 = vld [vmem:[#allocation4 + $0x140] sm:$0xff]
    %v796 = vld [vmem:[#allocation4 + $0x148] sm:$0xff]
    %v797 = vld [vmem:[#allocation4 + $0x150] sm:$0xff]
    %v798 = vld [vmem:[#allocation4 + $0x158] sm:$0xff]
    %v799 = vld [vmem:[#allocation4 + $0x160] sm:$0xff]
    %v800 = vld [vmem:[#allocation4 + $0x168] sm:$0xff]
    %v801 = vld [vmem:[#allocation4 + $0x170] sm:$0xff]
    %v802 = vld [vmem:[#allocation4 + $0x178] sm:$0xff]
    %v803 = vld [vmem:[%s8] sm:$0x7]
    %v805 = vlaneseq
    %v806 = vshrl.u32 %v805, 7
    %v807 = vsub.s32 0, %v806
    %v808 = vrot.slane %v803, %v807
    %v809 = vlaneseq
    %v810 = vshrl.u32 %v809, 7
    %v811 = vsub.s32 1, %v810
    %v812 = vrot.slane %v803, %v811
    %v813 = vlaneseq
    %v814 = vshrl.u32 %v813, 7
    %v815 = vsub.s32 2, %v814
    %v816 = vrot.slane %v803, %v815
    %820 = vmatprep.subr.mxu0 %v756
    %821 = vmatpush1.msra.mxu0 %v755
    %822 = vmatprep.subr.mxu0 %v759
    %823 = vmatpush1.msra.mxu0 %v758
    %824 = vmatprep.subr.mxu0 %v762
    %825 = vmatpush1.msra.mxu0 %v761
    %826 = vmatprep.subr.mxu0 %v765
    %827 = vmatpush1.msra.mxu0 %v764
    %828 = vmatprep.subr.mxu0 %v768
    %829 = vmatpush1.msra.mxu0 %v767
    %830 = vmatprep.subr.mxu0 %v771
    %831 = vmatpush1.msra.mxu0 %v770
    %832 = vmatprep.subr.mxu0 %v774
    %833 = vmatpush1.msra.mxu0 %v773
    %834 = vmatprep.subr.mxu0 %v777
    %835 = vmatpush1.msra.mxu0 %v776
    %836 = vmatprep.subr.mxu0 %v780
    %837 = vmatpush1.msra.mxu0 %v779
    %838 = vmatprep.subr.mxu0 %v783
    %839 = vmatpush1.msra.mxu0 %v782
    %840 = vmatprep.subr.mxu0 %v786
    %841 = vmatpush1.msra.mxu0 %v785
    %842 = vmatprep.subr.mxu0 %v789
    %843 = vmatpush1.msra.mxu0 %v788
    %844 = vmatprep.subr.mxu0 %v792
    %845 = vmatpush1.msra.mxu0 %v791
    %846 = vmatprep.subr.mxu0 %v795
    %847 = vmatpush1.msra.mxu0 %v794
    %848 = vmatprep.subr.mxu0 %v798
    %849 = vmatpush1.msra.mxu0 %v797
    %850 = vmatprep.subr.mxu0 %v801
    %851 = vmatpush1.msra.mxu0 %v800
    %852 = vmatprep.subr.mxu0 0.0
    %853 = vmatpush1.msra.mxu0 0.0
    %854 = vmatprep.subr.mxu0 0.0
    %855 = vmatpush1.msra.mxu0 0.0
    %856 = vmatprep.subr.mxu0 0.0
    %857 = vmatpush1.msra.mxu0 0.0
    %858 = vmatprep.subr.mxu0 0.0
    %859 = vmatpush1.msra.mxu0 0.0
    %860 = vmatprep.subr.mxu0 0.0
    %861 = vmatpush1.msra.mxu0 0.0
    %862 = vmatprep.subr.mxu0 0.0
    %863 = vmatpush1.msra.mxu0 0.0
    %864 = vmatprep.subr.mxu0 0.0
    %865 = vmatpush1.msra.mxu0 0.0
    %866 = vmatprep.subr.mxu0 0.0
    %867 = vmatpush1.msra.mxu0 0.0
    %868 = vmatprep.subr.mxu0 0.0
    %869 = vmatpush1.msra.mxu0 0.0
    %870 = vmatprep.subr.mxu0 0.0
    %871 = vmatpush1.msra.mxu0 0.0
    %872 = vmatprep.subr.mxu0 0.0
    %873 = vmatpush1.msra.mxu0 0.0
    %874 = vmatprep.subr.mxu0 0.0
    %875 = vmatpush1.msra.mxu0 0.0
    %876 = vmatprep.subr.mxu0 0.0
    %877 = vmatpush1.msra.mxu0 0.0
    %878 = vmatprep.subr.mxu0 0.0
    %879 = vmatpush1.msra.mxu0 0.0
    %880 = vmatprep.subr.mxu0 0.0
    %881 = vmatpush1.msra.mxu0 0.0
    %882 = vmatprep.subr.mxu0 0.0
    %883 = vmatpush1.msra.mxu0 0.0
    %884 = vmatprep.mubr.f32.mxu0 0.0
    %885 = vmatmul.mubr.f32.gmra.mrb[0].mxu0 %v750
    %v886 = vpop.f32.mrb[0].mxu0
    %v887 = vadd.f32 %v808, %v886
    %v888 = vpop.f32.mrb[0].mxu0
    %v889 = vadd.f32 %v812, %v888
    %890 = vdwg.mxu0
    %891 = vmatprep.subr.mxu0 0.0
    %892 = vmatpush1.msra.mxu0 %v757
    %893 = vmatprep.subr.mxu0 0.0
    %894 = vmatpush1.msra.mxu0 %v760
    %895 = vmatprep.subr.mxu0 0.0
    %896 = vmatpush1.msra.mxu0 %v763
    %897 = vmatprep.subr.mxu0 0.0
    %898 = vmatpush1.msra.mxu0 %v766
    %899 = vmatprep.subr.mxu0 0.0
    %900 = vmatpush1.msra.mxu0 %v769
    %901 = vmatprep.subr.mxu0 0.0
    %902 = vmatpush1.msra.mxu0 %v772
    %903 = vmatprep.subr.mxu0 0.0
    %904 = vmatpush1.msra.mxu0 %v775
    %905 = vmatprep.subr.mxu0 0.0
    %906 = vmatpush1.msra.mxu0 %v778
    %907 = vmatprep.subr.mxu0 0.0
    %908 = vmatpush1.msra.mxu0 %v781
    %909 = vmatprep.subr.mxu0 0.0
    %910 = vmatpush1.msra.mxu0 %v784
    %911 = vmatprep.subr.mxu0 0.0
    %912 = vmatpush1.msra.mxu0 %v787
    %913 = vmatprep.subr.mxu0 0.0
    %914 = vmatpush1.msra.mxu0 %v790
    %915 = vmatprep.subr.mxu0 0.0
    %916 = vmatpush1.msra.mxu0 %v793
    %917 = vmatprep.subr.mxu0 0.0
    %918 = vmatpush1.msra.mxu0 %v796
    %919 = vmatprep.subr.mxu0 0.0
    %920 = vmatpush1.msra.mxu0 %v799
    %921 = vmatprep.subr.mxu0 0.0
    %922 = vmatpush1.msra.mxu0 %v802
    %923 = vmatprep.subr.mxu0 0.0
    %924 = vmatpush1.msra.mxu0 0.0
    %925 = vmatprep.subr.mxu0 0.0
    %926 = vmatpush1.msra.mxu0 0.0
    %927 = vmatprep.subr.mxu0 0.0
    %928 = vmatpush1.msra.mxu0 0.0
    %929 = vmatprep.subr.mxu0 0.0
    %930 = vmatpush1.msra.mxu0 0.0
    %931 = vmatprep.subr.mxu0 0.0
    %932 = vmatpush1.msra.mxu0 0.0
    %933 = vmatprep.subr.mxu0 0.0
    %934 = vmatpush1.msra.mxu0 0.0
    %935 = vmatprep.subr.mxu0 0.0
    %936 = vmatpush1.msra.mxu0 0.0
    %937 = vmatprep.subr.mxu0 0.0
    %938 = vmatpush1.msra.mxu0 0.0
    %939 = vmatprep.subr.mxu0 0.0
    %940 = vmatpush1.msra.mxu0 0.0
    %941 = vmatprep.subr.mxu0 0.0
    %942 = vmatpush1.msra.mxu0 0.0
    %943 = vmatprep.subr.mxu0 0.0
    %944 = vmatpush1.msra.mxu0 0.0
    %945 = vmatprep.subr.mxu0 0.0
    %946 = vmatpush1.msra.mxu0 0.0
    %947 = vmatprep.subr.mxu0 0.0
    %948 = vmatpush1.msra.mxu0 0.0
    %949 = vmatprep.subr.mxu0 0.0
    %950 = vmatpush1.msra.mxu0 0.0
    %951 = vmatprep.subr.mxu0 0.0
    %952 = vmatpush1.msra.mxu0 0.0
    %953 = vmatprep.subr.mxu0 0.0
    %954 = vmatpush1.msra.mxu0 0.0
    %955 = vmatprep.mubr.f32.mxu0 0.0
    %956 = vmatmul.mubr.f32.gmra.mrb[0].mxu0 %v750
    %v957 = vpop.f32.mrb[0].mxu0
    %v958 = vadd.f32 %v816, %v957
    %v959 = vpop.f32.mrb[0].mxu0
    %960 = vdwg.mxu0
    %v962 = vrot.slane %v887, 6
    %v964 = vadd.f32 %v752, %v962
    %v965 = vxor.u32 %v964, 2147483648
    %v966 = vmul.f32 %v965, 1.442695
    %v967 = vpow.pop %v966
    %v968 = vadd.f32 %v967, 1.0
    %v969 = vrcp.pop %v968
    %v970 = vmul.f32 1.0, %v969
    %v972 = vrot.slane %v889, 6
    %v974 = vadd.f32 %v753, %v972
    %v975 = vxor.u32 %v974, 2147483648
    %v976 = vmul.f32 %v975, 1.442695
    %v977 = vpow.pop %v976
    %v978 = vadd.f32 %v977, 1.0
    %v979 = vrcp.pop %v978
    %v980 = vmul.f32 1.0, %v979
    %v982 = vrot.slane %v958, 6
    %v984 = vmul.f32 %v970, %v982
    %v985 = vadd.f32 %v754, %v984
    %v986 = vtanh.pop %v985
    %v987 = vsub.f32 1.0, %v980
    %v988 = vmul.f32 %v987, %v986
    %v990 = vrot.slane %v750, 6
    %v992 = vmul.f32 %v980, %v990
    %v993 = vadd.f32 %v988, %v992
    %994 = vst [vmem:[#allocation3] sm:$0xc] %v993
    %v995 = vld [vmem:[#allocation2] sm:$0x30]
    %v996 = vld [vmem:[#allocation2 + $0x8] sm:$0x30]
    %v997 = vld [vmem:[#allocation2 + $0x10] sm:$0x30]
    %v998 = vld [vmem:[#allocation4] sm:$0xff]
    %v999 = vld [vmem:[#allocation4 + $0x8] sm:$0xff]
    %v1000 = vld [vmem:[#allocation4 + $0x10] sm:$0xff]
    %v1001 = vld [vmem:[#allocation4 + $0x18] sm:$0xff]
    %v1002 = vld [vmem:[#allocation4 + $0x20] sm:$0xff]
    %v1003 = vld [vmem:[#allocation4 + $0x28] sm:$0xff]
    %v1004 = vld [vmem:[#allocation4 + $0x30] sm:$0xff]
    %v1005 = vld [vmem:[#allocation4 + $0x38] sm:$0xff]
    %v1006 = vld [vmem:[#allocation4 + $0x40] sm:$0xff]
    %v1007 = vld [vmem:[#allocation4 + $0x48] sm:$0xff]
    %v1008 = vld [vmem:[#allocation4 + $0x50] sm:$0xff]
    %v1009 = vld [vmem:[#allocation4 + $0x58] sm:$0xff]
    %v1010 = vld [vmem:[#allocation4 + $0x60] sm:$0xff]
    %v1011 = vld [vmem:[#allocation4 + $0x68] sm:$0xff]
    %v1012 = vld [vmem:[#allocation4 + $0x70] sm:$0xff]
    %v1013 = vld [vmem:[#allocation4 + $0x78] sm:$0xff]
    %v1014 = vld [vmem:[#allocation4 + $0x80] sm:$0xff]
    %v1015 = vld [vmem:[#allocation4 + $0x88] sm:$0xff]
    %v1016 = vld [vmem:[#allocation4 + $0x90] sm:$0xff]
    %v1017 = vld [vmem:[#allocation4 + $0x98] sm:$0xff]
    %v1018 = vld [vmem:[#allocation4 + $0xa0] sm:$0xff]
    %v1019 = vld [vmem:[#allocation4 + $0xa8] sm:$0xff]
    %v1020 = vld [vmem:[#allocation4 + $0xb0] sm:$0xff]
    %v1021 = vld [vmem:[#allocation4 + $0xb8] sm:$0xff]
    %v1022 = vld [vmem:[#allocation4 + $0xc0] sm:$0xff]
    %v1023 = vld [vmem:[#allocation4 + $0xc8] sm:$0xff]
    %v1024 = vld [vmem:[#allocation4 + $0xd0] sm:$0xff]
    %v1025 = vld [vmem:[#allocation4 + $0xd8] sm:$0xff]
    %v1026 = vld [vmem:[#allocation4 + $0xe0] sm:$0xff]
    %v1027 = vld [vmem:[#allocation4 + $0xe8] sm:$0xff]
    %v1028 = vld [vmem:[#allocation4 + $0xf0] sm:$0xff]
    %v1029 = vld [vmem:[#allocation4 + $0xf8] sm:$0xff]
    %v1030 = vld [vmem:[#allocation4 + $0x100] sm:$0xff]
    %v1031 = vld [vmem:[#allocation4 + $0x108] sm:$0xff]
    %v1032 = vld [vmem:[#allocation4 + $0x110] sm:$0xff]
    %v1033 = vld [vmem:[#allocation4 + $0x118] sm:$0xff]
    %v1034 = vld [vmem:[#allocation4 + $0x120] sm:$0xff]
    %v1035 = vld [vmem:[#allocation4 + $0x128] sm:$0xff]
    %v1036 = vld [vmem:[#allocation4 + $0x130] sm:$0xff]
    %v1037 = vld [vmem:[#allocation4 + $0x138] sm:$0xff]
    %v1038 = vld [vmem:[#allocation4 + $0x140] sm:$0xff]
    %v1039 = vld [vmem:[#allocation4 + $0x148] sm:$0xff]
    %v1040 = vld [vmem:[#allocation4 + $0x150] sm:$0xff]
    %v1041 = vld [vmem:[#allocation4 + $0x158] sm:$0xff]
    %v1042 = vld [vmem:[#allocation4 + $0x160] sm:$0xff]
    %v1043 = vld [vmem:[#allocation4 + $0x168] sm:$0xff]
    %v1044 = vld [vmem:[#allocation4 + $0x170] sm:$0xff]
    %v1045 = vld [vmem:[#allocation4 + $0x178] sm:$0xff]
    %v1046 = vld [vmem:[%s8] sm:$0x7]
    %v1048 = vlaneseq
    %v1049 = vshrl.u32 %v1048, 7
    %v1050 = vsub.s32 0, %v1049
    %v1051 = vrot.slane %v1046, %v1050
    %v1052 = vlaneseq
    %v1053 = vshrl.u32 %v1052, 7
    %v1054 = vsub.s32 1, %v1053
    %v1055 = vrot.slane %v1046, %v1054
    %v1056 = vlaneseq
    %v1057 = vshrl.u32 %v1056, 7
    %v1058 = vsub.s32 2, %v1057
    %v1059 = vrot.slane %v1046, %v1058
    %v1064 = vrot.slane %v993, 2
    %1066 = vmatprep.subr.mxu0 %v999
    %1067 = vmatpush1.msra.mxu0 %v998
    %1068 = vmatprep.subr.mxu0 %v1002
    %1069 = vmatpush1.msra.mxu0 %v1001
    %1070 = vmatprep.subr.mxu0 %v1005
    %1071 = vmatpush1.msra.mxu0 %v1004
    %1072 = vmatprep.subr.mxu0 %v1008
    %1073 = vmatpush1.msra.mxu0 %v1007
    %1074 = vmatprep.subr.mxu0 %v1011
    %1075 = vmatpush1.msra.mxu0 %v1010
    %1076 = vmatprep.subr.mxu0 %v1014
    %1077 = vmatpush1.msra.mxu0 %v1013
    %1078 = vmatprep.subr.mxu0 %v1017
    %1079 = vmatpush1.msra.mxu0 %v1016
    %1080 = vmatprep.subr.mxu0 %v1020
    %1081 = vmatpush1.msra.mxu0 %v1019
    %1082 = vmatprep.subr.mxu0 %v1023
    %1083 = vmatpush1.msra.mxu0 %v1022
    %1084 = vmatprep.subr.mxu0 %v1026
    %1085 = vmatpush1.msra.mxu0 %v1025
    %1086 = vmatprep.subr.mxu0 %v1029
    %1087 = vmatpush1.msra.mxu0 %v1028
    %1088 = vmatprep.subr.mxu0 %v1032
    %1089 = vmatpush1.msra.mxu0 %v1031
    %1090 = vmatprep.subr.mxu0 %v1035
    %1091 = vmatpush1.msra.mxu0 %v1034
    %1092 = vmatprep.subr.mxu0 %v1038
    %1093 = vmatpush1.msra.mxu0 %v1037
    %1094 = vmatprep.subr.mxu0 %v1041
    %1095 = vmatpush1.msra.mxu0 %v1040
    %1096 = vmatprep.subr.mxu0 %v1044
    %1097 = vmatpush1.msra.mxu0 %v1043
    %1098 = vmatprep.subr.mxu0 0.0
    %1099 = vmatpush1.msra.mxu0 0.0
    %1100 = vmatprep.subr.mxu0 0.0
    %1101 = vmatpush1.msra.mxu0 0.0
    %1102 = vmatprep.subr.mxu0 0.0
    %1103 = vmatpush1.msra.mxu0 0.0
    %1104 = vmatprep.subr.mxu0 0.0
    %1105 = vmatpush1.msra.mxu0 0.0
    %1106 = vmatprep.subr.mxu0 0.0
    %1107 = vmatpush1.msra.mxu0 0.0
    %1108 = vmatprep.subr.mxu0 0.0
    %1109 = vmatpush1.msra.mxu0 0.0
    %1110 = vmatprep.subr.mxu0 0.0
    %1111 = vmatpush1.msra.mxu0 0.0
    %1112 = vmatprep.subr.mxu0 0.0
    %1113 = vmatpush1.msra.mxu0 0.0
    %1114 = vmatprep.subr.mxu0 0.0
    %1115 = vmatpush1.msra.mxu0 0.0
    %1116 = vmatprep.subr.mxu0 0.0
    %1117 = vmatpush1.msra.mxu0 0.0
    %1118 = vmatprep.subr.mxu0 0.0
    %1119 = vmatpush1.msra.mxu0 0.0
    %1120 = vmatprep.subr.mxu0 0.0
    %1121 = vmatpush1.msra.mxu0 0.0
    %1122 = vmatprep.subr.mxu0 0.0
    %1123 = vmatpush1.msra.mxu0 0.0
    %1124 = vmatprep.subr.mxu0 0.0
    %1125 = vmatpush1.msra.mxu0 0.0
    %1126 = vmatprep.subr.mxu0 0.0
    %1127 = vmatpush1.msra.mxu0 0.0
    %1128 = vmatprep.subr.mxu0 0.0
    %1129 = vmatpush1.msra.mxu0 0.0
    %1130 = vmatprep.mubr.f32.mxu0 0.0
    %1131 = vmatmul.mubr.f32.gmra.mrb[0].mxu0 %v1064
    %v1132 = vpop.f32.mrb[0].mxu0
    %v1133 = vadd.f32 %v1051, %v1132
    %v1134 = vpop.f32.mrb[0].mxu0
    %v1135 = vadd.f32 %v1055, %v1134
    %1136 = vdwg.mxu0
    %1137 = vmatprep.subr.mxu0 0.0
    %1138 = vmatpush1.msra.mxu0 %v1000
    %1139 = vmatprep.subr.mxu0 0.0
    %1140 = vmatpush1.msra.mxu0 %v1003
    %1141 = vmatprep.subr.mxu0 0.0
    %1142 = vmatpush1.msra.mxu0 %v1006
    %1143 = vmatprep.subr.mxu0 0.0
    %1144 = vmatpush1.msra.mxu0 %v1009
    %1145 = vmatprep.subr.mxu0 0.0
    %1146 = vmatpush1.msra.mxu0 %v1012
    %1147 = vmatprep.subr.mxu0 0.0
    %1148 = vmatpush1.msra.mxu0 %v1015
    %1149 = vmatprep.subr.mxu0 0.0
    %1150 = vmatpush1.msra.mxu0 %v1018
    %1151 = vmatprep.subr.mxu0 0.0
    %1152 = vmatpush1.msra.mxu0 %v1021
    %1153 = vmatprep.subr.mxu0 0.0
    %1154 = vmatpush1.msra.mxu0 %v1024
    %1155 = vmatprep.subr.mxu0 0.0
    %1156 = vmatpush1.msra.mxu0 %v1027
    %1157 = vmatprep.subr.mxu0 0.0
    %1158 = vmatpush1.msra.mxu0 %v1030
    %1159 = vmatprep.subr.mxu0 0.0
    %1160 = vmatpush1.msra.mxu0 %v1033
    %1161 = vmatprep.subr.mxu0 0.0
    %1162 = vmatpush1.msra.mxu0 %v1036
    %1163 = vmatprep.subr.mxu0 0.0
    %1164 = vmatpush1.msra.mxu0 %v1039
    %1165 = vmatprep.subr.mxu0 0.0
    %1166 = vmatpush1.msra.mxu0 %v1042
    %1167 = vmatprep.subr.mxu0 0.0
    %1168 = vmatpush1.msra.mxu0 %v1045
    %1169 = vmatprep.subr.mxu0 0.0
    %1170 = vmatpush1.msra.mxu0 0.0
    %1171 = vmatprep.subr.mxu0 0.0
    %1172 = vmatpush1.msra.mxu0 0.0
    %1173 = vmatprep.subr.mxu0 0.0
    %1174 = vmatpush1.msra.mxu0 0.0
    %1175 = vmatprep.subr.mxu0 0.0
    %1176 = vmatpush1.msra.mxu0 0.0
    %1177 = vmatprep.subr.mxu0 0.0
    %1178 = vmatpush1.msra.mxu0 0.0
    %1179 = vmatprep.subr.mxu0 0.0
    %1180 = vmatpush1.msra.mxu0 0.0
    %1181 = vmatprep.subr.mxu0 0.0
    %1182 = vmatpush1.msra.mxu0 0.0
    %1183 = vmatprep.subr.mxu0 0.0
    %1184 = vmatpush1.msra.mxu0 0.0
    %1185 = vmatprep.subr.mxu0 0.0
    %1186 = vmatpush1.msra.mxu0 0.0
    %1187 = vmatprep.subr.mxu0 0.0
    %1188 = vmatpush1.msra.mxu0 0.0
    %1189 = vmatprep.subr.mxu0 0.0
    %1190 = vmatpush1.msra.mxu0 0.0
    %1191 = vmatprep.subr.mxu0 0.0
    %1192 = vmatpush1.msra.mxu0 0.0
    %1193 = vmatprep.subr.mxu0 0.0
    %1194 = vmatpush1.msra.mxu0 0.0
    %1195 = vmatprep.subr.mxu0 0.0
    %1196 = vmatpush1.msra.mxu0 0.0
    %1197 = vmatprep.subr.mxu0 0.0
    %1198 = vmatpush1.msra.mxu0 0.0
    %1199 = vmatprep.subr.mxu0 0.0
    %1200 = vmatpush1.msra.mxu0 0.0
    %1201 = vmatprep.mubr.f32.mxu0 0.0
    %1202 = vmatmul.mubr.f32.gmra.mrb[0].mxu0 %v1064
    %v1203 = vpop.f32.mrb[0].mxu0
    %v1204 = vadd.f32 %v1059, %v1203
    %v1205 = vpop.f32.mrb[0].mxu0
    %1206 = vdwg.mxu0
    %v1208 = vrot.slane %v1133, 4
    %v1210 = vadd.f32 %v995, %v1208
    %v1211 = vxor.u32 %v1210, 2147483648
    %v1212 = vmul.f32 %v1211, 1.442695
    %v1213 = vpow.pop %v1212
    %v1214 = vadd.f32 %v1213, 1.0
    %v1215 = vrcp.pop %v1214
    %v1216 = vmul.f32 1.0, %v1215
    %v1218 = vrot.slane %v1135, 4
    %v1220 = vadd.f32 %v996, %v1218
    %v1221 = vxor.u32 %v1220, 2147483648
    %v1222 = vmul.f32 %v1221, 1.442695
    %v1223 = vpow.pop %v1222
    %v1224 = vadd.f32 %v1223, 1.0
    %v1225 = vrcp.pop %v1224
    %v1226 = vmul.f32 1.0, %v1225
    %v1228 = vrot.slane %v1204, 4
    %v1230 = vmul.f32 %v1216, %v1228
    %v1231 = vadd.f32 %v997, %v1230
    %v1232 = vtanh.pop %v1231
    %v1233 = vsub.f32 1.0, %v1226
    %v1234 = vmul.f32 %v1233, %v1232
    %v1235 = vrot.slane %v993, 6
    %v1237 = vmul.f32 %v1226, %v1235
    %v1238 = vadd.f32 %v1234, %v1237
    %1239 = vst [vmem:[#allocation3] sm:$0x30] %v1238
    %v1240 = vld [vmem:[#allocation2] sm:$0xc0]
    %v1241 = vld [vmem:[#allocation2 + $0x8] sm:$0xc0]
    %v1242 = vld [vmem:[#allocation2 + $0x10] sm:$0xc0]
    %v1243 = vld [vmem:[#allocation4] sm:$0xff]
    %v1244 = vld [vmem:[#allocation4 + $0x8] sm:$0xff]
    %v1245 = vld [vmem:[#allocation4 + $0x10] sm:$0xff]
    %v1246 = vld [vmem:[#allocation4 + $0x18] sm:$0xff]
    %v1247 = vld [vmem:[#allocation4 + $0x20] sm:$0xff]
    %v1248 = vld [vmem:[#allocation4 + $0x28] sm:$0xff]
    %v1249 = vld [vmem:[#allocation4 + $0x30] sm:$0xff]
    %v1250 = vld [vmem:[#allocation4 + $0x38] sm:$0xff]
    %v1251 = vld [vmem:[#allocation4 + $0x40] sm:$0xff]
    %v1252 = vld [vmem:[#allocation4 + $0x48] sm:$0xff]
    %v1253 = vld [vmem:[#allocation4 + $0x50] sm:$0xff]
    %v1254 = vld [vmem:[#allocation4 + $0x58] sm:$0xff]
    %v1255 = vld [vmem:[#allocation4 + $0x60] sm:$0xff]
    %v1256 = vld [vmem:[#allocation4 + $0x68] sm:$0xff]
    %v1257 = vld [vmem:[#allocation4 + $0x70] sm:$0xff]
    %v1258 = vld [vmem:[#allocation4 + $0x78] sm:$0xff]
    %v1259 = vld [vmem:[#allocation4 + $0x80] sm:$0xff]
    %v1260 = vld [vmem:[#allocation4 + $0x88] sm:$0xff]
    %v1261 = vld [vmem:[#allocation4 + $0x90] sm:$0xff]
    %v1262 = vld [vmem:[#allocation4 + $0x98] sm:$0xff]
    %v1263 = vld [vmem:[#allocation4 + $0xa0] sm:$0xff]
    %v1264 = vld [vmem:[#allocation4 + $0xa8] sm:$0xff]
    %v1265 = vld [vmem:[#allocation4 + $0xb0] sm:$0xff]
    %v1266 = vld [vmem:[#allocation4 + $0xb8] sm:$0xff]
    %v1267 = vld [vmem:[#allocation4 + $0xc0] sm:$0xff]
    %v1268 = vld [vmem:[#allocation4 + $0xc8] sm:$0xff]
    %v1269 = vld [vmem:[#allocation4 + $0xd0] sm:$0xff]
    %v1270 = vld [vmem:[#allocation4 + $0xd8] sm:$0xff]
    %v1271 = vld [vmem:[#allocation4 + $0xe0] sm:$0xff]
    %v1272 = vld [vmem:[#allocation4 + $0xe8] sm:$0xff]
    %v1273 = vld [vmem:[#allocation4 + $0xf0] sm:$0xff]
    %v1274 = vld [vmem:[#allocation4 + $0xf8] sm:$0xff]
    %v1275 = vld [vmem:[#allocation4 + $0x100] sm:$0xff]
    %v1276 = vld [vmem:[#allocation4 + $0x108] sm:$0xff]
    %v1277 = vld [vmem:[#allocation4 + $0x110] sm:$0xff]
    %v1278 = vld [vmem:[#allocation4 + $0x118] sm:$0xff]
    %v1279 = vld [vmem:[#allocation4 + $0x120] sm:$0xff]
    %v1280 = vld [vmem:[#allocation4 + $0x128] sm:$0xff]
    %v1281 = vld [vmem:[#allocation4 + $0x130] sm:$0xff]
    %v1282 = vld [vmem:[#allocation4 + $0x138] sm:$0xff]
    %v1283 = vld [vmem:[#allocation4 + $0x140] sm:$0xff]
    %v1284 = vld [vmem:[#allocation4 + $0x148] sm:$0xff]
    %v1285 = vld [vmem:[#allocation4 + $0x150] sm:$0xff]
    %v1286 = vld [vmem:[#allocation4 + $0x158] sm:$0xff]
    %v1287 = vld [vmem:[#allocation4 + $0x160] sm:$0xff]
    %v1288 = vld [vmem:[#allocation4 + $0x168] sm:$0xff]
    %v1289 = vld [vmem:[#allocation4 + $0x170] sm:$0xff]
    %v1290 = vld [vmem:[#allocation4 + $0x178] sm:$0xff]
    %v1291 = vld [vmem:[%s8] sm:$0x7]
    %v1293 = vlaneseq
    %v1294 = vshrl.u32 %v1293, 7
    %v1295 = vsub.s32 0, %v1294
    %v1296 = vrot.slane %v1291, %v1295
    %v1297 = vlaneseq
    %v1298 = vshrl.u32 %v1297, 7
    %v1299 = vsub.s32 1, %v1298
    %v1300 = vrot.slane %v1291, %v1299
    %v1301 = vlaneseq
    %v1302 = vshrl.u32 %v1301, 7
    %v1303 = vsub.s32 2, %v1302
    %v1304 = vrot.slane %v1291, %v1303
    %v1309 = vrot.slane %v1238, 4
    %1311 = vmatprep.subr.mxu0 %v1244
    %1312 = vmatpush1.msra.mxu0 %v1243
    %1313 = vmatprep.subr.mxu0 %v1247
    %1314 = vmatpush1.msra.mxu0 %v1246
    %1315 = vmatprep.subr.mxu0 %v1250
    %1316 = vmatpush1.msra.mxu0 %v1249
    %1317 = vmatprep.subr.mxu0 %v1253
    %1318 = vmatpush1.msra.mxu0 %v1252
    %1319 = vmatprep.subr.mxu0 %v1256
    %1320 = vmatpush1.msra.mxu0 %v1255
    %1321 = vmatprep.subr.mxu0 %v1259
    %1322 = vmatpush1.msra.mxu0 %v1258
    %1323 = vmatprep.subr.mxu0 %v1262
    %1324 = vmatpush1.msra.mxu0 %v1261
    %1325 = vmatprep.subr.mxu0 %v1265
    %1326 = vmatpush1.msra.mxu0 %v1264
    %1327 = vmatprep.subr.mxu0 %v1268
    %1328 = vmatpush1.msra.mxu0 %v1267
    %1329 = vmatprep.subr.mxu0 %v1271
    %1330 = vmatpush1.msra.mxu0 %v1270
    %1331 = vmatprep.subr.mxu0 %v1274
    %1332 = vmatpush1.msra.mxu0 %v1273
    %1333 = vmatprep.subr.mxu0 %v1277
    %1334 = vmatpush1.msra.mxu0 %v1276
    %1335 = vmatprep.subr.mxu0 %v1280
    %1336 = vmatpush1.msra.mxu0 %v1279
    %1337 = vmatprep.subr.mxu0 %v1283
    %1338 = vmatpush1.msra.mxu0 %v1282
    %1339 = vmatprep.subr.mxu0 %v1286
    %1340 = vmatpush1.msra.mxu0 %v1285
    %1341 = vmatprep.subr.mxu0 %v1289
    %1342 = vmatpush1.msra.mxu0 %v1288
    %1343 = vmatprep.subr.mxu0 0.0
    %1344 = vmatpush1.msra.mxu0 0.0
    %1345 = vmatprep.subr.mxu0 0.0
    %1346 = vmatpush1.msra.mxu0 0.0
    %1347 = vmatprep.subr.mxu0 0.0
    %1348 = vmatpush1.msra.mxu0 0.0
    %1349 = vmatprep.subr.mxu0 0.0
    %1350 = vmatpush1.msra.mxu0 0.0
    %1351 = vmatprep.subr.mxu0 0.0
    %1352 = vmatpush1.msra.mxu0 0.0
    %1353 = vmatprep.subr.mxu0 0.0
    %1354 = vmatpush1.msra.mxu0 0.0
    %1355 = vmatprep.subr.mxu0 0.0
    %1356 = vmatpush1.msra.mxu0 0.0
    %1357 = vmatprep.subr.mxu0 0.0
    %1358 = vmatpush1.msra.mxu0 0.0
    %1359 = vmatprep.subr.mxu0 0.0
    %1360 = vmatpush1.msra.mxu0 0.0
    %1361 = vmatprep.subr.mxu0 0.0
    %1362 = vmatpush1.msra.mxu0 0.0
    %1363 = vmatprep.subr.mxu0 0.0
    %1364 = vmatpush1.msra.mxu0 0.0
    %1365 = vmatprep.subr.mxu0 0.0
    %1366 = vmatpush1.msra.mxu0 0.0
    %1367 = vmatprep.subr.mxu0 0.0
    %1368 = vmatpush1.msra.mxu0 0.0
    %1369 = vmatprep.subr.mxu0 0.0
    %1370 = vmatpush1.msra.mxu0 0.0
    %1371 = vmatprep.subr.mxu0 0.0
    %1372 = vmatpush1.msra.mxu0 0.0
    %1373 = vmatprep.subr.mxu0 0.0
    %1374 = vmatpush1.msra.mxu0 0.0
    %1375 = vmatprep.mubr.f32.mxu0 0.0
    %1376 = vmatmul.mubr.f32.gmra.mrb[0].mxu0 %v1309
    %v1377 = vpop.f32.mrb[0].mxu0
    %v1378 = vadd.f32 %v1296, %v1377
    %v1379 = vpop.f32.mrb[0].mxu0
    %v1380 = vadd.f32 %v1300, %v1379
    %1381 = vdwg.mxu0
    %1382 = vmatprep.subr.mxu0 0.0
    %1383 = vmatpush1.msra.mxu0 %v1245
    %1384 = vmatprep.subr.mxu0 0.0
    %1385 = vmatpush1.msra.mxu0 %v1248
    %1386 = vmatprep.subr.mxu0 0.0
    %1387 = vmatpush1.msra.mxu0 %v1251
    %1388 = vmatprep.subr.mxu0 0.0
    %1389 = vmatpush1.msra.mxu0 %v1254
    %1390 = vmatprep.subr.mxu0 0.0
    %1391 = vmatpush1.msra.mxu0 %v1257
    %1392 = vmatprep.subr.mxu0 0.0
    %1393 = vmatpush1.msra.mxu0 %v1260
    %1394 = vmatprep.subr.mxu0 0.0
    %1395 = vmatpush1.msra.mxu0 %v1263
    %1396 = vmatprep.subr.mxu0 0.0
    %1397 = vmatpush1.msra.mxu0 %v1266
    %1398 = vmatprep.subr.mxu0 0.0
    %1399 = vmatpush1.msra.mxu0 %v1269
    %1400 = vmatprep.subr.mxu0 0.0
    %1401 = vmatpush1.msra.mxu0 %v1272
    %1402 = vmatprep.subr.mxu0 0.0
    %1403 = vmatpush1.msra.mxu0 %v1275
    %1404 = vmatprep.subr.mxu0 0.0
    %1405 = vmatpush1.msra.mxu0 %v1278
    %1406 = vmatprep.subr.mxu0 0.0
    %1407 = vmatpush1.msra.mxu0 %v1281
    %1408 = vmatprep.subr.mxu0 0.0
    %1409 = vmatpush1.msra.mxu0 %v1284
    %1410 = vmatprep.subr.mxu0 0.0
    %1411 = vmatpush1.msra.mxu0 %v1287
    %1412 = vmatprep.subr.mxu0 0.0
    %1413 = vmatpush1.msra.mxu0 %v1290
    %1414 = vmatprep.subr.mxu0 0.0
    %1415 = vmatpush1.msra.mxu0 0.0
    %1416 = vmatprep.subr.mxu0 0.0
    %1417 = vmatpush1.msra.mxu0 0.0
    %1418 = vmatprep.subr.mxu0 0.0
    %1419 = vmatpush1.msra.mxu0 0.0
    %1420 = vmatprep.subr.mxu0 0.0
    %1421 = vmatpush1.msra.mxu0 0.0
    %1422 = vmatprep.subr.mxu0 0.0
    %1423 = vmatpush1.msra.mxu0 0.0
    %1424 = vmatprep.subr.mxu0 0.0
    %1425 = vmatpush1.msra.mxu0 0.0
    %1426 = vmatprep.subr.mxu0 0.0
    %1427 = vmatpush1.msra.mxu0 0.0
    %1428 = vmatprep.subr.mxu0 0.0
    %1429 = vmatpush1.msra.mxu0 0.0
    %1430 = vmatprep.subr.mxu0 0.0
    %1431 = vmatpush1.msra.mxu0 0.0
    %1432 = vmatprep.subr.mxu0 0.0
    %1433 = vmatpush1.msra.mxu0 0.0
    %1434 = vmatprep.subr.mxu0 0.0
    %1435 = vmatpush1.msra.mxu0 0.0
    %1436 = vmatprep.subr.mxu0 0.0
    %1437 = vmatpush1.msra.mxu0 0.0
    %1438 = vmatprep.subr.mxu0 0.0
    %1439 = vmatpush1.msra.mxu0 0.0
    %1440 = vmatprep.subr.mxu0 0.0
    %1441 = vmatpush1.msra.mxu0 0.0
    %1442 = vmatprep.subr.mxu0 0.0
    %1443 = vmatpush1.msra.mxu0 0.0
    %1444 = vmatprep.subr.mxu0 0.0
    %1445 = vmatpush1.msra.mxu0 0.0
    %1446 = vmatprep.mubr.f32.mxu0 0.0
    %1447 = vmatmul.mubr.f32.gmra.mrb[0].mxu0 %v1309
    %v1448 = vpop.f32.mrb[0].mxu0
    %v1449 = vadd.f32 %v1304, %v1448
    %v1450 = vpop.f32.mrb[0].mxu0
    %1451 = vdwg.mxu0
    %v1453 = vrot.slane %v1378, 2
    %v1455 = vadd.f32 %v1240, %v1453
    %v1456 = vxor.u32 %v1455, 2147483648
    %v1457 = vmul.f32 %v1456, 1.442695
    %v1458 = vpow.pop %v1457
    %v1459 = vadd.f32 %v1458, 1.0
    %v1460 = vrcp.pop %v1459
    %v1461 = vmul.f32 1.0, %v1460
    %v1463 = vrot.slane %v1380, 2
    %v1465 = vadd.f32 %v1241, %v1463
    %v1466 = vxor.u32 %v1465, 2147483648
    %v1467 = vmul.f32 %v1466, 1.442695
    %v1468 = vpow.pop %v1467
    %v1469 = vadd.f32 %v1468, 1.0
    %v1470 = vrcp.pop %v1469
    %v1471 = vmul.f32 1.0, %v1470
    %v1473 = vrot.slane %v1449, 2
    %v1475 = vmul.f32 %v1461, %v1473
    %v1476 = vadd.f32 %v1242, %v1475
    %v1477 = vtanh.pop %v1476
    %v1478 = vsub.f32 1.0, %v1471
    %v1479 = vmul.f32 %v1478, %v1477
    %v1480 = vrot.slane %v1238, 6
    %v1482 = vmul.f32 %v1471, %v1480
    %v1483 = vadd.f32 %v1479, %v1482
    %1484 = vst [vmem:[#allocation3] sm:$0xc0] %v1483
    %v1485 = vld [vmem:[#allocation2 + $0x18] sm:$0x3]
    %v1486 = vld [vmem:[#allocation2 + $0x20] sm:$0x3]
    %v1487 = vld [vmem:[#allocation2 + $0x28] sm:$0x3]
    %v1488 = vld [vmem:[#allocation4] sm:$0xff]
    %v1489 = vld [vmem:[#allocation4 + $0x8] sm:$0xff]
    %v1490 = vld [vmem:[#allocation4 + $0x10] sm:$0xff]
    %v1491 = vld [vmem:[#allocation4 + $0x18] sm:$0xff]
    %v1492 = vld [vmem:[#allocation4 + $0x20] sm:$0xff]
    %v1493 = vld [vmem:[#allocation4 + $0x28] sm:$0xff]
    %v1494 = vld [vmem:[#allocation4 + $0x30] sm:$0xff]
    %v1495 = vld [vmem:[#allocation4 + $0x38] sm:$0xff]
    %v1496 = vld [vmem:[#allocation4 + $0x40] sm:$0xff]
    %v1497 = vld [vmem:[#allocation4 + $0x48] sm:$0xff]
    %v1498 = vld [vmem:[#allocation4 + $0x50] sm:$0xff]
    %v1499 = vld [vmem:[#allocation4 + $0x58] sm:$0xff]
    %v1500 = vld [vmem:[#allocation4 + $0x60] sm:$0xff]
    %v1501 = vld [vmem:[#allocation4 + $0x68] sm:$0xff]
    %v1502 = vld [vmem:[#allocation4 + $0x70] sm:$0xff]
    %v1503 = vld [vmem:[#allocation4 + $0x78] sm:$0xff]
    %v1504 = vld [vmem:[#allocation4 + $0x80] sm:$0xff]
    %v1505 = vld [vmem:[#allocation4 + $0x88] sm:$0xff]
    %v1506 = vld [vmem:[#allocation4 + $0x90] sm:$0xff]
    %v1507 = vld [vmem:[#allocation4 + $0x98] sm:$0xff]
    %v1508 = vld [vmem:[#allocation4 + $0xa0] sm:$0xff]
    %v1509 = vld [vmem:[#allocation4 + $0xa8] sm:$0xff]
    %v1510 = vld [vmem:[#allocation4 + $0xb0] sm:$0xff]
    %v1511 = vld [vmem:[#allocation4 + $0xb8] sm:$0xff]
    %v1512 = vld [vmem:[#allocation4 + $0xc0] sm:$0xff]
    %v1513 = vld [vmem:[#allocation4 + $0xc8] sm:$0xff]
    %v1514 = vld [vmem:[#allocation4 + $0xd0] sm:$0xff]
    %v1515 = vld [vmem:[#allocation4 + $0xd8] sm:$0xff]
    %v1516 = vld [vmem:[#allocation4 + $0xe0] sm:$0xff]
    %v1517 = vld [vmem:[#allocation4 + $0xe8] sm:$0xff]
    %v1518 = vld [vmem:[#allocation4 + $0xf0] sm:$0xff]
    %v1519 = vld [vmem:[#allocation4 + $0xf8] sm:$0xff]
    %v1520 = vld [vmem:[#allocation4 + $0x100] sm:$0xff]
    %v1521 = vld [vmem:[#allocation4 + $0x108] sm:$0xff]
    %v1522 = vld [vmem:[#allocation4 + $0x110] sm:$0xff]
    %v1523 = vld [vmem:[#allocation4 + $0x118] sm:$0xff]
    %v1524 = vld [vmem:[#allocation4 + $0x120] sm:$0xff]
    %v1525 = vld [vmem:[#allocation4 + $0x128] sm:$0xff]
    %v1526 = vld [vmem:[#allocation4 + $0x130] sm:$0xff]
    %v1527 = vld [vmem:[#allocation4 + $0x138] sm:$0xff]
    %v1528 = vld [vmem:[#allocation4 + $0x140] sm:$0xff]
    %v1529 = vld [vmem:[#allocation4 + $0x148] sm:$0xff]
    %v1530 = vld [vmem:[#allocation4 + $0x150] sm:$0xff]
    %v1531 = vld [vmem:[#allocation4 + $0x158] sm:$0xff]
    %v1532 = vld [vmem:[#allocation4 + $0x160] sm:$0xff]
    %v1533 = vld [vmem:[#allocation4 + $0x168] sm:$0xff]
    %v1534 = vld [vmem:[#allocation4 + $0x170] sm:$0xff]
    %v1535 = vld [vmem:[#allocation4 + $0x178] sm:$0xff]
    %v1536 = vld [vmem:[%s8] sm:$0x7]
    %v1538 = vlaneseq
    %v1539 = vshrl.u32 %v1538, 7
    %v1540 = vsub.s32 0, %v1539
    %v1541 = vrot.slane %v1536, %v1540
    %v1542 = vlaneseq
    %v1543 = vshrl.u32 %v1542, 7
    %v1544 = vsub.s32 1, %v1543
    %v1545 = vrot.slane %v1536, %v1544
    %v1546 = vlaneseq
    %v1547 = vshrl.u32 %v1546, 7
    %v1548 = vsub.s32 2, %v1547
    %v1549 = vrot.slane %v1536, %v1548
    %v1554 = vrot.slane %v1483, 6
    %1556 = vmatprep.subr.mxu0 %v1489
    %1557 = vmatpush1.msra.mxu0 %v1488
    %1558 = vmatprep.subr.mxu0 %v1492
    %1559 = vmatpush1.msra.mxu0 %v1491
    %1560 = vmatprep.subr.mxu0 %v1495
    %1561 = vmatpush1.msra.mxu0 %v1494
    %1562 = vmatprep.subr.mxu0 %v1498
    %1563 = vmatpush1.msra.mxu0 %v1497
    %1564 = vmatprep.subr.mxu0 %v1501
    %1565 = vmatpush1.msra.mxu0 %v1500
    %1566 = vmatprep.subr.mxu0 %v1504
    %1567 = vmatpush1.msra.mxu0 %v1503
    %1568 = vmatprep.subr.mxu0 %v1507
    %1569 = vmatpush1.msra.mxu0 %v1506
    %1570 = vmatprep.subr.mxu0 %v1510
    %1571 = vmatpush1.msra.mxu0 %v1509
    %1572 = vmatprep.subr.mxu0 %v1513
    %1573 = vmatpush1.msra.mxu0 %v1512
    %1574 = vmatprep.subr.mxu0 %v1516
    %1575 = vmatpush1.msra.mxu0 %v1515
    %1576 = vmatprep.subr.mxu0 %v1519
    %1577 = vmatpush1.msra.mxu0 %v1518
    %1578 = vmatprep.subr.mxu0 %v1522
    %1579 = vmatpush1.msra.mxu0 %v1521
    %1580 = vmatprep.subr.mxu0 %v1525
    %1581 = vmatpush1.msra.mxu0 %v1524
    %1582 = vmatprep.subr.mxu0 %v1528
    %1583 = vmatpush1.msra.mxu0 %v1527
    %1584 = vmatprep.subr.mxu0 %v1531
    %1585 = vmatpush1.msra.mxu0 %v1530
    %1586 = vmatprep.subr.mxu0 %v1534
    %1587 = vmatpush1.msra.mxu0 %v1533
    %1588 = vmatprep.subr.mxu0 0.0
    %1589 = vmatpush1.msra.mxu0 0.0
    %1590 = vmatprep.subr.mxu0 0.0
    %1591 = vmatpush1.msra.mxu0 0.0
    %1592 = vmatprep.subr.mxu0 0.0
    %1593 = vmatpush1.msra.mxu0 0.0
    %1594 = vmatprep.subr.mxu0 0.0
    %1595 = vmatpush1.msra.mxu0 0.0
    %1596 = vmatprep.subr.mxu0 0.0
    %1597 = vmatpush1.msra.mxu0 0.0
    %1598 = vmatprep.subr.mxu0 0.0
    %1599 = vmatpush1.msra.mxu0 0.0
    %1600 = vmatprep.subr.mxu0 0.0
    %1601 = vmatpush1.msra.mxu0 0.0
    %1602 = vmatprep.subr.mxu0 0.0
    %1603 = vmatpush1.msra.mxu0 0.0
    %1604 = vmatprep.subr.mxu0 0.0
    %1605 = vmatpush1.msra.mxu0 0.0
    %1606 = vmatprep.subr.mxu0 0.0
    %1607 = vmatpush1.msra.mxu0 0.0
    %1608 = vmatprep.subr.mxu0 0.0
    %1609 = vmatpush1.msra.mxu0 0.0
    %1610 = vmatprep.subr.mxu0 0.0
    %1611 = vmatpush1.msra.mxu0 0.0
    %1612 = vmatprep.subr.mxu0 0.0
    %1613 = vmatpush1.msra.mxu0 0.0
    %1614 = vmatprep.subr.mxu0 0.0
    %1615 = vmatpush1.msra.mxu0 0.0
    %1616 = vmatprep.subr.mxu0 0.0
    %1617 = vmatpush1.msra.mxu0 0.0
    %1618 = vmatprep.subr.mxu0 0.0
    %1619 = vmatpush1.msra.mxu0 0.0
    %1620 = vmatprep.mubr.f32.mxu0 0.0
    %1621 = vmatmul.mubr.f32.gmra.mrb[0].mxu0 %v1554
    %v1622 = vpop.f32.mrb[0].mxu0
    %v1623 = vadd.f32 %v1541, %v1622
    %v1624 = vpop.f32.mrb[0].mxu0
    %v1625 = vadd.f32 %v1545, %v1624
    %1626 = vdwg.mxu0
    %1627 = vmatprep.subr.mxu0 0.0
    %1628 = vmatpush1.msra.mxu0 %v1490
    %1629 = vmatprep.subr.mxu0 0.0
    %1630 = vmatpush1.msra.mxu0 %v1493
    %1631 = vmatprep.subr.mxu0 0.0
    %1632 = vmatpush1.msra.mxu0 %v1496
    %1633 = vmatprep.subr.mxu0 0.0
    %1634 = vmatpush1.msra.mxu0 %v1499
    %1635 = vmatprep.subr.mxu0 0.0
    %1636 = vmatpush1.msra.mxu0 %v1502
    %1637 = vmatprep.subr.mxu0 0.0
    %1638 = vmatpush1.msra.mxu0 %v1505
    %1639 = vmatprep.subr.mxu0 0.0
    %1640 = vmatpush1.msra.mxu0 %v1508
    %1641 = vmatprep.subr.mxu0 0.0
    %1642 = vmatpush1.msra.mxu0 %v1511
    %1643 = vmatprep.subr.mxu0 0.0
    %1644 = vmatpush1.msra.mxu0 %v1514
    %1645 = vmatprep.subr.mxu0 0.0
    %1646 = vmatpush1.msra.mxu0 %v1517
    %1647 = vmatprep.subr.mxu0 0.0
    %1648 = vmatpush1.msra.mxu0 %v1520
    %1649 = vmatprep.subr.mxu0 0.0
    %1650 = vmatpush1.msra.mxu0 %v1523
    %1651 = vmatprep.subr.mxu0 0.0
    %1652 = vmatpush1.msra.mxu0 %v1526
    %1653 = vmatprep.subr.mxu0 0.0
    %1654 = vmatpush1.msra.mxu0 %v1529
    %1655 = vmatprep.subr.mxu0 0.0
    %1656 = vmatpush1.msra.mxu0 %v1532
    %1657 = vmatprep.subr.mxu0 0.0
    %1658 = vmatpush1.msra.mxu0 %v1535
    %1659 = vmatprep.subr.mxu0 0.0
    %1660 = vmatpush1.msra.mxu0 0.0
    %1661 = vmatprep.subr.mxu0 0.0
    %1662 = vmatpush1.msra.mxu0 0.0
    %1663 = vmatprep.subr.mxu0 0.0
    %1664 = vmatpush1.msra.mxu0 0.0
    %1665 = vmatprep.subr.mxu0 0.0
    %1666 = vmatpush1.msra.mxu0 0.0
    %1667 = vmatprep.subr.mxu0 0.0
    %1668 = vmatpush1.msra.mxu0 0.0
    %1669 = vmatprep.subr.mxu0 0.0
    %1670 = vmatpush1.msra.mxu0 0.0
    %1671 = vmatprep.subr.mxu0 0.0
    %1672 = vmatpush1.msra.mxu0 0.0
    %1673 = vmatprep.subr.mxu0 0.0
    %1674 = vmatpush1.msra.mxu0 0.0
    %1675 = vmatprep.subr.mxu0 0.0
    %1676 = vmatpush1.msra.mxu0 0.0
    %1677 = vmatprep.subr.mxu0 0.0
    %1678 = vmatpush1.msra.mxu0 0.0
    %1679 = vmatprep.subr.mxu0 0.0
    %1680 = vmatpush1.msra.mxu0 0.0
    %1681 = vmatprep.subr.mxu0 0.0
    %1682 = vmatpush1.msra.mxu0 0.0
    %1683 = vmatprep.subr.mxu0 0.0
    %1684 = vmatpush1.msra.mxu0 0.0
    %1685 = vmatprep.subr.mxu0 0.0
    %1686 = vmatpush1.msra.mxu0 0.0
    %1687 = vmatprep.subr.mxu0 0.0
    %1688 = vmatpush1.msra.mxu0 0.0
    %1689 = vmatprep.subr.mxu0 0.0
    %1690 = vmatpush1.msra.mxu0 0.0
    %1691 = vmatprep.mubr.f32.mxu0 0.0
    %1692 = vmatmul.mubr.f32.gmra.mrb[0].mxu0 %v1554
    %v1693 = vpop.f32.mrb[0].mxu0
    %v1694 = vadd.f32 %v1549, %v1693
    %v1695 = vpop.f32.mrb[0].mxu0
    %1696 = vdwg.mxu0
    %v1697 = vadd.f32 %v1485, %v1623
    %v1698 = vxor.u32 %v1697, 2147483648
    %v1699 = vmul.f32 %v1698, 1.442695
    %v1700 = vpow.pop %v1699
    %v1701 = vadd.f32 %v1700, 1.0
    %v1702 = vrcp.pop %v1701
    %v1703 = vmul.f32 1.0, %v1702
    %v1704 = vadd.f32 %v1486, %v1625
    %v1705 = vxor.u32 %v1704, 2147483648
    %v1706 = vmul.f32 %v1705, 1.442695
    %v1707 = vpow.pop %v1706
    %v1708 = vadd.f32 %v1707, 1.0
    %v1709 = vrcp.pop %v1708
    %v1710 = vmul.f32 1.0, %v1709
    %v1711 = vmul.f32 %v1703, %v1694
    %v1712 = vadd.f32 %v1487, %v1711
    %v1713 = vtanh.pop %v1712
    %v1714 = vsub.f32 1.0, %v1710
    %v1715 = vmul.f32 %v1714, %v1713
    %v1716 = vmul.f32 %v1710, %v1554
    %v1717 = vadd.f32 %v1715, %v1716
    %1718 = vst [vmem:[#allocation3 + $0x8] sm:$0x3] %v1717
    %v1719 = vld [vmem:[#allocation2 + $0x18] sm:$0xc]
    %v1720 = vld [vmem:[#allocation2 + $0x20] sm:$0xc]
    %v1721 = vld [vmem:[#allocation2 + $0x28] sm:$0xc]
    %v1722 = vld [vmem:[#allocation4] sm:$0xff]
    %v1723 = vld [vmem:[#allocation4 + $0x8] sm:$0xff]
    %v1724 = vld [vmem:[#allocation4 + $0x10] sm:$0xff]
    %v1725 = vld [vmem:[#allocation4 + $0x18] sm:$0xff]
    %v1726 = vld [vmem:[#allocation4 + $0x20] sm:$0xff]
    %v1727 = vld [vmem:[#allocation4 + $0x28] sm:$0xff]
    %v1728 = vld [vmem:[#allocation4 + $0x30] sm:$0xff]
    %v1729 = vld [vmem:[#allocation4 + $0x38] sm:$0xff]
    %v1730 = vld [vmem:[#allocation4 + $0x40] sm:$0xff]
    %v1731 = vld [vmem:[#allocation4 + $0x48] sm:$0xff]
    %v1732 = vld [vmem:[#allocation4 + $0x50] sm:$0xff]
    %v1733 = vld [vmem:[#allocation4 + $0x58] sm:$0xff]
    %v1734 = vld [vmem:[#allocation4 + $0x60] sm:$0xff]
    %v1735 = vld [vmem:[#allocation4 + $0x68] sm:$0xff]
    %v1736 = vld [vmem:[#allocation4 + $0x70] sm:$0xff]
    %v1737 = vld [vmem:[#allocation4 + $0x78] sm:$0xff]
    %v1738 = vld [vmem:[#allocation4 + $0x80] sm:$0xff]
    %v1739 = vld [vmem:[#allocation4 + $0x88] sm:$0xff]
    %v1740 = vld [vmem:[#allocation4 + $0x90] sm:$0xff]
    %v1741 = vld [vmem:[#allocation4 + $0x98] sm:$0xff]
    %v1742 = vld [vmem:[#allocation4 + $0xa0] sm:$0xff]
    %v1743 = vld [vmem:[#allocation4 + $0xa8] sm:$0xff]
    %v1744 = vld [vmem:[#allocation4 + $0xb0] sm:$0xff]
    %v1745 = vld [vmem:[#allocation4 + $0xb8] sm:$0xff]
    %v1746 = vld [vmem:[#allocation4 + $0xc0] sm:$0xff]
    %v1747 = vld [vmem:[#allocation4 + $0xc8] sm:$0xff]
    %v1748 = vld [vmem:[#allocation4 + $0xd0] sm:$0xff]
    %v1749 = vld [vmem:[#allocation4 + $0xd8] sm:$0xff]
    %v1750 = vld [vmem:[#allocation4 + $0xe0] sm:$0xff]
    %v1751 = vld [vmem:[#allocation4 + $0xe8] sm:$0xff]
    %v1752 = vld [vmem:[#allocation4 + $0xf0] sm:$0xff]
    %v1753 = vld [vmem:[#allocation4 + $0xf8] sm:$0xff]
    %v1754 = vld [vmem:[#allocation4 + $0x100] sm:$0xff]
    %v1755 = vld [vmem:[#allocation4 + $0x108] sm:$0xff]
    %v1756 = vld [vmem:[#allocation4 + $0x110] sm:$0xff]
    %v1757 = vld [vmem:[#allocation4 + $0x118] sm:$0xff]
    %v1758 = vld [vmem:[#allocation4 + $0x120] sm:$0xff]
    %v1759 = vld [vmem:[#allocation4 + $0x128] sm:$0xff]
    %v1760 = vld [vmem:[#allocation4 + $0x130] sm:$0xff]
    %v1761 = vld [vmem:[#allocation4 + $0x138] sm:$0xff]
    %v1762 = vld [vmem:[#allocation4 + $0x140] sm:$0xff]
    %v1763 = vld [vmem:[#allocation4 + $0x148] sm:$0xff]
    %v1764 = vld [vmem:[#allocation4 + $0x150] sm:$0xff]
    %v1765 = vld [vmem:[#allocation4 + $0x158] sm:$0xff]
    %v1766 = vld [vmem:[#allocation4 + $0x160] sm:$0xff]
    %v1767 = vld [vmem:[#allocation4 + $0x168] sm:$0xff]
    %v1768 = vld [vmem:[#allocation4 + $0x170] sm:$0xff]
    %v1769 = vld [vmem:[#allocation4 + $0x178] sm:$0xff]
    %v1770 = vld [vmem:[%s8] sm:$0x7]
    %v1772 = vlaneseq
    %v1773 = vshrl.u32 %v1772, 7
    %v1774 = vsub.s32 0, %v1773
    %v1775 = vrot.slane %v1770, %v1774
    %v1776 = vlaneseq
    %v1777 = vshrl.u32 %v1776, 7
    %v1778 = vsub.s32 1, %v1777
    %v1779 = vrot.slane %v1770, %v1778
    %v1780 = vlaneseq
    %v1781 = vshrl.u32 %v1780, 7
    %v1782 = vsub.s32 2, %v1781
    %v1783 = vrot.slane %v1770, %v1782
    %1787 = vmatprep.subr.mxu0 %v1723
    %1788 = vmatpush1.msra.mxu0 %v1722
    %1789 = vmatprep.subr.mxu0 %v1726
    %1790 = vmatpush1.msra.mxu0 %v1725
    %1791 = vmatprep.subr.mxu0 %v1729
    %1792 = vmatpush1.msra.mxu0 %v1728
    %1793 = vmatprep.subr.mxu0 %v1732
    %1794 = vmatpush1.msra.mxu0 %v1731
    %1795 = vmatprep.subr.mxu0 %v1735
    %1796 = vmatpush1.msra.mxu0 %v1734
    %1797 = vmatprep.subr.mxu0 %v1738
    %1798 = vmatpush1.msra.mxu0 %v1737
    %1799 = vmatprep.subr.mxu0 %v1741
    %1800 = vmatpush1.msra.mxu0 %v1740
    %1801 = vmatprep.subr.mxu0 %v1744
    %1802 = vmatpush1.msra.mxu0 %v1743
    %1803 = vmatprep.subr.mxu0 %v1747
    %1804 = vmatpush1.msra.mxu0 %v1746
    %1805 = vmatprep.subr.mxu0 %v1750
    %1806 = vmatpush1.msra.mxu0 %v1749
    %1807 = vmatprep.subr.mxu0 %v1753
    %1808 = vmatpush1.msra.mxu0 %v1752
    %1809 = vmatprep.subr.mxu0 %v1756
    %1810 = vmatpush1.msra.mxu0 %v1755
    %1811 = vmatprep.subr.mxu0 %v1759
    %1812 = vmatpush1.msra.mxu0 %v1758
    %1813 = vmatprep.subr.mxu0 %v1762
    %1814 = vmatpush1.msra.mxu0 %v1761
    %1815 = vmatprep.subr.mxu0 %v1765
    %1816 = vmatpush1.msra.mxu0 %v1764
    %1817 = vmatprep.subr.mxu0 %v1768
    %1818 = vmatpush1.msra.mxu0 %v1767
    %1819 = vmatprep.subr.mxu0 0.0
    %1820 = vmatpush1.msra.mxu0 0.0
    %1821 = vmatprep.subr.mxu0 0.0
    %1822 = vmatpush1.msra.mxu0 0.0
    %1823 = vmatprep.subr.mxu0 0.0
    %1824 = vmatpush1.msra.mxu0 0.0
    %1825 = vmatprep.subr.mxu0 0.0
    %1826 = vmatpush1.msra.mxu0 0.0
    %1827 = vmatprep.subr.mxu0 0.0
    %1828 = vmatpush1.msra.mxu0 0.0
    %1829 = vmatprep.subr.mxu0 0.0
    %1830 = vmatpush1.msra.mxu0 0.0
    %1831 = vmatprep.subr.mxu0 0.0
    %1832 = vmatpush1.msra.mxu0 0.0
    %1833 = vmatprep.subr.mxu0 0.0
    %1834 = vmatpush1.msra.mxu0 0.0
    %1835 = vmatprep.subr.mxu0 0.0
    %1836 = vmatpush1.msra.mxu0 0.0
    %1837 = vmatprep.subr.mxu0 0.0
    %1838 = vmatpush1.msra.mxu0 0.0
    %1839 = vmatprep.subr.mxu0 0.0
    %1840 = vmatpush1.msra.mxu0 0.0
    %1841 = vmatprep.subr.mxu0 0.0
    %1842 = vmatpush1.msra.mxu0 0.0
    %1843 = vmatprep.subr.mxu0 0.0
    %1844 = vmatpush1.msra.mxu0 0.0
    %1845 = vmatprep.subr.mxu0 0.0
    %1846 = vmatpush1.msra.mxu0 0.0
    %1847 = vmatprep.subr.mxu0 0.0
    %1848 = vmatpush1.msra.mxu0 0.0
    %1849 = vmatprep.subr.mxu0 0.0
    %1850 = vmatpush1.msra.mxu0 0.0
    %1851 = vmatprep.mubr.f32.mxu0 0.0
    %1852 = vmatmul.mubr.f32.gmra.mrb[0].mxu0 %v1717
    %v1853 = vpop.f32.mrb[0].mxu0
    %v1854 = vadd.f32 %v1775, %v1853
    %v1855 = vpop.f32.mrb[0].mxu0
    %v1856 = vadd.f32 %v1779, %v1855
    %1857 = vdwg.mxu0
    %1858 = vmatprep.subr.mxu0 0.0
    %1859 = vmatpush1.msra.mxu0 %v1724
    %1860 = vmatprep.subr.mxu0 0.0
    %1861 = vmatpush1.msra.mxu0 %v1727
    %1862 = vmatprep.subr.mxu0 0.0
    %1863 = vmatpush1.msra.mxu0 %v1730
    %1864 = vmatprep.subr.mxu0 0.0
    %1865 = vmatpush1.msra.mxu0 %v1733
    %1866 = vmatprep.subr.mxu0 0.0
    %1867 = vmatpush1.msra.mxu0 %v1736
    %1868 = vmatprep.subr.mxu0 0.0
    %1869 = vmatpush1.msra.mxu0 %v1739
    %1870 = vmatprep.subr.mxu0 0.0
    %1871 = vmatpush1.msra.mxu0 %v1742
    %1872 = vmatprep.subr.mxu0 0.0
    %1873 = vmatpush1.msra.mxu0 %v1745
    %1874 = vmatprep.subr.mxu0 0.0
    %1875 = vmatpush1.msra.mxu0 %v1748
    %1876 = vmatprep.subr.mxu0 0.0
    %1877 = vmatpush1.msra.mxu0 %v1751
    %1878 = vmatprep.subr.mxu0 0.0
    %1879 = vmatpush1.msra.mxu0 %v1754
    %1880 = vmatprep.subr.mxu0 0.0
    %1881 = vmatpush1.msra.mxu0 %v1757
    %1882 = vmatprep.subr.mxu0 0.0
    %1883 = vmatpush1.msra.mxu0 %v1760
    %1884 = vmatprep.subr.mxu0 0.0
    %1885 = vmatpush1.msra.mxu0 %v1763
    %1886 = vmatprep.subr.mxu0 0.0
    %1887 = vmatpush1.msra.mxu0 %v1766
    %1888 = vmatprep.subr.mxu0 0.0
    %1889 = vmatpush1.msra.mxu0 %v1769
    %1890 = vmatprep.subr.mxu0 0.0
    %1891 = vmatpush1.msra.mxu0 0.0
    %1892 = vmatprep.subr.mxu0 0.0
    %1893 = vmatpush1.msra.mxu0 0.0
    %1894 = vmatprep.subr.mxu0 0.0
    %1895 = vmatpush1.msra.mxu0 0.0
    %1896 = vmatprep.subr.mxu0 0.0
    %1897 = vmatpush1.msra.mxu0 0.0
    %1898 = vmatprep.subr.mxu0 0.0
    %1899 = vmatpush1.msra.mxu0 0.0
    %1900 = vmatprep.subr.mxu0 0.0
    %1901 = vmatpush1.msra.mxu0 0.0
    %1902 = vmatprep.subr.mxu0 0.0
    %1903 = vmatpush1.msra.mxu0 0.0
    %1904 = vmatprep.subr.mxu0 0.0
    %1905 = vmatpush1.msra.mxu0 0.0
    %1906 = vmatprep.subr.mxu0 0.0
    %1907 = vmatpush1.msra.mxu0 0.0
    %1908 = vmatprep.subr.mxu0 0.0
    %1909 = vmatpush1.msra.mxu0 0.0
    %1910 = vmatprep.subr.mxu0 0.0
    %1911 = vmatpush1.msra.mxu0 0.0
    %1912 = vmatprep.subr.mxu0 0.0
    %1913 = vmatpush1.msra.mxu0 0.0
    %1914 = vmatprep.subr.mxu0 0.0
    %1915 = vmatpush1.msra.mxu0 0.0
    %1916 = vmatprep.subr.mxu0 0.0
    %1917 = vmatpush1.msra.mxu0 0.0
    %1918 = vmatprep.subr.mxu0 0.0
    %1919 = vmatpush1.msra.mxu0 0.0
    %1920 = vmatprep.subr.mxu0 0.0
    %1921 = vmatpush1.msra.mxu0 0.0
    %1922 = vmatprep.mubr.f32.mxu0 0.0
    %1923 = vmatmul.mubr.f32.gmra.mrb[0].mxu0 %v1717
    %v1924 = vpop.f32.mrb[0].mxu0
    %v1925 = vadd.f32 %v1783, %v1924
    %v1926 = vpop.f32.mrb[0].mxu0
    %1927 = vdwg.mxu0
    %v1929 = vrot.slane %v1854, 6
    %v1931 = vadd.f32 %v1719, %v1929
    %v1932 = vxor.u32 %v1931, 2147483648
    %v1933 = vmul.f32 %v1932, 1.442695
    %v1934 = vpow.pop %v1933
    %v1935 = vadd.f32 %v1934, 1.0
    %v1936 = vrcp.pop %v1935
    %v1937 = vmul.f32 1.0, %v1936
    %v1939 = vrot.slane %v1856, 6
    %v1941 = vadd.f32 %v1720, %v1939
    %v1942 = vxor.u32 %v1941, 2147483648
    %v1943 = vmul.f32 %v1942, 1.442695
    %v1944 = vpow.pop %v1943
    %v1945 = vadd.f32 %v1944, 1.0
    %v1946 = vrcp.pop %v1945
    %v1947 = vmul.f32 1.0, %v1946
    %v1949 = vrot.slane %v1925, 6
    %v1951 = vmul.f32 %v1937, %v1949
    %v1952 = vadd.f32 %v1721, %v1951
    %v1953 = vtanh.pop %v1952
    %v1954 = vsub.f32 1.0, %v1947
    %v1955 = vmul.f32 %v1954, %v1953
    %v1957 = vrot.slane %v1717, 6
    %v1959 = vmul.f32 %v1947, %v1957
    %v1960 = vadd.f32 %v1955, %v1959
    %1961 = vst [vmem:[#allocation3 + $0x8] sm:$0xc] %v1960
    %v1962 = vld [vmem:[#allocation2 + $0x18] sm:$0x30]
    %v1963 = vld [vmem:[#allocation2 + $0x20] sm:$0x30]
    %v1964 = vld [vmem:[#allocation2 + $0x28] sm:$0x30]
    %v1965 = vld [vmem:[#allocation4] sm:$0xff]
    %v1966 = vld [vmem:[#allocation4 + $0x8] sm:$0xff]
    %v1967 = vld [vmem:[#allocation4 + $0x10] sm:$0xff]
    %v1968 = vld [vmem:[#allocation4 + $0x18] sm:$0xff]
    %v1969 = vld [vmem:[#allocation4 + $0x20] sm:$0xff]
    %v1970 = vld [vmem:[#allocation4 + $0x28] sm:$0xff]
    %v1971 = vld [vmem:[#allocation4 + $0x30] sm:$0xff]
    %v1972 = vld [vmem:[#allocation4 + $0x38] sm:$0xff]
    %v1973 = vld [vmem:[#allocation4 + $0x40] sm:$0xff]
    %v1974 = vld [vmem:[#allocation4 + $0x48] sm:$0xff]
    %v1975 = vld [vmem:[#allocation4 + $0x50] sm:$0xff]
    %v1976 = vld [vmem:[#allocation4 + $0x58] sm:$0xff]
    %v1977 = vld [vmem:[#allocation4 + $0x60] sm:$0xff]
    %v1978 = vld [vmem:[#allocation4 + $0x68] sm:$0xff]
    %v1979 = vld [vmem:[#allocation4 + $0x70] sm:$0xff]
    %v1980 = vld [vmem:[#allocation4 + $0x78] sm:$0xff]
    %v1981 = vld [vmem:[#allocation4 + $0x80] sm:$0xff]
    %v1982 = vld [vmem:[#allocation4 + $0x88] sm:$0xff]
    %v1983 = vld [vmem:[#allocation4 + $0x90] sm:$0xff]
    %v1984 = vld [vmem:[#allocation4 + $0x98] sm:$0xff]
    %v1985 = vld [vmem:[#allocation4 + $0xa0] sm:$0xff]
    %v1986 = vld [vmem:[#allocation4 + $0xa8] sm:$0xff]
    %v1987 = vld [vmem:[#allocation4 + $0xb0] sm:$0xff]
    %v1988 = vld [vmem:[#allocation4 + $0xb8] sm:$0xff]
    %v1989 = vld [vmem:[#allocation4 + $0xc0] sm:$0xff]
    %v1990 = vld [vmem:[#allocation4 + $0xc8] sm:$0xff]
    %v1991 = vld [vmem:[#allocation4 + $0xd0] sm:$0xff]
    %v1992 = vld [vmem:[#allocation4 + $0xd8] sm:$0xff]
    %v1993 = vld [vmem:[#allocation4 + $0xe0] sm:$0xff]
    %v1994 = vld [vmem:[#allocation4 + $0xe8] sm:$0xff]
    %v1995 = vld [vmem:[#allocation4 + $0xf0] sm:$0xff]
    %v1996 = vld [vmem:[#allocation4 + $0xf8] sm:$0xff]
    %v1997 = vld [vmem:[#allocation4 + $0x100] sm:$0xff]
    %v1998 = vld [vmem:[#allocation4 + $0x108] sm:$0xff]
    %v1999 = vld [vmem:[#allocation4 + $0x110] sm:$0xff]
    %v2000 = vld [vmem:[#allocation4 + $0x118] sm:$0xff]
    %v2001 = vld [vmem:[#allocation4 + $0x120] sm:$0xff]
    %v2002 = vld [vmem:[#allocation4 + $0x128] sm:$0xff]
    %v2003 = vld [vmem:[#allocation4 + $0x130] sm:$0xff]
    %v2004 = vld [vmem:[#allocation4 + $0x138] sm:$0xff]
    %v2005 = vld [vmem:[#allocation4 + $0x140] sm:$0xff]
    %v2006 = vld [vmem:[#allocation4 + $0x148] sm:$0xff]
    %v2007 = vld [vmem:[#allocation4 + $0x150] sm:$0xff]
    %v2008 = vld [vmem:[#allocation4 + $0x158] sm:$0xff]
    %v2009 = vld [vmem:[#allocation4 + $0x160] sm:$0xff]
    %v2010 = vld [vmem:[#allocation4 + $0x168] sm:$0xff]
    %v2011 = vld [vmem:[#allocation4 + $0x170] sm:$0xff]
    %v2012 = vld [vmem:[#allocation4 + $0x178] sm:$0xff]
    %v2013 = vld [vmem:[%s8] sm:$0x7]
    %v2015 = vlaneseq
    %v2016 = vshrl.u32 %v2015, 7
    %v2017 = vsub.s32 0, %v2016
    %v2018 = vrot.slane %v2013, %v2017
    %v2019 = vlaneseq
    %v2020 = vshrl.u32 %v2019, 7
    %v2021 = vsub.s32 1, %v2020
    %v2022 = vrot.slane %v2013, %v2021
    %v2023 = vlaneseq
    %v2024 = vshrl.u32 %v2023, 7
    %v2025 = vsub.s32 2, %v2024
    %v2026 = vrot.slane %v2013, %v2025
    %v2031 = vrot.slane %v1960, 2
    %2033 = vmatprep.subr.mxu0 %v1966
    %2034 = vmatpush1.msra.mxu0 %v1965
    %2035 = vmatprep.subr.mxu0 %v1969
    %2036 = vmatpush1.msra.mxu0 %v1968
    %2037 = vmatprep.subr.mxu0 %v1972
    %2038 = vmatpush1.msra.mxu0 %v1971
    %2039 = vmatprep.subr.mxu0 %v1975
    %2040 = vmatpush1.msra.mxu0 %v1974
    %2041 = vmatprep.subr.mxu0 %v1978
    %2042 = vmatpush1.msra.mxu0 %v1977
    %2043 = vmatprep.subr.mxu0 %v1981
    %2044 = vmatpush1.msra.mxu0 %v1980
    %2045 = vmatprep.subr.mxu0 %v1984
    %2046 = vmatpush1.msra.mxu0 %v1983
    %2047 = vmatprep.subr.mxu0 %v1987
    %2048 = vmatpush1.msra.mxu0 %v1986
    %2049 = vmatprep.subr.mxu0 %v1990
    %2050 = vmatpush1.msra.mxu0 %v1989
    %2051 = vmatprep.subr.mxu0 %v1993
    %2052 = vmatpush1.msra.mxu0 %v1992
    %2053 = vmatprep.subr.mxu0 %v1996
    %2054 = vmatpush1.msra.mxu0 %v1995
    %2055 = vmatprep.subr.mxu0 %v1999
    %2056 = vmatpush1.msra.mxu0 %v1998
    %2057 = vmatprep.subr.mxu0 %v2002
    %2058 = vmatpush1.msra.mxu0 %v2001
    %2059 = vmatprep.subr.mxu0 %v2005
    %2060 = vmatpush1.msra.mxu0 %v2004
    %2061 = vmatprep.subr.mxu0 %v2008
    %2062 = vmatpush1.msra.mxu0 %v2007
    %2063 = vmatprep.subr.mxu0 %v2011
    %2064 = vmatpush1.msra.mxu0 %v2010
    %2065 = vmatprep.subr.mxu0 0.0
    %2066 = vmatpush1.msra.mxu0 0.0
    %2067 = vmatprep.subr.mxu0 0.0
    %2068 = vmatpush1.msra.mxu0 0.0
    %2069 = vmatprep.subr.mxu0 0.0
    %2070 = vmatpush1.msra.mxu0 0.0
    %2071 = vmatprep.subr.mxu0 0.0
    %2072 = vmatpush1.msra.mxu0 0.0
    %2073 = vmatprep.subr.mxu0 0.0
    %2074 = vmatpush1.msra.mxu0 0.0
    %2075 = vmatprep.subr.mxu0 0.0
    %2076 = vmatpush1.msra.mxu0 0.0
    %2077 = vmatprep.subr.mxu0 0.0
    %2078 = vmatpush1.msra.mxu0 0.0
    %2079 = vmatprep.subr.mxu0 0.0
    %2080 = vmatpush1.msra.mxu0 0.0
    %2081 = vmatprep.subr.mxu0 0.0
    %2082 = vmatpush1.msra.mxu0 0.0
    %2083 = vmatprep.subr.mxu0 0.0
    %2084 = vmatpush1.msra.mxu0 0.0
    %2085 = vmatprep.subr.mxu0 0.0
    %2086 = vmatpush1.msra.mxu0 0.0
    %2087 = vmatprep.subr.mxu0 0.0
    %2088 = vmatpush1.msra.mxu0 0.0
    %2089 = vmatprep.subr.mxu0 0.0
    %2090 = vmatpush1.msra.mxu0 0.0
    %2091 = vmatprep.subr.mxu0 0.0
    %2092 = vmatpush1.msra.mxu0 0.0
    %2093 = vmatprep.subr.mxu0 0.0
    %2094 = vmatpush1.msra.mxu0 0.0
    %2095 = vmatprep.subr.mxu0 0.0
    %2096 = vmatpush1.msra.mxu0 0.0
    %2097 = vmatprep.mubr.f32.mxu0 0.0
    %2098 = vmatmul.mubr.f32.gmra.mrb[0].mxu0 %v2031
    %v2099 = vpop.f32.mrb[0].mxu0
    %v2100 = vadd.f32 %v2018, %v2099
    %v2101 = vpop.f32.mrb[0].mxu0
    %v2102 = vadd.f32 %v2022, %v2101
    %2103 = vdwg.mxu0
    %2104 = vmatprep.subr.mxu0 0.0
    %2105 = vmatpush1.msra.mxu0 %v1967
    %2106 = vmatprep.subr.mxu0 0.0
    %2107 = vmatpush1.msra.mxu0 %v1970
    %2108 = vmatprep.subr.mxu0 0.0
    %2109 = vmatpush1.msra.mxu0 %v1973
    %2110 = vmatprep.subr.mxu0 0.0
    %2111 = vmatpush1.msra.mxu0 %v1976
    %2112 = vmatprep.subr.mxu0 0.0
    %2113 = vmatpush1.msra.mxu0 %v1979
    %2114 = vmatprep.subr.mxu0 0.0
    %2115 = vmatpush1.msra.mxu0 %v1982
    %2116 = vmatprep.subr.mxu0 0.0
    %2117 = vmatpush1.msra.mxu0 %v1985
    %2118 = vmatprep.subr.mxu0 0.0
    %2119 = vmatpush1.msra.mxu0 %v1988
    %2120 = vmatprep.subr.mxu0 0.0
    %2121 = vmatpush1.msra.mxu0 %v1991
    %2122 = vmatprep.subr.mxu0 0.0
    %2123 = vmatpush1.msra.mxu0 %v1994
    %2124 = vmatprep.subr.mxu0 0.0
    %2125 = vmatpush1.msra.mxu0 %v1997
    %2126 = vmatprep.subr.mxu0 0.0
    %2127 = vmatpush1.msra.mxu0 %v2000
    %2128 = vmatprep.subr.mxu0 0.0
    %2129 = vmatpush1.msra.mxu0 %v2003
    %2130 = vmatprep.subr.mxu0 0.0
    %2131 = vmatpush1.msra.mxu0 %v2006
    %2132 = vmatprep.subr.mxu0 0.0
    %2133 = vmatpush1.msra.mxu0 %v2009
    %2134 = vmatprep.subr.mxu0 0.0
    %2135 = vmatpush1.msra.mxu0 %v2012
    %2136 = vmatprep.subr.mxu0 0.0
    %2137 = vmatpush1.msra.mxu0 0.0
    %2138 = vmatprep.subr.mxu0 0.0
    %2139 = vmatpush1.msra.mxu0 0.0
    %2140 = vmatprep.subr.mxu0 0.0
    %2141 = vmatpush1.msra.mxu0 0.0
    %2142 = vmatprep.subr.mxu0 0.0
    %2143 = vmatpush1.msra.mxu0 0.0
    %2144 = vmatprep.subr.mxu0 0.0
    %2145 = vmatpush1.msra.mxu0 0.0
    %2146 = vmatprep.subr.mxu0 0.0
    %2147 = vmatpush1.msra.mxu0 0.0
    %2148 = vmatprep.subr.mxu0 0.0
    %2149 = vmatpush1.msra.mxu0 0.0
    %2150 = vmatprep.subr.mxu0 0.0
    %2151 = vmatpush1.msra.mxu0 0.0
    %2152 = vmatprep.subr.mxu0 0.0
    %2153 = vmatpush1.msra.mxu0 0.0
    %2154 = vmatprep.subr.mxu0 0.0
    %2155 = vmatpush1.msra.mxu0 0.0
    %2156 = vmatprep.subr.mxu0 0.0
    %2157 = vmatpush1.msra.mxu0 0.0
    %2158 = vmatprep.subr.mxu0 0.0
    %2159 = vmatpush1.msra.mxu0 0.0
    %2160 = vmatprep.subr.mxu0 0.0
    %2161 = vmatpush1.msra.mxu0 0.0
    %2162 = vmatprep.subr.mxu0 0.0
    %2163 = vmatpush1.msra.mxu0 0.0
    %2164 = vmatprep.subr.mxu0 0.0
    %2165 = vmatpush1.msra.mxu0 0.0
    %2166 = vmatprep.subr.mxu0 0.0
    %2167 = vmatpush1.msra.mxu0 0.0
    %2168 = vmatprep.mubr.f32.mxu0 0.0
    %2169 = vmatmul.mubr.f32.gmra.mrb[0].mxu0 %v2031
    %v2170 = vpop.f32.mrb[0].mxu0
    %v2171 = vadd.f32 %v2026, %v2170
    %v2172 = vpop.f32.mrb[0].mxu0
    %2173 = vdwg.mxu0
    %v2175 = vrot.slane %v2100, 4
    %v2177 = vadd.f32 %v1962, %v2175
    %v2178 = vxor.u32 %v2177, 2147483648
    %v2179 = vmul.f32 %v2178, 1.442695
    %v2180 = vpow.pop %v2179
    %v2181 = vadd.f32 %v2180, 1.0
    %v2182 = vrcp.pop %v2181
    %v2183 = vmul.f32 1.0, %v2182
    %v2185 = vrot.slane %v2102, 4
    %v2187 = vadd.f32 %v1963, %v2185
    %v2188 = vxor.u32 %v2187, 2147483648
    %v2189 = vmul.f32 %v2188, 1.442695
    %v2190 = vpow.pop %v2189
    %v2191 = vadd.f32 %v2190, 1.0
    %v2192 = vrcp.pop %v2191
    %v2193 = vmul.f32 1.0, %v2192
    %v2195 = vrot.slane %v2171, 4
    %v2197 = vmul.f32 %v2183, %v2195
    %v2198 = vadd.f32 %v1964, %v2197
    %v2199 = vtanh.pop %v2198
    %v2200 = vsub.f32 1.0, %v2193
    %v2201 = vmul.f32 %v2200, %v2199
    %v2202 = vrot.slane %v1960, 6
    %v2204 = vmul.f32 %v2193, %v2202
    %v2205 = vadd.f32 %v2201, %v2204
    %2206 = vst [vmem:[#allocation3 + $0x8] sm:$0x30] %v2205
    %v2207 = vld [vmem:[#allocation2 + $0x18] sm:$0xc0]
    %v2208 = vld [vmem:[#allocation2 + $0x20] sm:$0xc0]
    %v2209 = vld [vmem:[#allocation2 + $0x28] sm:$0xc0]
    %v2210 = vld [vmem:[#allocation4] sm:$0xff]
    %v2211 = vld [vmem:[#allocation4 + $0x8] sm:$0xff]
    %v2212 = vld [vmem:[#allocation4 + $0x10] sm:$0xff]
    %v2213 = vld [vmem:[#allocation4 + $0x18] sm:$0xff]
    %v2214 = vld [vmem:[#allocation4 + $0x20] sm:$0xff]
    %v2215 = vld [vmem:[#allocation4 + $0x28] sm:$0xff]
    %v2216 = vld [vmem:[#allocation4 + $0x30] sm:$0xff]
    %v2217 = vld [vmem:[#allocation4 + $0x38] sm:$0xff]
    %v2218 = vld [vmem:[#allocation4 + $0x40] sm:$0xff]
    %v2219 = vld [vmem:[#allocation4 + $0x48] sm:$0xff]
    %v2220 = vld [vmem:[#allocation4 + $0x50] sm:$0xff]
    %v2221 = vld [vmem:[#allocation4 + $0x58] sm:$0xff]
    %v2222 = vld [vmem:[#allocation4 + $0x60] sm:$0xff]
    %v2223 = vld [vmem:[#allocation4 + $0x68] sm:$0xff]
    %v2224 = vld [vmem:[#allocation4 + $0x70] sm:$0xff]
    %v2225 = vld [vmem:[#allocation4 + $0x78] sm:$0xff]
    %v2226 = vld [vmem:[#allocation4 + $0x80] sm:$0xff]
    %v2227 = vld [vmem:[#allocation4 + $0x88] sm:$0xff]
    %v2228 = vld [vmem:[#allocation4 + $0x90] sm:$0xff]
    %v2229 = vld [vmem:[#allocation4 + $0x98] sm:$0xff]
    %v2230 = vld [vmem:[#allocation4 + $0xa0] sm:$0xff]
    %v2231 = vld [vmem:[#allocation4 + $0xa8] sm:$0xff]
    %v2232 = vld [vmem:[#allocation4 + $0xb0] sm:$0xff]
    %v2233 = vld [vmem:[#allocation4 + $0xb8] sm:$0xff]
    %v2234 = vld [vmem:[#allocation4 + $0xc0] sm:$0xff]
    %v2235 = vld [vmem:[#allocation4 + $0xc8] sm:$0xff]
    %v2236 = vld [vmem:[#allocation4 + $0xd0] sm:$0xff]
    %v2237 = vld [vmem:[#allocation4 + $0xd8] sm:$0xff]
    %v2238 = vld [vmem:[#allocation4 + $0xe0] sm:$0xff]
    %v2239 = vld [vmem:[#allocation4 + $0xe8] sm:$0xff]
    %v2240 = vld [vmem:[#allocation4 + $0xf0] sm:$0xff]
    %v2241 = vld [vmem:[#allocation4 + $0xf8] sm:$0xff]
    %v2242 = vld [vmem:[#allocation4 + $0x100] sm:$0xff]
    %v2243 = vld [vmem:[#allocation4 + $0x108] sm:$0xff]
    %v2244 = vld [vmem:[#allocation4 + $0x110] sm:$0xff]
    %v2245 = vld [vmem:[#allocation4 + $0x118] sm:$0xff]
    %v2246 = vld [vmem:[#allocation4 + $0x120] sm:$0xff]
    %v2247 = vld [vmem:[#allocation4 + $0x128] sm:$0xff]
    %v2248 = vld [vmem:[#allocation4 + $0x130] sm:$0xff]
    %v2249 = vld [vmem:[#allocation4 + $0x138] sm:$0xff]
    %v2250 = vld [vmem:[#allocation4 + $0x140] sm:$0xff]
    %v2251 = vld [vmem:[#allocation4 + $0x148] sm:$0xff]
    %v2252 = vld [vmem:[#allocation4 + $0x150] sm:$0xff]
    %v2253 = vld [vmem:[#allocation4 + $0x158] sm:$0xff]
    %v2254 = vld [vmem:[#allocation4 + $0x160] sm:$0xff]
    %v2255 = vld [vmem:[#allocation4 + $0x168] sm:$0xff]
    %v2256 = vld [vmem:[#allocation4 + $0x170] sm:$0xff]
    %v2257 = vld [vmem:[#allocation4 + $0x178] sm:$0xff]
    %v2258 = vld [vmem:[%s8] sm:$0x7]
    %v2260 = vlaneseq
    %v2261 = vshrl.u32 %v2260, 7
    %v2262 = vsub.s32 0, %v2261
    %v2263 = vrot.slane %v2258, %v2262
    %v2264 = vlaneseq
    %v2265 = vshrl.u32 %v2264, 7
    %v2266 = vsub.s32 1, %v2265
    %v2267 = vrot.slane %v2258, %v2266
    %v2268 = vlaneseq
    %v2269 = vshrl.u32 %v2268, 7
    %v2270 = vsub.s32 2, %v2269
    %v2271 = vrot.slane %v2258, %v2270
    %v2276 = vrot.slane %v2205, 4
    %2278 = vmatprep.subr.mxu0 %v2211
    %2279 = vmatpush1.msra.mxu0 %v2210
    %2280 = vmatprep.subr.mxu0 %v2214
    %2281 = vmatpush1.msra.mxu0 %v2213
    %2282 = vmatprep.subr.mxu0 %v2217
    %2283 = vmatpush1.msra.mxu0 %v2216
    %2284 = vmatprep.subr.mxu0 %v2220
    %2285 = vmatpush1.msra.mxu0 %v2219
    %2286 = vmatprep.subr.mxu0 %v2223
    %2287 = vmatpush1.msra.mxu0 %v2222
    %2288 = vmatprep.subr.mxu0 %v2226
    %2289 = vmatpush1.msra.mxu0 %v2225
    %2290 = vmatprep.subr.mxu0 %v2229
    %2291 = vmatpush1.msra.mxu0 %v2228
    %2292 = vmatprep.subr.mxu0 %v2232
    %2293 = vmatpush1.msra.mxu0 %v2231
    %2294 = vmatprep.subr.mxu0 %v2235
    %2295 = vmatpush1.msra.mxu0 %v2234
    %2296 = vmatprep.subr.mxu0 %v2238
    %2297 = vmatpush1.msra.mxu0 %v2237
    %2298 = vmatprep.subr.mxu0 %v2241
    %2299 = vmatpush1.msra.mxu0 %v2240
    %2300 = vmatprep.subr.mxu0 %v2244
    %2301 = vmatpush1.msra.mxu0 %v2243
    %2302 = vmatprep.subr.mxu0 %v2247
    %2303 = vmatpush1.msra.mxu0 %v2246
    %2304 = vmatprep.subr.mxu0 %v2250
    %2305 = vmatpush1.msra.mxu0 %v2249
    %2306 = vmatprep.subr.mxu0 %v2253
    %2307 = vmatpush1.msra.mxu0 %v2252
    %2308 = vmatprep.subr.mxu0 %v2256
    %2309 = vmatpush1.msra.mxu0 %v2255
    %2310 = vmatprep.subr.mxu0 0.0
    %2311 = vmatpush1.msra.mxu0 0.0
    %2312 = vmatprep.subr.mxu0 0.0
    %2313 = vmatpush1.msra.mxu0 0.0
    %2314 = vmatprep.subr.mxu0 0.0
    %2315 = vmatpush1.msra.mxu0 0.0
    %2316 = vmatprep.subr.mxu0 0.0
    %2317 = vmatpush1.msra.mxu0 0.0
    %2318 = vmatprep.subr.mxu0 0.0
    %2319 = vmatpush1.msra.mxu0 0.0
    %2320 = vmatprep.subr.mxu0 0.0
    %2321 = vmatpush1.msra.mxu0 0.0
    %2322 = vmatprep.subr.mxu0 0.0
    %2323 = vmatpush1.msra.mxu0 0.0
    %2324 = vmatprep.subr.mxu0 0.0
    %2325 = vmatpush1.msra.mxu0 0.0
    %2326 = vmatprep.subr.mxu0 0.0
    %2327 = vmatpush1.msra.mxu0 0.0
    %2328 = vmatprep.subr.mxu0 0.0
    %2329 = vmatpush1.msra.mxu0 0.0
    %2330 = vmatprep.subr.mxu0 0.0
    %2331 = vmatpush1.msra.mxu0 0.0
    %2332 = vmatprep.subr.mxu0 0.0
    %2333 = vmatpush1.msra.mxu0 0.0
    %2334 = vmatprep.subr.mxu0 0.0
    %2335 = vmatpush1.msra.mxu0 0.0
    %2336 = vmatprep.subr.mxu0 0.0
    %2337 = vmatpush1.msra.mxu0 0.0
    %2338 = vmatprep.subr.mxu0 0.0
    %2339 = vmatpush1.msra.mxu0 0.0
    %2340 = vmatprep.subr.mxu0 0.0
    %2341 = vmatpush1.msra.mxu0 0.0
    %2342 = vmatprep.mubr.f32.mxu0 0.0
    %2343 = vmatmul.mubr.f32.gmra.mrb[0].mxu0 %v2276
    %v2344 = vpop.f32.mrb[0].mxu0
    %v2345 = vadd.f32 %v2263, %v2344
    %v2346 = vpop.f32.mrb[0].mxu0
    %v2347 = vadd.f32 %v2267, %v2346
    %2348 = vdwg.mxu0
    %2349 = vmatprep.subr.mxu0 0.0
    %2350 = vmatpush1.msra.mxu0 %v2212
    %2351 = vmatprep.subr.mxu0 0.0
    %2352 = vmatpush1.msra.mxu0 %v2215
    %2353 = vmatprep.subr.mxu0 0.0
    %2354 = vmatpush1.msra.mxu0 %v2218
    %2355 = vmatprep.subr.mxu0 0.0
    %2356 = vmatpush1.msra.mxu0 %v2221
    %2357 = vmatprep.subr.mxu0 0.0
    %2358 = vmatpush1.msra.mxu0 %v2224
    %2359 = vmatprep.subr.mxu0 0.0
    %2360 = vmatpush1.msra.mxu0 %v2227
    %2361 = vmatprep.subr.mxu0 0.0
    %2362 = vmatpush1.msra.mxu0 %v2230
    %2363 = vmatprep.subr.mxu0 0.0
    %2364 = vmatpush1.msra.mxu0 %v2233
    %2365 = vmatprep.subr.mxu0 0.0
    %2366 = vmatpush1.msra.mxu0 %v2236
    %2367 = vmatprep.subr.mxu0 0.0
    %2368 = vmatpush1.msra.mxu0 %v2239
    %2369 = vmatprep.subr.mxu0 0.0
    %2370 = vmatpush1.msra.mxu0 %v2242
    %2371 = vmatprep.subr.mxu0 0.0
    %2372 = vmatpush1.msra.mxu0 %v2245
    %2373 = vmatprep.subr.mxu0 0.0
    %2374 = vmatpush1.msra.mxu0 %v2248
    %2375 = vmatprep.subr.mxu0 0.0
    %2376 = vmatpush1.msra.mxu0 %v2251
    %2377 = vmatprep.subr.mxu0 0.0
    %2378 = vmatpush1.msra.mxu0 %v2254
    %2379 = vmatprep.subr.mxu0 0.0
    %2380 = vmatpush1.msra.mxu0 %v2257
    %2381 = vmatprep.subr.mxu0 0.0
    %2382 = vmatpush1.msra.mxu0 0.0
    %2383 = vmatprep.subr.mxu0 0.0
    %2384 = vmatpush1.msra.mxu0 0.0
    %2385 = vmatprep.subr.mxu0 0.0
    %2386 = vmatpush1.msra.mxu0 0.0
    %2387 = vmatprep.subr.mxu0 0.0
    %2388 = vmatpush1.msra.mxu0 0.0
    %2389 = vmatprep.subr.mxu0 0.0
    %2390 = vmatpush1.msra.mxu0 0.0
    %2391 = vmatprep.subr.mxu0 0.0
    %2392 = vmatpush1.msra.mxu0 0.0
    %2393 = vmatprep.subr.mxu0 0.0
    %2394 = vmatpush1.msra.mxu0 0.0
    %2395 = vmatprep.subr.mxu0 0.0
    %2396 = vmatpush1.msra.mxu0 0.0
    %2397 = vmatprep.subr.mxu0 0.0
    %2398 = vmatpush1.msra.mxu0 0.0
    %2399 = vmatprep.subr.mxu0 0.0
    %2400 = vmatpush1.msra.mxu0 0.0
    %2401 = vmatprep.subr.mxu0 0.0
    %2402 = vmatpush1.msra.mxu0 0.0
    %2403 = vmatprep.subr.mxu0 0.0
    %2404 = vmatpush1.msra.mxu0 0.0
    %2405 = vmatprep.subr.mxu0 0.0
    %2406 = vmatpush1.msra.mxu0 0.0
    %2407 = vmatprep.subr.mxu0 0.0
    %2408 = vmatpush1.msra.mxu0 0.0
    %2409 = vmatprep.subr.mxu0 0.0
    %2410 = vmatpush1.msra.mxu0 0.0
    %2411 = vmatprep.subr.mxu0 0.0
    %2412 = vmatpush1.msra.mxu0 0.0
    %2413 = vmatprep.mubr.f32.mxu0 0.0
    %2414 = vmatmul.mubr.f32.gmra.mrb[0].mxu0 %v2276
    %v2415 = vpop.f32.mrb[0].mxu0
    %v2416 = vadd.f32 %v2271, %v2415
    %v2417 = vpop.f32.mrb[0].mxu0
    %2418 = vdwg.mxu0
    %v2420 = vrot.slane %v2345, 2
    %v2422 = vadd.f32 %v2207, %v2420
    %v2423 = vxor.u32 %v2422, 2147483648
    %v2424 = vmul.f32 %v2423, 1.442695
    %v2425 = vpow.pop %v2424
    %v2426 = vadd.f32 %v2425, 1.0
    %v2427 = vrcp.pop %v2426
    %v2428 = vmul.f32 1.0, %v2427
    %v2430 = vrot.slane %v2347, 2
    %v2432 = vadd.f32 %v2208, %v2430
    %v2433 = vxor.u32 %v2432, 2147483648
    %v2434 = vmul.f32 %v2433, 1.442695
    %v2435 = vpow.pop %v2434
    %v2436 = vadd.f32 %v2435, 1.0
    %v2437 = vrcp.pop %v2436
    %v2438 = vmul.f32 1.0, %v2437
    %v2440 = vrot.slane %v2416, 2
    %v2442 = vmul.f32 %v2428, %v2440
    %v2443 = vadd.f32 %v2209, %v2442
    %v2444 = vtanh.pop %v2443
    %v2445 = vsub.f32 1.0, %v2438
    %v2446 = vmul.f32 %v2445, %v2444
    %v2447 = vrot.slane %v2205, 6
    %v2449 = vmul.f32 %v2438, %v2447
    %v2450 = vadd.f32 %v2446, %v2449
    %2451 = vst [vmem:[#allocation3 + $0x8] sm:$0xc0] %v2450
    %v2452 = vld [vmem:[#allocation3] sm:$0xff]
    %v2453 = vld [vmem:[#allocation3 + $0x8] sm:$0xff]
    %v2454 = vld [vmem:[%s9] sm:$0xff]
    %v2455 = vld [vmem:[%s9 + $0x8] sm:$0xff]
    %v2456 = vld [vmem:[%s9 + $0x10] sm:$0xff]
    %v2457 = vld [vmem:[%s9 + $0x18] sm:$0xff]
    %v2458 = vld [vmem:[%s9 + $0x20] sm:$0xff]
    %v2459 = vld [vmem:[%s9 + $0x28] sm:$0xff]
    %v2460 = vld [vmem:[%s9 + $0x30] sm:$0xff]
    %v2461 = vld [vmem:[%s9 + $0x38] sm:$0xff]
    %v2462 = vld [vmem:[%s9 + $0x40] sm:$0xff]
    %v2463 = vld [vmem:[%s9 + $0x48] sm:$0xff]
    %v2464 = vld [vmem:[%s9 + $0x50] sm:$0xff]
    %v2465 = vld [vmem:[%s9 + $0x58] sm:$0xff]
    %v2466 = vld [vmem:[%s9 + $0x60] sm:$0xff]
    %v2467 = vld [vmem:[%s9 + $0x68] sm:$0xff]
    %v2468 = vld [vmem:[%s9 + $0x70] sm:$0xff]
    %v2469 = vld [vmem:[%s9 + $0x78] sm:$0xff]
    %v2470 = vld [vmem:[%s10] sm:$0x1]
    %v2472 = vlaneseq
    %v2473 = vshrl.u32 %v2472, 7
    %v2474 = vsub.s32 0, %v2473
    %v2475 = vrot.slane %v2470, %v2474
    %2477 = vmatprep.subr.mxu0 0.0
    %2478 = vmatpush1.msra.mxu0 %v2454
    %2479 = vmatprep.subr.mxu0 0.0
    %2480 = vmatpush1.msra.mxu0 %v2455
    %2481 = vmatprep.subr.mxu0 0.0
    %2482 = vmatpush1.msra.mxu0 %v2456
    %2483 = vmatprep.subr.mxu0 0.0
    %2484 = vmatpush1.msra.mxu0 %v2457
    %2485 = vmatprep.subr.mxu0 0.0
    %2486 = vmatpush1.msra.mxu0 %v2458
    %2487 = vmatprep.subr.mxu0 0.0
    %2488 = vmatpush1.msra.mxu0 %v2459
    %2489 = vmatprep.subr.mxu0 0.0
    %2490 = vmatpush1.msra.mxu0 %v2460
    %2491 = vmatprep.subr.mxu0 0.0
    %2492 = vmatpush1.msra.mxu0 %v2461
    %2493 = vmatprep.subr.mxu0 0.0
    %2494 = vmatpush1.msra.mxu0 %v2462
    %2495 = vmatprep.subr.mxu0 0.0
    %2496 = vmatpush1.msra.mxu0 %v2463
    %2497 = vmatprep.subr.mxu0 0.0
    %2498 = vmatpush1.msra.mxu0 %v2464
    %2499 = vmatprep.subr.mxu0 0.0
    %2500 = vmatpush1.msra.mxu0 %v2465
    %2501 = vmatprep.subr.mxu0 0.0
    %2502 = vmatpush1.msra.mxu0 %v2466
    %2503 = vmatprep.subr.mxu0 0.0
    %2504 = vmatpush1.msra.mxu0 %v2467
    %2505 = vmatprep.subr.mxu0 0.0
    %2506 = vmatpush1.msra.mxu0 %v2468
    %2507 = vmatprep.subr.mxu0 0.0
    %2508 = vmatpush1.msra.mxu0 %v2469
    %2509 = vmatprep.subr.mxu0 0.0
    %2510 = vmatpush1.msra.mxu0 0.0
    %2511 = vmatprep.subr.mxu0 0.0
    %2512 = vmatpush1.msra.mxu0 0.0
    %2513 = vmatprep.subr.mxu0 0.0
    %2514 = vmatpush1.msra.mxu0 0.0
    %2515 = vmatprep.subr.mxu0 0.0
    %2516 = vmatpush1.msra.mxu0 0.0
    %2517 = vmatprep.subr.mxu0 0.0
    %2518 = vmatpush1.msra.mxu0 0.0
    %2519 = vmatprep.subr.mxu0 0.0
    %2520 = vmatpush1.msra.mxu0 0.0
    %2521 = vmatprep.subr.mxu0 0.0
    %2522 = vmatpush1.msra.mxu0 0.0
    %2523 = vmatprep.subr.mxu0 0.0
    %2524 = vmatpush1.msra.mxu0 0.0
    %2525 = vmatprep.subr.mxu0 0.0
    %2526 = vmatpush1.msra.mxu0 0.0
    %2527 = vmatprep.subr.mxu0 0.0
    %2528 = vmatpush1.msra.mxu0 0.0
    %2529 = vmatprep.subr.mxu0 0.0
    %2530 = vmatpush1.msra.mxu0 0.0
    %2531 = vmatprep.subr.mxu0 0.0
    %2532 = vmatpush1.msra.mxu0 0.0
    %2533 = vmatprep.subr.mxu0 0.0
    %2534 = vmatpush1.msra.mxu0 0.0
    %2535 = vmatprep.subr.mxu0 0.0
    %2536 = vmatpush1.msra.mxu0 0.0
    %2537 = vmatprep.subr.mxu0 0.0
    %2538 = vmatpush1.msra.mxu0 0.0
    %2539 = vmatprep.subr.mxu0 0.0
    %2540 = vmatpush1.msra.mxu0 0.0
    %2541 = vmatprep.mubr.f32.mxu0 0.0
    %2542 = vmatmul.mubr.f32.gmra.mrb[0].mxu0 %v2452
    %v2543 = vpop.f32.mrb[0].mxu0
    %v2544 = vadd.f32 %v2475, %v2543
    %v2545 = vpop.f32.mrb[0].mxu0
    %2546 = vmatprep.mubr.f32.mxu0 0.0
    %2547 = vmatmul.mubr.f32.gmra.mrb[0].mxu0 %v2453
    %v2548 = vpop.f32.mrb[0].mxu0
    %v2549 = vadd.f32 %v2475, %v2548
    %v2550 = vpop.f32.mrb[0].mxu0
    %2551 = vdwg.mxu0
    %v2552 = vld [vmem:[%s11] sm:$0xff]
    %v2553 = vld [vmem:[%s11 + $0x8] sm:$0xff]
    %v2554 = vmul.f32 %v2544, 0.5
    %v2555 = vmul.f32 %v2549, 0.5
    %v2556 = vmul.f32 %v2554, 1.442695
    %v2557 = vpow.pop %v2556
    %v2558 = vmul.f32 %v2555, 1.442695
    %v2559 = vpow.pop %v2558
    %2562 = vrot.lane.b32.xlu0 %v2557, 112
    %v2563 = vpop.permute.xlu0 %2562
    %2564 = vrot.lane.b32.xlu0 %v2559, 112
    %v2565 = vpop.permute.xlu0 %2564
    %v2568 = vmul.f32 %v2552, %v2563
    %v2569 = vmul.f32 %v2553, %v2565
    %v2570 = vadd.f32 %v2544, %v2568
    %v2571 = vadd.f32 %v2549, %v2569
    %vm2572 = vcmask 130048
    %2573 = vst.msk [vmem:[#allocation7] sm:$0xff] %vm2572, %v2570
    %2574 = vst.msk [vmem:[#allocation7 + $0x8] sm:$0xff] %vm2572, %v2571
    %2577 = vrot.lane.b32.xlu0 %v2544, 16
    %v2578 = vpop.permute.xlu0 %2577
    %2579 = vrot.lane.b32.xlu0 %v2549, 16
    %v2580 = vpop.permute.xlu0 %2579
    %vm2583 = vcmask 392320
    %2584 = vst.msk [vmem:[#allocation7] sm:$0xff] %vm2583, %v2578
    %2585 = vst.msk [vmem:[#allocation7 + $0x8] sm:$0xff] %vm2583, %v2580
    // Predicated region
    $region54: #{tpu_custom_call.1} parent=1 // pred_check
      _
    $region55: #{tpu_custom_call.1} parent=1 // pred_check_branch
      %2587 = sbr.rel (0) target = $region57
    $region56: #{tpu_custom_call.1} parent=1 // pred_region
      %s2589 = ssub.s32 256, 256
      %2590 = vsyncadd [#allocation6], %s2589
      %s2591 = sshll.u32 [#allocation7], 4
      %s2592 = int_to_ptr.vmem [resolvable:$true] %s2591
      %2597 = dma.vmem_to_hbm [thread:$0]  %s2592, 256, %s12, [#allocation6], 128, 128, 8
    $region57: #{tpu_custom_call.1} parent=1 // pred_fallthru
      _
    // Predicated region
    $region58: #{tpu_custom_call.1} parent=1 // pred_check
      _
    $region59: #{tpu_custom_call.1} parent=1 // pred_check_branch
      %2599 = sbr.rel (0) target = $region61
    $region60: #{tpu_custom_call.1} parent=1 // pred_region
      %2600 = dma.done [#allocation6], 256
    $region61: #{tpu_custom_call.1} parent=1 // pred_fallthru
      _
    %2601 = vsyncpa [#allocation5], 1
    %2602 = vsyncpa [#allocation6], 1

</llo_original>
